<compile_context>
chip_gen: v6e
topology: v6e:2x2x1
jax: 0.10.0
libtpu: 0.0.40
codegen_flags: <defaults>
</compile_context>

<pallas_src>
import functools

import jax
import jax.numpy as jnp
from jax import lax
from jax.experimental import pallas as pl
from jax.experimental.pallas import tpu as pltpu


def _mf_transformer_layer_kernel(
    x_ref, wqkv_ref, bqkv_ref, wo_ref, bo_ref, gamma_ref, beta_ref, o_ref,
    *, num_heads, head_dim, ln_eps,
):
    """One batch block: x (Bb, S, n) -> LayerNorm(x + attn_out) (Bb, S, n)."""
    Bb, S, n = x_ref.shape
    depth = num_heads * head_dim
    rows = Bb * S

    # (Bb, S, n) -> (Bb*S, n): merging leading (sublane) dims is layout-free.
    x = x_ref[...].reshape(rows, n)                   # f32, kept for the residual
    x_bf = x.astype(jnp.bfloat16)                     # bf16 operands -> MXU headline rate

    # Fused Q/K/V projection: one wide lane-dense matmul with M = Bb*S rows.
    # The 1/sqrt(head_dim) softmax scale is pre-folded into wq/bq in the wrapper.
    qkv = jnp.dot(x_bf, wqkv_ref[...], preferred_element_type=jnp.float32)
    qkv = qkv + bqkv_ref[...]                         # (rows, 3*depth) f32

    wo = wo_ref[...]                                  # (depth, n) bf16

    # Per-head attention, batched over Bb via dot_general batch dims; output
    # projection fused per head and accumulated in f32 (no concat / `weighted`).
    acc = jnp.broadcast_to(bo_ref[...], (rows, n))    # f32 accumulator seeded with bias
    for h in range(num_heads):
        lo = h * head_dim
        qh = qkv[:, lo:lo + head_dim].reshape(Bb, S, head_dim).astype(jnp.bfloat16)
        kh = qkv[:, depth + lo:depth + lo + head_dim].reshape(Bb, S, head_dim).astype(jnp.bfloat16)
        vh = qkv[:, 2 * depth + lo:2 * depth + lo + head_dim].reshape(Bb, S, head_dim).astype(jnp.bfloat16)

        # scores[b,i,j] = q'[b,i,:] . k[b,j,:]   (scale already folded into q')
        s = lax.dot_general(qh, kh, (((2,), (2,)), ((0,), (0,))),
                            preferred_element_type=jnp.float32)    # (Bb, S, S) f32
        s = s - jnp.max(s, axis=-1, keepdims=True)                 # stable softmax (f32)
        e = jnp.exp(s)
        # EUP approximate reciprocal: divide moves off the VALU critical path.
        p = e * pl.reciprocal(jnp.sum(e, axis=-1, keepdims=True), approx=True)

        pv = lax.dot_general(p.astype(jnp.bfloat16), vh,
                             (((2,), (1,)), ((0,), (0,))),
                             preferred_element_type=jnp.float32)   # (Bb, S, dh) f32

        # Fused per-head slice of the output projection.
        acc = acc + jnp.dot(pv.reshape(rows, head_dim).astype(jnp.bfloat16),
                            wo[lo:lo + head_dim, :],
                            preferred_element_type=jnp.float32)

    # TODO(synk): nn.Dropout is identity in eval mode; intentionally omitted.

    # Residual + LayerNorm over the feature axis (torch defaults: biased
    # variance, eps=1e-5), all in f32.
    resid = x + acc
    mean = jnp.mean(resid, axis=-1, keepdims=True)
    cent = resid - mean
    var = jnp.mean(cent * cent, axis=-1, keepdims=True)
    y = cent * lax.rsqrt(var + ln_eps)
    y = y * gamma_ref[...] + beta_ref[...]

    o_ref[...] = y.reshape(Bb, S, n).astype(o_ref.dtype)


def multi_field_transformer_layer(field_info, params, field_idx, num_heads,
                                  *, batch_block=None, ln_eps=1e-5):
    """field_info: (B, S, n_field_info) -> (B, S, n_field_info)."""
    B, S, n = field_info.shape
    p = params[field_idx]                  # field-specific parameters (static index)
    depth = p["wq"].shape[1]
    head_dim = depth // num_heads          # == n_field_info, as in the PyTorch module

    if batch_block is None:
        # Fold as many batch rows per step as possible while keeping >= 2 grid
        # steps (so both v7x TensorCores get work and the pipeline has steps).
        batch_block = 1
        for bb in (8, 4, 2):
            if B % bb == 0 and B // bb >= 2:
                batch_block = bb
                break
    Bb = batch_block
    assert B % Bb == 0, f"batch {B} must be divisible by batch_block {Bb}"

    # Parameter fusion (done once, outside the kernel body):
    #  - fold the 1/sqrt(head_dim) softmax scale into Wq / bq,
    #  - fuse Q/K/V weights into one lane-dense (n, 3*depth) matrix,
    #  - cast weight matrices to bf16 (halves the dominant weight DMA; matmuls
    #    still accumulate in f32).  Biases / LN params stay f32.
    scale = 1.0 / float(head_dim) ** 0.5
    wqkv = jnp.concatenate([p["wq"] * scale, p["wk"], p["wv"]], axis=1).astype(jnp.bfloat16)
    bqkv = jnp.concatenate([p["bq"] * scale, p["bk"], p["bv"]], axis=1)   # (1, 3*depth) f32
    wo = p["wo"].astype(jnp.bfloat16)                                      # (depth, n) bf16

    kernel = functools.partial(
        _mf_transformer_layer_kernel,
        num_heads=num_heads, head_dim=head_dim, ln_eps=ln_eps,
    )

    rep = lambda b: (0, 0)                 # grid-invariant (VMEM-resident) params
    in_specs = [
        pl.BlockSpec((Bb, S, n), lambda b: (b, 0, 0)),  # x: Bb batch slab / step
        pl.BlockSpec((n, 3 * depth), rep),              # fused Wqkv (bf16)
        pl.BlockSpec((1, 3 * depth), rep),              # fused bqkv (f32)
        pl.BlockSpec((depth, n), rep),                  # Wo (bf16)
        pl.BlockSpec((1, n), rep),                      # bo
        pl.BlockSpec((1, n), rep),                      # LayerNorm gamma
        pl.BlockSpec((1, n), rep),                      # LayerNorm beta
    ]

    # Advisory cost estimate for XLA's scheduler.
    flops = int(B * (
        2 * S * n * 3 * depth                   # fused QKV projection
        + 2 * num_heads * S * S * head_dim      # Q @ K^T
        + 2 * num_heads * S * S * head_dim      # attn @ V
        + 2 * S * depth * n                     # output projection (per-head fused)
    ))
    transcendentals = int(B * (num_heads * S * S + num_heads * S + S))  # exp, recip, rsqrt
    bytes_accessed = int(
        4 * 2 * B * S * n                       # x in + y out (f32)
        + 2 * (n * 3 * depth + depth * n)       # bf16 weights
        + 4 * (3 * depth + 3 * n)               # f32 biases + gamma + beta
    )

    out = pl.pallas_call(
        kernel,
        out_shape=jax.ShapeDtypeStruct((B, S, n), field_info.dtype),
        grid=(B // Bb,),
        in_specs=in_specs,
        out_specs=pl.BlockSpec((Bb, S, n), lambda b: (b, 0, 0)),
        compiler_params=pltpu.CompilerParams(
            dimension_semantics=("parallel",),
            # Actual per-step working set is ~2 MiB (bf16 weights + slabs);
            # 16 MiB fits v5e's scoped default and leaves v7x 64 MiB headroom.
            vmem_limit_bytes=16 * 1024 * 1024,
        ),
        cost_estimate=pl.CostEstimate(
            flops=flops,
            transcendentals=transcendentals,
            bytes_accessed=bytes_accessed,
        ),
    )(field_info, wqkv, bqkv, wo, p["bo"], p["gamma"], p["beta"])
    return out


def _reference(field_info, p, num_heads, ln_eps=1e-5):
    """Pure-JAX f32 replica of the PyTorch forward (eval mode)."""
    x = field_info
    B, S, n = x.shape
    q = x @ p["wq"] + p["bq"]
    k = x @ p["wk"] + p["bk"]
    v = x @ p["wv"] + p["bv"]
    depth = q.shape[-1]
    dh = depth // num_heads

    def split_heads(t):
        return t.reshape(B, S, num_heads, dh).transpose(0, 2, 1, 3)

    qh, kh, vh = split_heads(q), split_heads(k), split_heads(v)
    scores = jnp.einsum("bhqd,bhkd->bhqk", qh, kh) / (dh ** 0.5)
    attn = jax.nn.softmax(scores, axis=-1)
    wv_ = jnp.einsum("bhqk,bhkd->bhqd", attn, vh)
    wv_ = wv_.transpose(0, 2, 1, 3).reshape(B, S, depth)
    out = wv_ @ p["wo"] + p["bo"]
    resid = x + out
    mean = resid.mean(-1, keepdims=True)
    var = ((resid - mean) ** 2).mean(-1, keepdims=True)
    y = (resid - mean) / jnp.sqrt(var + ln_eps)
    return y * p["gamma"] + p["beta"]


def init_layer_params(key, n_field_info, num_heads, num_fields):
    """nn.Linear-style init; weights stored (in, out), biases (1, out)."""
    depth = n_field_info * num_heads

    def linear(k, fan_in, fan_out):
        kw, kb = jax.random.split(k)
        bound = float(1.0 / (fan_in ** 0.5))
        w = jax.random.uniform(kw, (fan_in, fan_out), jnp.float32, -bound, bound)
        b = jax.random.uniform(kb, (1, fan_out), jnp.float32, -bound, bound)
        return w, b

    params = []
    for _ in range(num_fields):
        key, k1, k2, k3, k4 = jax.random.split(key, 5)
        wq, bq = linear(k1, n_field_info, depth)
        wk, bk = linear(k2, n_field_info, depth)
        wv, bv = linear(k3, n_field_info, depth)
        wo, bo = linear(k4, depth, n_field_info)
        params.append(dict(
            wq=wq, bq=bq, wk=wk, bk=bk, wv=wv, bv=bv, wo=wo, bo=bo,
            gamma=jnp.ones((1, n_field_info), jnp.float32),   # LayerNorm init
            beta=jnp.zeros((1, n_field_info), jnp.float32),
        ))
    return params


if __name__ == "__main__":
    # Hardware-friendly small shapes consistent with the module's forward:
    # n_field_info = head_dim = 128 (lane-dense), 4 heads -> depth = 512.
    # B=8 with batch_block=4 gives 2 parallel grid steps and Bb*S = 64 rows
    # per projection matmul.
    n_field_info = 128
    num_heads = 4
    num_fields = 3
    B, S = 8, 16
    field_idx = 1

    key = jax.random.PRNGKey(0)
    key, kx = jax.random.split(key)
    field_info = jax.random.normal(kx, (B, S, n_field_info), jnp.float32)
    params = init_layer_params(key, n_field_info, num_heads, num_fields)

    out = multi_field_transformer_layer(field_info, params, field_idx, num_heads,
                                        batch_block=4)
    out = jax.block_until_ready(out)

    ref = _reference(field_info, params[field_idx], num_heads)
    assert out.shape == (B, S, n_field_info), out.shape
    # Tolerance absorbs the deliberate bf16-operand matmuls (f32 accumulation)
    # and the EUP approximate reciprocal; genuine structural bugs show up as
    # O(1) errors after LayerNorm, far above this bound.
    max_err = float(jnp.max(jnp.abs(out - ref)))
    assert jnp.allclose(out, ref, atol=5e-2, rtol=5e-2), f"max abs err {max_err}"

    print("KERNEL_OK")
</pallas_src>

<mosaic_0001>
module attributes {stable_mosaic.version = 11 : i64} {
  func.func @_mf_transformer_layer_kernel(%arg0: i32, %arg1: memref<4x16x128xf32, #tpu.memory_space<vmem>>, %arg2: memref<128x1536xbf16, #tpu.memory_space<vmem>>, %arg3: memref<1x1536xf32, #tpu.memory_space<vmem>>, %arg4: memref<512x128xbf16, #tpu.memory_space<vmem>>, %arg5: memref<1x128xf32, #tpu.memory_space<vmem>>, %arg6: memref<1x128xf32, #tpu.memory_space<vmem>>, %arg7: memref<1x128xf32, #tpu.memory_space<vmem>>, %arg8: memref<4x16x128xf32, #tpu.memory_space<vmem>>) attributes {dimension_semantics = [#tpu.dimension_semantics<parallel>], iteration_bounds = array<i64: 2>, scalar_prefetch = 0 : i64, scratch_operands = 0 : i64, tpu.core_type = #tpu.core_type<tc>, window_params = [{transform_indices = @transform_0, window_bounds = array<i64: 4, 16, 128>}, {pipeline_mode = #tpu.pipeline_mode<synchronous>, transform_indices = @transform_1, window_bounds = array<i64: 128, 1536>}, {pipeline_mode = #tpu.pipeline_mode<synchronous>, transform_indices = @transform_2, window_bounds = array<i64: 1, 1536>}, {pipeline_mode = #tpu.pipeline_mode<synchronous>, transform_indices = @transform_3, window_bounds = array<i64: 512, 128>}, {pipeline_mode = #tpu.pipeline_mode<synchronous>, transform_indices = @transform_4, window_bounds = array<i64: 1, 128>}, {pipeline_mode = #tpu.pipeline_mode<synchronous>, transform_indices = @transform_5, window_bounds = array<i64: 1, 128>}, {pipeline_mode = #tpu.pipeline_mode<synchronous>, transform_indices = @transform_6, window_bounds = array<i64: 1, 128>}, {transform_indices = @transform_7, window_bounds = array<i64: 4, 16, 128>}]} {
    %c0 = arith.constant 0 : index
    %c0_0 = arith.constant 0 : index
    %c0_1 = arith.constant 0 : index
    %0 = vector.load %arg1[%c0, %c0_0, %c0_1] : memref<4x16x128xf32, #tpu.memory_space<vmem>>, vector<4x16x128xf32>
    %1 = vector.shape_cast %0 : vector<4x16x128xf32> to vector<64x128xf32>
    %2 = arith.truncf %1 : vector<64x128xf32> to vector<64x128xbf16>
    %c0_2 = arith.constant 0 : index
    %c0_3 = arith.constant 0 : index
    %3 = vector.load %arg2[%c0_2, %c0_3] : memref<128x1536xbf16, #tpu.memory_space<vmem>>, vector<128x1536xbf16>
    %cst = arith.constant dense<0.000000e+00> : vector<64x1536xf32>
    %4 = tpu.matmul %2, %3, %cst {dimension_numbers = #tpu.dot_dimension_numbers<[1], [0], [0], [1], [0, 0, 1, 1], [], []>} : vector<64x128xbf16>, vector<128x1536xbf16>, vector<64x1536xf32> -> vector<64x1536xf32>
    %c0_4 = arith.constant 0 : index
    %c0_5 = arith.constant 0 : index
    %5 = vector.load %arg3[%c0_4, %c0_5] : memref<1x1536xf32, #tpu.memory_space<vmem>>, vector<1x1536xf32>
    %6 = vector.broadcast %5 : vector<1x1536xf32> to vector<64x1536xf32>
    %7 = arith.addf %4, %6 : vector<64x1536xf32>
    %c0_6 = arith.constant 0 : index
    %c0_7 = arith.constant 0 : index
    %8 = vector.load %arg4[%c0_6, %c0_7] : memref<512x128xbf16, #tpu.memory_space<vmem>>, vector<512x128xbf16>
    %c0_8 = arith.constant 0 : index
    %c0_9 = arith.constant 0 : index
    %9 = vector.load %arg5[%c0_8, %c0_9] : memref<1x128xf32, #tpu.memory_space<vmem>>, vector<1x128xf32>
    %10 = vector.shape_cast %9 : vector<1x128xf32> to vector<1x128xf32>
    %11 = vector.broadcast %10 : vector<1x128xf32> to vector<64x128xf32>
    %12 = vector.extract_strided_slice %7 {offsets = [0, 0], sizes = [64, 128], strides = [1, 1]} : vector<64x1536xf32> to vector<64x128xf32>
    %13 = vector.shape_cast %12 : vector<64x128xf32> to vector<4x16x128xf32>
    %14 = arith.truncf %13 : vector<4x16x128xf32> to vector<4x16x128xbf16>
    %15 = vector.extract_strided_slice %7 {offsets = [0, 512], sizes = [64, 128], strides = [1, 1]} : vector<64x1536xf32> to vector<64x128xf32>
    %16 = vector.shape_cast %15 : vector<64x128xf32> to vector<4x16x128xf32>
    %17 = arith.truncf %16 : vector<4x16x128xf32> to vector<4x16x128xbf16>
    %18 = vector.extract_strided_slice %7 {offsets = [0, 1024], sizes = [64, 128], strides = [1, 1]} : vector<64x1536xf32> to vector<64x128xf32>
    %19 = vector.shape_cast %18 : vector<64x128xf32> to vector<4x16x128xf32>
    %20 = arith.truncf %19 : vector<4x16x128xf32> to vector<4x16x128xbf16>
    %cst_10 = arith.constant dense<0.000000e+00> : vector<4x16x16xf32>
    %21 = tpu.matmul %14, %17, %cst_10 {dimension_numbers = #tpu.dot_dimension_numbers<[2], [2], [1], [1], [0, 0, 0, 1, 1, 1], [0], [0]>} : vector<4x16x128xbf16>, vector<4x16x128xbf16>, vector<4x16x16xf32> -> vector<4x16x16xf32>
    %cst_11 = arith.constant dense<0xFF800000> : vector<4x16xf32>
    %22 = vector.multi_reduction <maximumf>, %21, %cst_11 [2] : vector<4x16x16xf32> to vector<4x16xf32>
    %23 = vector.shape_cast %22 : vector<4x16xf32> to vector<4x16x1xf32>
    %24 = vector.broadcast %23 : vector<4x16x1xf32> to vector<4x16x16xf32>
    %25 = arith.subf %21, %24 : vector<4x16x16xf32>
    %26 = math.exp %25 : vector<4x16x16xf32>
    %cst_12 = arith.constant dense<0.000000e+00> : vector<4x16xf32>
    %27 = vector.multi_reduction <add>, %26, %cst_12 [2] : vector<4x16x16xf32> to vector<4x16xf32>
    %28 = vector.shape_cast %27 : vector<4x16xf32> to vector<4x16x1xf32>
    %29 = tpu.reciprocal %28 {approx = true} : vector<4x16x1xf32> -> vector<4x16x1xf32>
    %30 = vector.broadcast %29 : vector<4x16x1xf32> to vector<4x16x16xf32>
    %31 = arith.mulf %26, %30 : vector<4x16x16xf32>
    %32 = arith.truncf %31 : vector<4x16x16xf32> to vector<4x16x16xbf16>
    %cst_13 = arith.constant dense<0.000000e+00> : vector<4x16x128xf32>
    %33 = tpu.matmul %32, %20, %cst_13 {dimension_numbers = #tpu.dot_dimension_numbers<[2], [1], [1], [2], [0, 0, 0, 1, 1, 2], [0], [0]>} : vector<4x16x16xbf16>, vector<4x16x128xbf16>, vector<4x16x128xf32> -> vector<4x16x128xf32>
    %34 = vector.shape_cast %33 : vector<4x16x128xf32> to vector<64x128xf32>
    %35 = arith.truncf %34 : vector<64x128xf32> to vector<64x128xbf16>
    %36 = vector.extract_strided_slice %8 {offsets = [0, 0], sizes = [128, 128], strides = [1, 1]} : vector<512x128xbf16> to vector<128x128xbf16>
    %cst_14 = arith.constant dense<0.000000e+00> : vector<64x128xf32>
    %37 = tpu.matmul %35, %36, %cst_14 {dimension_numbers = #tpu.dot_dimension_numbers<[1], [0], [0], [1], [0, 0, 1, 1], [], []>} : vector<64x128xbf16>, vector<128x128xbf16>, vector<64x128xf32> -> vector<64x128xf32>
    %38 = arith.addf %11, %37 : vector<64x128xf32>
    %39 = vector.extract_strided_slice %7 {offsets = [0, 128], sizes = [64, 128], strides = [1, 1]} : vector<64x1536xf32> to vector<64x128xf32>
    %40 = vector.shape_cast %39 : vector<64x128xf32> to vector<4x16x128xf32>
    %41 = arith.truncf %40 : vector<4x16x128xf32> to vector<4x16x128xbf16>
    %42 = vector.extract_strided_slice %7 {offsets = [0, 640], sizes = [64, 128], strides = [1, 1]} : vector<64x1536xf32> to vector<64x128xf32>
    %43 = vector.shape_cast %42 : vector<64x128xf32> to vector<4x16x128xf32>
    %44 = arith.truncf %43 : vector<4x16x128xf32> to vector<4x16x128xbf16>
    %45 = vector.extract_strided_slice %7 {offsets = [0, 1152], sizes = [64, 128], strides = [1, 1]} : vector<64x1536xf32> to vector<64x128xf32>
    %46 = vector.shape_cast %45 : vector<64x128xf32> to vector<4x16x128xf32>
    %47 = arith.truncf %46 : vector<4x16x128xf32> to vector<4x16x128xbf16>
    %cst_15 = arith.constant dense<0.000000e+00> : vector<4x16x16xf32>
    %48 = tpu.matmul %41, %44, %cst_15 {dimension_numbers = #tpu.dot_dimension_numbers<[2], [2], [1], [1], [0, 0, 0, 1, 1, 1], [0], [0]>} : vector<4x16x128xbf16>, vector<4x16x128xbf16>, vector<4x16x16xf32> -> vector<4x16x16xf32>
    %cst_16 = arith.constant dense<0xFF800000> : vector<4x16xf32>
    %49 = vector.multi_reduction <maximumf>, %48, %cst_16 [2] : vector<4x16x16xf32> to vector<4x16xf32>
    %50 = vector.shape_cast %49 : vector<4x16xf32> to vector<4x16x1xf32>
    %51 = vector.broadcast %50 : vector<4x16x1xf32> to vector<4x16x16xf32>
    %52 = arith.subf %48, %51 : vector<4x16x16xf32>
    %53 = math.exp %52 : vector<4x16x16xf32>
    %cst_17 = arith.constant dense<0.000000e+00> : vector<4x16xf32>
    %54 = vector.multi_reduction <add>, %53, %cst_17 [2] : vector<4x16x16xf32> to vector<4x16xf32>
    %55 = vector.shape_cast %54 : vector<4x16xf32> to vector<4x16x1xf32>
    %56 = tpu.reciprocal %55 {approx = true} : vector<4x16x1xf32> -> vector<4x16x1xf32>
    %57 = vector.broadcast %56 : vector<4x16x1xf32> to vector<4x16x16xf32>
    %58 = arith.mulf %53, %57 : vector<4x16x16xf32>
    %59 = arith.truncf %58 : vector<4x16x16xf32> to vector<4x16x16xbf16>
    %cst_18 = arith.constant dense<0.000000e+00> : vector<4x16x128xf32>
    %60 = tpu.matmul %59, %47, %cst_18 {dimension_numbers = #tpu.dot_dimension_numbers<[2], [1], [1], [2], [0, 0, 0, 1, 1, 2], [0], [0]>} : vector<4x16x16xbf16>, vector<4x16x128xbf16>, vector<4x16x128xf32> -> vector<4x16x128xf32>
    %61 = vector.shape_cast %60 : vector<4x16x128xf32> to vector<64x128xf32>
    %62 = arith.truncf %61 : vector<64x128xf32> to vector<64x128xbf16>
    %63 = vector.extract_strided_slice %8 {offsets = [128, 0], sizes = [128, 128], strides = [1, 1]} : vector<512x128xbf16> to vector<128x128xbf16>
    %cst_19 = arith.constant dense<0.000000e+00> : vector<64x128xf32>
    %64 = tpu.matmul %62, %63, %cst_19 {dimension_numbers = #tpu.dot_dimension_numbers<[1], [0], [0], [1], [0, 0, 1, 1], [], []>} : vector<64x128xbf16>, vector<128x128xbf16>, vector<64x128xf32> -> vector<64x128xf32>
    %65 = arith.addf %38, %64 : vector<64x128xf32>
    %66 = vector.extract_strided_slice %7 {offsets = [0, 256], sizes = [64, 128], strides = [1, 1]} : vector<64x1536xf32> to vector<64x128xf32>
    %67 = vector.shape_cast %66 : vector<64x128xf32> to vector<4x16x128xf32>
    %68 = arith.truncf %67 : vector<4x16x128xf32> to vector<4x16x128xbf16>
    %69 = vector.extract_strided_slice %7 {offsets = [0, 768], sizes = [64, 128], strides = [1, 1]} : vector<64x1536xf32> to vector<64x128xf32>
    %70 = vector.shape_cast %69 : vector<64x128xf32> to vector<4x16x128xf32>
    %71 = arith.truncf %70 : vector<4x16x128xf32> to vector<4x16x128xbf16>
    %72 = vector.extract_strided_slice %7 {offsets = [0, 1280], sizes = [64, 128], strides = [1, 1]} : vector<64x1536xf32> to vector<64x128xf32>
    %73 = vector.shape_cast %72 : vector<64x128xf32> to vector<4x16x128xf32>
    %74 = arith.truncf %73 : vector<4x16x128xf32> to vector<4x16x128xbf16>
    %cst_20 = arith.constant dense<0.000000e+00> : vector<4x16x16xf32>
    %75 = tpu.matmul %68, %71, %cst_20 {dimension_numbers = #tpu.dot_dimension_numbers<[2], [2], [1], [1], [0, 0, 0, 1, 1, 1], [0], [0]>} : vector<4x16x128xbf16>, vector<4x16x128xbf16>, vector<4x16x16xf32> -> vector<4x16x16xf32>
    %cst_21 = arith.constant dense<0xFF800000> : vector<4x16xf32>
    %76 = vector.multi_reduction <maximumf>, %75, %cst_21 [2] : vector<4x16x16xf32> to vector<4x16xf32>
    %77 = vector.shape_cast %76 : vector<4x16xf32> to vector<4x16x1xf32>
    %78 = vector.broadcast %77 : vector<4x16x1xf32> to vector<4x16x16xf32>
    %79 = arith.subf %75, %78 : vector<4x16x16xf32>
    %80 = math.exp %79 : vector<4x16x16xf32>
    %cst_22 = arith.constant dense<0.000000e+00> : vector<4x16xf32>
    %81 = vector.multi_reduction <add>, %80, %cst_22 [2] : vector<4x16x16xf32> to vector<4x16xf32>
    %82 = vector.shape_cast %81 : vector<4x16xf32> to vector<4x16x1xf32>
    %83 = tpu.reciprocal %82 {approx = true} : vector<4x16x1xf32> -> vector<4x16x1xf32>
    %84 = vector.broadcast %83 : vector<4x16x1xf32> to vector<4x16x16xf32>
    %85 = arith.mulf %80, %84 : vector<4x16x16xf32>
    %86 = arith.truncf %85 : vector<4x16x16xf32> to vector<4x16x16xbf16>
    %cst_23 = arith.constant dense<0.000000e+00> : vector<4x16x128xf32>
    %87 = tpu.matmul %86, %74, %cst_23 {dimension_numbers = #tpu.dot_dimension_numbers<[2], [1], [1], [2], [0, 0, 0, 1, 1, 2], [0], [0]>} : vector<4x16x16xbf16>, vector<4x16x128xbf16>, vector<4x16x128xf32> -> vector<4x16x128xf32>
    %88 = vector.shape_cast %87 : vector<4x16x128xf32> to vector<64x128xf32>
    %89 = arith.truncf %88 : vector<64x128xf32> to vector<64x128xbf16>
    %90 = vector.extract_strided_slice %8 {offsets = [256, 0], sizes = [128, 128], strides = [1, 1]} : vector<512x128xbf16> to vector<128x128xbf16>
    %cst_24 = arith.constant dense<0.000000e+00> : vector<64x128xf32>
    %91 = tpu.matmul %89, %90, %cst_24 {dimension_numbers = #tpu.dot_dimension_numbers<[1], [0], [0], [1], [0, 0, 1, 1], [], []>} : vector<64x128xbf16>, vector<128x128xbf16>, vector<64x128xf32> -> vector<64x128xf32>
    %92 = arith.addf %65, %91 : vector<64x128xf32>
    %93 = vector.extract_strided_slice %7 {offsets = [0, 384], sizes = [64, 128], strides = [1, 1]} : vector<64x1536xf32> to vector<64x128xf32>
    %94 = vector.shape_cast %93 : vector<64x128xf32> to vector<4x16x128xf32>
    %95 = arith.truncf %94 : vector<4x16x128xf32> to vector<4x16x128xbf16>
    %96 = vector.extract_strided_slice %7 {offsets = [0, 896], sizes = [64, 128], strides = [1, 1]} : vector<64x1536xf32> to vector<64x128xf32>
    %97 = vector.shape_cast %96 : vector<64x128xf32> to vector<4x16x128xf32>
    %98 = arith.truncf %97 : vector<4x16x128xf32> to vector<4x16x128xbf16>
    %99 = vector.extract_strided_slice %7 {offsets = [0, 1408], sizes = [64, 128], strides = [1, 1]} : vector<64x1536xf32> to vector<64x128xf32>
    %100 = vector.shape_cast %99 : vector<64x128xf32> to vector<4x16x128xf32>
    %101 = arith.truncf %100 : vector<4x16x128xf32> to vector<4x16x128xbf16>
    %cst_25 = arith.constant dense<0.000000e+00> : vector<4x16x16xf32>
    %102 = tpu.matmul %95, %98, %cst_25 {dimension_numbers = #tpu.dot_dimension_numbers<[2], [2], [1], [1], [0, 0, 0, 1, 1, 1], [0], [0]>} : vector<4x16x128xbf16>, vector<4x16x128xbf16>, vector<4x16x16xf32> -> vector<4x16x16xf32>
    %cst_26 = arith.constant dense<0xFF800000> : vector<4x16xf32>
    %103 = vector.multi_reduction <maximumf>, %102, %cst_26 [2] : vector<4x16x16xf32> to vector<4x16xf32>
    %104 = vector.shape_cast %103 : vector<4x16xf32> to vector<4x16x1xf32>
    %105 = vector.broadcast %104 : vector<4x16x1xf32> to vector<4x16x16xf32>
    %106 = arith.subf %102, %105 : vector<4x16x16xf32>
    %107 = math.exp %106 : vector<4x16x16xf32>
    %cst_27 = arith.constant dense<0.000000e+00> : vector<4x16xf32>
    %108 = vector.multi_reduction <add>, %107, %cst_27 [2] : vector<4x16x16xf32> to vector<4x16xf32>
    %109 = vector.shape_cast %108 : vector<4x16xf32> to vector<4x16x1xf32>
    %110 = tpu.reciprocal %109 {approx = true} : vector<4x16x1xf32> -> vector<4x16x1xf32>
    %111 = vector.broadcast %110 : vector<4x16x1xf32> to vector<4x16x16xf32>
    %112 = arith.mulf %107, %111 : vector<4x16x16xf32>
    %113 = arith.truncf %112 : vector<4x16x16xf32> to vector<4x16x16xbf16>
    %cst_28 = arith.constant dense<0.000000e+00> : vector<4x16x128xf32>
    %114 = tpu.matmul %113, %101, %cst_28 {dimension_numbers = #tpu.dot_dimension_numbers<[2], [1], [1], [2], [0, 0, 0, 1, 1, 2], [0], [0]>} : vector<4x16x16xbf16>, vector<4x16x128xbf16>, vector<4x16x128xf32> -> vector<4x16x128xf32>
    %115 = vector.shape_cast %114 : vector<4x16x128xf32> to vector<64x128xf32>
    %116 = arith.truncf %115 : vector<64x128xf32> to vector<64x128xbf16>
    %117 = vector.extract_strided_slice %8 {offsets = [384, 0], sizes = [128, 128], strides = [1, 1]} : vector<512x128xbf16> to vector<128x128xbf16>
    %cst_29 = arith.constant dense<0.000000e+00> : vector<64x128xf32>
    %118 = tpu.matmul %116, %117, %cst_29 {dimension_numbers = #tpu.dot_dimension_numbers<[1], [0], [0], [1], [0, 0, 1, 1], [], []>} : vector<64x128xbf16>, vector<128x128xbf16>, vector<64x128xf32> -> vector<64x128xf32>
    %119 = arith.addf %92, %118 : vector<64x128xf32>
    %120 = arith.addf %1, %119 : vector<64x128xf32>
    %cst_30 = arith.constant dense<0.000000e+00> : vector<64xf32>
    %121 = vector.multi_reduction <add>, %120, %cst_30 [1] : vector<64x128xf32> to vector<64xf32>
    %122 = vector.shape_cast %121 : vector<64xf32> to vector<64x1xf32>
    %cst_31 = arith.constant 1.280000e+02 : f32
    %123 = vector.broadcast %cst_31 : f32 to vector<64x1xf32>
    %124 = arith.divf %122, %123 : vector<64x1xf32>
    %125 = vector.broadcast %124 : vector<64x1xf32> to vector<64x128xf32>
    %126 = arith.subf %120, %125 : vector<64x128xf32>
    %127 = arith.mulf %126, %126 : vector<64x128xf32>
    %cst_32 = arith.constant dense<0.000000e+00> : vector<64xf32>
    %128 = vector.multi_reduction <add>, %127, %cst_32 [1] : vector<64x128xf32> to vector<64xf32>
    %129 = vector.shape_cast %128 : vector<64xf32> to vector<64x1xf32>
    %cst_33 = arith.constant 1.280000e+02 : f32
    %130 = vector.broadcast %cst_33 : f32 to vector<64x1xf32>
    %131 = arith.divf %129, %130 : vector<64x1xf32>
    %cst_34 = arith.constant 9.99999974E-6 : f32
    %132 = vector.broadcast %cst_34 : f32 to vector<64x1xf32>
    %133 = arith.addf %131, %132 : vector<64x1xf32>
    %134 = math.rsqrt %133 : vector<64x1xf32>
    %135 = vector.broadcast %134 : vector<64x1xf32> to vector<64x128xf32>
    %136 = arith.mulf %126, %135 : vector<64x128xf32>
    %c0_35 = arith.constant 0 : index
    %c0_36 = arith.constant 0 : index
    %137 = vector.load %arg6[%c0_35, %c0_36] : memref<1x128xf32, #tpu.memory_space<vmem>>, vector<1x128xf32>
    %138 = vector.broadcast %137 : vector<1x128xf32> to vector<64x128xf32>
    %139 = arith.mulf %136, %138 : vector<64x128xf32>
    %c0_37 = arith.constant 0 : index
    %c0_38 = arith.constant 0 : index
    %140 = vector.load %arg7[%c0_37, %c0_38] : memref<1x128xf32, #tpu.memory_space<vmem>>, vector<1x128xf32>
    %141 = vector.broadcast %140 : vector<1x128xf32> to vector<64x128xf32>
    %142 = arith.addf %139, %141 : vector<64x128xf32>
    %143 = vector.shape_cast %142 : vector<64x128xf32> to vector<4x16x128xf32>
    %c0_39 = arith.constant 0 : index
    %c0_40 = arith.constant 0 : index
    %c0_41 = arith.constant 0 : index
    %144 = vector.load %arg8[%c0_39, %c0_40, %c0_41] : memref<4x16x128xf32, #tpu.memory_space<vmem>>, vector<4x16x128xf32>
    tpu.vector_store %arg8[%c0_39, %c0_40, %c0_41], %143 {strides = array<i32>} : memref<4x16x128xf32, #tpu.memory_space<vmem>>, vector<4x16x128xf32>,
    return
  }
  func.func @transform_0(%arg0: i32) -> (i32, i32, i32) {
    %c0_i32 = arith.constant 0 : i32
    %c0_i32_0 = arith.constant 0 : i32
    %c0_i32_1 = arith.constant 0 : i32
    return %arg0, %c0_i32, %c0_i32_0 : i32, i32, i32
  }
  func.func @transform_1(%arg0: i32) -> (i32, i32) {
    %c0_i32 = arith.constant 0 : i32
    %c0_i32_0 = arith.constant 0 : i32
    %c0_i32_1 = arith.constant 0 : i32
    return %c0_i32, %c0_i32_0 : i32, i32
  }
  func.func @transform_2(%arg0: i32) -> (i32, i32) {
    %c0_i32 = arith.constant 0 : i32
    %c0_i32_0 = arith.constant 0 : i32
    %c0_i32_1 = arith.constant 0 : i32
    return %c0_i32, %c0_i32_0 : i32, i32
  }
  func.func @transform_3(%arg0: i32) -> (i32, i32) {
    %c0_i32 = arith.constant 0 : i32
    %c0_i32_0 = arith.constant 0 : i32
    %c0_i32_1 = arith.constant 0 : i32
    return %c0_i32, %c0_i32_0 : i32, i32
  }
  func.func @transform_4(%arg0: i32) -> (i32, i32) {
    %c0_i32 = arith.constant 0 : i32
    %c0_i32_0 = arith.constant 0 : i32
    %c0_i32_1 = arith.constant 0 : i32
    return %c0_i32, %c0_i32_0 : i32, i32
  }
  func.func @transform_5(%arg0: i32) -> (i32, i32) {
    %c0_i32 = arith.constant 0 : i32
    %c0_i32_0 = arith.constant 0 : i32
    %c0_i32_1 = arith.constant 0 : i32
    return %c0_i32, %c0_i32_0 : i32, i32
  }
  func.func @transform_6(%arg0: i32) -> (i32, i32) {
    %c0_i32 = arith.constant 0 : i32
    %c0_i32_0 = arith.constant 0 : i32
    %c0_i32_1 = arith.constant 0 : i32
    return %c0_i32, %c0_i32_0 : i32, i32
  }
  func.func @transform_7(%arg0: i32) -> (i32, i32, i32) {
    %c0_i32 = arith.constant 0 : i32
    %c0_i32_0 = arith.constant 0 : i32
    %c0_i32_1 = arith.constant 0 : i32
    return %arg0, %c0_i32, %c0_i32_0 : i32, i32, i32
  }
}

</mosaic_0001>

<llo_original>
// kernel: tpu_custom_call.1
$region0: #{tpu_custom_call.1}
  #allocation0 [shape = 'u32[]', space=smem, size = 0x4, offset = 0x4, fixed_abs, tag = 'smem constant byte address 0x4 - core index']
  #allocation1 [shape = 'u32[144,128]{1,0:T(1,128)}', space=vmem, size = 0x12000, scoped, tag = 'internal scratch']
  %s0 = inlined_call_operand.hbm [shape: f32[8,16,128], index: 0, kind: input, shape index: {}]
  %s1 = inlined_call_operand.hbm [shape: bf16[128,1536], index: 1, kind: input, shape index: {}]
  %s2 = inlined_call_operand.hbm [shape: f32[1,1536], index: 2, kind: input, shape index: {}]
  %s3 = inlined_call_operand.hbm [shape: bf16[512,128], index: 3, kind: input, shape index: {}]
  %s4 = inlined_call_operand.vmem [shape: f32[1,128], index: 4, kind: input, shape index: {}]
  %s5 = inlined_call_operand.vmem [shape: f32[1,128], index: 5, kind: input, shape index: {}]
  %s6 = inlined_call_operand.vmem [shape: f32[1,128], index: 6, kind: input, shape index: {}]
  %s7 = inlined_call_operand.hbm [shape: f32[8,16,128], index: 7, kind: output, shape index: {}]
  %s8 = sld [smem:[#allocation0]]
  $region77: #{tpu_custom_call.1} parent=0
    _
  %s10 = ssub.s32 1, %s8
  %s11 = scalar_select 0, %s10, %s8
  $region1: #{tpu_custom_call.1} parent=0
    #allocation2 [shape = 'u8[65536]{0}', space=vmem, size = 0x10000, scoped, tag = 'input window, operand 0']
    #allocation3 [shape = 's32[2]{0}', space=sflag, size = 0x8, scoped, tag = 'scoped memory for tpu_custom_call.1']
    #allocation4 [shape = 's32[2]{0}', space=sflag, size = 0x8, scoped, tag = 'scoped memory for tpu_custom_call.1']
    #allocation5 [shape = 'u8[393216]{0}', space=vmem, size = 0x60000, scoped, tag = 'input window, operand 1, single buffered']
    #allocation6 [shape = 's32[1]{0}', space=sflag, size = 0x4, scoped, tag = 'scoped memory for tpu_custom_call.1']
    #allocation7 [shape = 'u8[6144]{0}', space=vmem, size = 0x1800, scoped, tag = 'input window, operand 2, single buffered']
    #allocation8 [shape = 'u8[131072]{0}', space=vmem, size = 0x20000, scoped, tag = 'input window, operand 3, single buffered']
    #allocation9 [shape = 's32[1]{0}', space=sflag, size = 0x4, scoped, tag = 'scoped memory for tpu_custom_call.1']
    #allocation10 [shape = 'u8[65536]{0}', space=vmem, size = 0x10000, scoped, tag = 'output window, operand 0']
    %12 = vsyncpa [#allocation3], 0
    %s13 = scalar_lea.sflag [#allocation3], 1
    %14 = vsyncpa %s13, 0
    %15 = vsyncpa [#allocation6], 0
    %16 = vsyncpa [#allocation9], 0
    %17 = vsyncpa [#allocation4], 0
    %s18 = scalar_lea.sflag [#allocation4], 1
    %19 = vsyncpa %s18, 0
    loop: start=0, step=1, limit=4
    $region2: #{tpu_custom_call.1} parent=1 // loop_pre_header
      _
    $region3: #{tpu_custom_call.1} parent=1 // loop_header
      %s21 = sphi 0, %s25
      %p22 = scmp.ge.s32.totalorder %s21, 4
      %s31 = sphi 0, %s33
      %s34 = sphi 0, %s31
      %s35 = sphi 0, %s34
      %s51 = sphi 0, %s35
      %s55 = sphi 0, %s55
      %s57 = sphi 0, %s55
      %s58 = sphi 0, %s57
      %s72 = sphi 0, %s58
      %s76 = sphi 0, %s76
      %s78 = sphi 0, %s76
      %s79 = sphi 0, %s78
      %s93 = sphi 0, %s79
      %s97 = sphi 0, %s97
      %s99 = sphi 0, %s97
      %s100 = sphi 0, %s99
      %s114 = sphi 0, %s100
      %s118 = sphi 0, %s118
      %s120 = sphi 0, %s118
      %s121 = sphi 0, %s120
      %s135 = sphi 0, %s121
      %s139 = sphi 0, %s139
      %s141 = sphi 0, %s139
      %s142 = sphi 0, %s141
      %s156 = sphi 0, %s142
      %s160 = sphi 0, %s160
      %s162 = sphi 0, %s160
      %s163 = sphi 0, %s162
      %s177 = sphi 0, %s163
      %s183 = sphi 0, %s185
      %s186 = sphi 0, %s183
      %s187 = sphi 0, %s186
      %s203 = sphi 0, %s187
    $region4: #{tpu_custom_call.1} parent=1 // loop_header_branch
      %24 = sbr.rel (%p22) target = $region8
    $region5: #{tpu_custom_call.1} parent=1 // loop_body
      %s26 = ssub.s32 %s21, 1
      %s27 = ssub.s32 %s21, 2
      %s28 = sadd.s32 %s21, 1
      %s29 = ssub.s32 %s21, %s28
      %p30 = scmp.eq.s32.totalorder %s29, 0
      %s32 = sadd.s32 %s31, 1
      %s33 = scalar_select %p30, %s31, %s32
      %p36 = pneg %p30
      %p37 = scmp.eq.s32.totalorder %s21, 1
      %p38 = por %p36, %p37
      %p39 = scmp.ne.s32.totalorder %s31, %s34
      %p40 = scmp.eq.s32.totalorder %s21, 0
      %p41 = por %p39, %p40
      %p42 = scmp.ne.s32.totalorder %s31, %s34
      %p43 = scmp.eq.s32.totalorder %s26, 1
      %p44 = por %p42, %p43
      %p45 = scmp.ne.s32.totalorder %s34, %s35
      %p46 = scmp.eq.s32.totalorder %s26, 0
      %p47 = por %p45, %p46
      %p48 = scmp.ne.s32.totalorder %s34, %s35
      %p49 = scmp.eq.s32.totalorder %s27, 1
      %p50 = por %p48, %p49
      %p52 = scmp.ne.s32.totalorder %s35, %s51
      %p53 = scmp.eq.s32.totalorder %s27, 0
      %p54 = por %p52, %p53
      %s56 = sadd.s32 %s55, 1
      %p59 = scmp.eq.s32.totalorder %s21, 1
      %p60 = scmp.ne.s32.totalorder %s55, %s57
      %p61 = scmp.eq.s32.totalorder %s21, 0
      %p62 = por %p60, %p61
      %p63 = scmp.ne.s32.totalorder %s55, %s57
      %p64 = scmp.eq.s32.totalorder %s26, 1
      %p65 = por %p63, %p64
      %p66 = scmp.ne.s32.totalorder %s57, %s58
      %p67 = scmp.eq.s32.totalorder %s26, 0
      %p68 = por %p66, %p67
      %p69 = scmp.ne.s32.totalorder %s57, %s58
      %p70 = scmp.eq.s32.totalorder %s27, 1
      %p71 = por %p69, %p70
      %p73 = scmp.ne.s32.totalorder %s58, %s72
      %p74 = scmp.eq.s32.totalorder %s27, 0
      %p75 = por %p73, %p74
      %s77 = sadd.s32 %s76, 1
      %p80 = scmp.eq.s32.totalorder %s21, 1
      %p81 = scmp.ne.s32.totalorder %s76, %s78
      %p82 = scmp.eq.s32.totalorder %s21, 0
      %p83 = por %p81, %p82
      %p84 = scmp.ne.s32.totalorder %s76, %s78
      %p85 = scmp.eq.s32.totalorder %s26, 1
      %p86 = por %p84, %p85
      %p87 = scmp.ne.s32.totalorder %s78, %s79
      %p88 = scmp.eq.s32.totalorder %s26, 0
      %p89 = por %p87, %p88
      %p90 = scmp.ne.s32.totalorder %s78, %s79
      %p91 = scmp.eq.s32.totalorder %s27, 1
      %p92 = por %p90, %p91
      %p94 = scmp.ne.s32.totalorder %s79, %s93
      %p95 = scmp.eq.s32.totalorder %s27, 0
      %p96 = por %p94, %p95
      %s98 = sadd.s32 %s97, 1
      %p101 = scmp.eq.s32.totalorder %s21, 1
      %p102 = scmp.ne.s32.totalorder %s97, %s99
      %p103 = scmp.eq.s32.totalorder %s21, 0
      %p104 = por %p102, %p103
      %p105 = scmp.ne.s32.totalorder %s97, %s99
      %p106 = scmp.eq.s32.totalorder %s26, 1
      %p107 = por %p105, %p106
      %p108 = scmp.ne.s32.totalorder %s99, %s100
      %p109 = scmp.eq.s32.totalorder %s26, 0
      %p110 = por %p108, %p109
      %p111 = scmp.ne.s32.totalorder %s99, %s100
      %p112 = scmp.eq.s32.totalorder %s27, 1
      %p113 = por %p111, %p112
      %p115 = scmp.ne.s32.totalorder %s100, %s114
      %p116 = scmp.eq.s32.totalorder %s27, 0
      %p117 = por %p115, %p116
      %s119 = sadd.s32 %s118, 1
      %p122 = scmp.eq.s32.totalorder %s21, 1
      %p123 = scmp.ne.s32.totalorder %s118, %s120
      %p124 = scmp.eq.s32.totalorder %s21, 0
      %p125 = por %p123, %p124
      %p126 = scmp.ne.s32.totalorder %s118, %s120
      %p127 = scmp.eq.s32.totalorder %s26, 1
      %p128 = por %p126, %p127
      %p129 = scmp.ne.s32.totalorder %s120, %s121
      %p130 = scmp.eq.s32.totalorder %s26, 0
      %p131 = por %p129, %p130
      %p132 = scmp.ne.s32.totalorder %s120, %s121
      %p133 = scmp.eq.s32.totalorder %s27, 1
      %p134 = por %p132, %p133
      %p136 = scmp.ne.s32.totalorder %s121, %s135
      %p137 = scmp.eq.s32.totalorder %s27, 0
      %p138 = por %p136, %p137
      %s140 = sadd.s32 %s139, 1
      %p143 = scmp.eq.s32.totalorder %s21, 1
      %p144 = scmp.ne.s32.totalorder %s139, %s141
      %p145 = scmp.eq.s32.totalorder %s21, 0
      %p146 = por %p144, %p145
      %p147 = scmp.ne.s32.totalorder %s139, %s141
      %p148 = scmp.eq.s32.totalorder %s26, 1
      %p149 = por %p147, %p148
      %p150 = scmp.ne.s32.totalorder %s141, %s142
      %p151 = scmp.eq.s32.totalorder %s26, 0
      %p152 = por %p150, %p151
      %p153 = scmp.ne.s32.totalorder %s141, %s142
      %p154 = scmp.eq.s32.totalorder %s27, 1
      %p155 = por %p153, %p154
      %p157 = scmp.ne.s32.totalorder %s142, %s156
      %p158 = scmp.eq.s32.totalorder %s27, 0
      %p159 = por %p157, %p158
      %s161 = sadd.s32 %s160, 1
      %p164 = scmp.eq.s32.totalorder %s21, 1
      %p165 = scmp.ne.s32.totalorder %s160, %s162
      %p166 = scmp.eq.s32.totalorder %s21, 0
      %p167 = por %p165, %p166
      %p168 = scmp.ne.s32.totalorder %s160, %s162
      %p169 = scmp.eq.s32.totalorder %s26, 1
      %p170 = por %p168, %p169
      %p171 = scmp.ne.s32.totalorder %s162, %s163
      %p172 = scmp.eq.s32.totalorder %s26, 0
      %p173 = por %p171, %p172
      %p174 = scmp.ne.s32.totalorder %s162, %s163
      %p175 = scmp.eq.s32.totalorder %s27, 1
      %p176 = por %p174, %p175
      %p178 = scmp.ne.s32.totalorder %s163, %s177
      %p179 = scmp.eq.s32.totalorder %s27, 0
      %p180 = por %p178, %p179
      %s181 = ssub.s32 %s21, %s28
      %p182 = scmp.eq.s32.totalorder %s181, 0
      %s184 = sadd.s32 %s183, 1
      %s185 = scalar_select %p182, %s183, %s184
      %p188 = pneg %p182
      %p189 = scmp.eq.s32.totalorder %s21, 1
      %p190 = por %p188, %p189
      %p191 = scmp.ne.s32.totalorder %s183, %s186
      %p192 = scmp.eq.s32.totalorder %s21, 0
      %p193 = por %p191, %p192
      %p194 = scmp.ne.s32.totalorder %s183, %s186
      %p195 = scmp.eq.s32.totalorder %s26, 1
      %p196 = por %p194, %p195
      %p197 = scmp.ne.s32.totalorder %s186, %s187
      %p198 = scmp.eq.s32.totalorder %s26, 0
      %p199 = por %p197, %p198
      %p200 = scmp.ne.s32.totalorder %s186, %s187
      %p201 = scmp.eq.s32.totalorder %s27, 1
      %p202 = por %p200, %p201
      %p204 = scmp.ne.s32.totalorder %s187, %s203
      %p205 = scmp.eq.s32.totalorder %s27, 0
      %p206 = por %p204, %p205
      %p207 = scmp.le.s32.totalorder 1, %s21
      %p208 = scmp.lt.s32.totalorder %s21, 3
      %p209 = pnand %p207, %p208
      %p210 = pneg %p209
      // Predicated region
      $region9: #{tpu_custom_call.1} parent=5 // pred_check
        _
      $region10: #{tpu_custom_call.1} parent=5 // pred_check_branch
        %212 = sbr.rel (%p209) target = $region12
      $region11: #{tpu_custom_call.1} parent=5 // pred_region
        %s213 = ssub.s32 %s21, 1
        // Predicated region
        $region13: #{tpu_custom_call.1} parent=11 // pred_check
          %p214 = pneg %p68
        $region14: #{tpu_custom_call.1} parent=11 // pred_check_branch
          %216 = sbr.rel (%p214) target = $region16
        $region15: #{tpu_custom_call.1} parent=11 // pred_region
          %s218 = ssub.s32 12288, 12288
          %219 = vsyncadd [#allocation6], %s218
          %s220 = sshll.u32 [#allocation5], 4
          %s221 = int_to_ptr.vmem [resolvable:$true] %s220
          %226 = dma.hbm_to_vmem [thread:$0]  %s1, 12288, %s221, [#allocation6], 768, 768, 48
        $region16: #{tpu_custom_call.1} parent=11 // pred_fallthru
          _
        // Predicated region
        $region17: #{tpu_custom_call.1} parent=11 // pred_check
          %p227 = pneg %p89
        $region18: #{tpu_custom_call.1} parent=11 // pred_check_branch
          %229 = sbr.rel (%p227) target = $region20
        $region19: #{tpu_custom_call.1} parent=11 // pred_region
          %s231 = ssub.s32 192, 192
          %232 = vsyncadd [#allocation6], %s231
          %s234 = sshll.u32 [#allocation7], 4
          %s235 = int_to_ptr.vmem [resolvable:$true] %s234
          %237 = dma.hbm_to_vmem [thread:$0]  %s2, 192, %s235, [#allocation6]
        $region20: #{tpu_custom_call.1} parent=11 // pred_fallthru
          _
        // Predicated region
        $region21: #{tpu_custom_call.1} parent=11 // pred_check
          %p238 = pneg %p110
        $region22: #{tpu_custom_call.1} parent=11 // pred_check_branch
          %240 = sbr.rel (%p238) target = $region24
        $region23: #{tpu_custom_call.1} parent=11 // pred_region
          %s242 = ssub.s32 4096, 4096
          %243 = vsyncadd [#allocation9], %s242
          %s244 = sshll.u32 [#allocation8], 4
          %s245 = int_to_ptr.vmem [resolvable:$true] %s244
          %250 = dma.hbm_to_vmem [thread:$0]  %s3, 4096, %s245, [#allocation9], 64, 64, 4
        $region24: #{tpu_custom_call.1} parent=11 // pred_fallthru
          _
        // Predicated region
        $region25: #{tpu_custom_call.1} parent=11 // pred_check
          %p251 = pneg %p131
        $region26: #{tpu_custom_call.1} parent=11 // pred_check_branch
          %253 = sbr.rel (%p251) target = $region28
        $region27: #{tpu_custom_call.1} parent=11 // pred_region
          _
        $region28: #{tpu_custom_call.1} parent=11 // pred_fallthru
          _
        // Predicated region
        $region29: #{tpu_custom_call.1} parent=11 // pred_check
          %p254 = pneg %p152
        $region30: #{tpu_custom_call.1} parent=11 // pred_check_branch
          %256 = sbr.rel (%p254) target = $region32
        $region31: #{tpu_custom_call.1} parent=11 // pred_region
          _
        $region32: #{tpu_custom_call.1} parent=11 // pred_fallthru
          _
        // Predicated region
        $region33: #{tpu_custom_call.1} parent=11 // pred_check
          %p257 = pneg %p173
        $region34: #{tpu_custom_call.1} parent=11 // pred_check_branch
          %259 = sbr.rel (%p257) target = $region36
        $region35: #{tpu_custom_call.1} parent=11 // pred_region
          _
        $region36: #{tpu_custom_call.1} parent=11 // pred_fallthru
          _
      $region12: #{tpu_custom_call.1} parent=5 // pred_fallthru
        _
      %p260 = scmp.lt.s32.totalorder %s21, 2
      // Predicated region
      $region37: #{tpu_custom_call.1} parent=5 // pred_check
        %p261 = pneg %p260
      $region38: #{tpu_custom_call.1} parent=5 // pred_check_branch
        %263 = sbr.rel (%p261) target = $region40
      $region39: #{tpu_custom_call.1} parent=5 // pred_region
        // Predicated region
        $region41: #{tpu_custom_call.1} parent=39 // pred_check
          %p264 = pneg %p41
        $region42: #{tpu_custom_call.1} parent=39 // pred_check_branch
          %266 = sbr.rel (%p264) target = $region44
        $region43: #{tpu_custom_call.1} parent=39 // pred_region
          %s267 = sand.u32 %s31, 1
          %s268 = scalar_lea.sflag [#allocation3], %s267
          %s269 = sand.u32 %s31, 1
          %s270 = smul.addr %s269, 64
          %s271 = scalar_lea.vmem [#allocation2], %s270
          %s272 = smul.u32 4, %s21
          %s274 = ssub.s32 1024, 1024
          %275 = vsyncadd %s268, %s274
          %s276 = smul.addr %s272, 2
          %s277 = smul.addr %s276, 128
          %s278 = scalar_lea.hbm %s0, %s277
          %s279 = sshll.u32 %s271, 4
          %s280 = int_to_ptr.vmem [resolvable:$true] %s279
          %285 = dma.hbm_to_vmem [thread:$0]  %s278, 1024, %s280, %s268, 128, 128, 8
        $region44: #{tpu_custom_call.1} parent=39 // pred_fallthru
          _
      $region40: #{tpu_custom_call.1} parent=5 // pred_fallthru
        _
      %p286 = scmp.le.s32.totalorder 1, %s21
      %p287 = scmp.lt.s32.totalorder %s21, 3
      %p288 = pnand %p286, %p287
      %p289 = pneg %p288
      // Predicated region
      $region45: #{tpu_custom_call.1} parent=5 // pred_check
        _
      $region46: #{tpu_custom_call.1} parent=5 // pred_check_branch
        %291 = sbr.rel (%p288) target = $region48
      $region47: #{tpu_custom_call.1} parent=5 // pred_region
        %s292 = ssub.s32 %s21, 1
        %s293 = sand.u32 %s34, 1
        %s294 = scalar_lea.sflag [#allocation3], %s293
        %s295 = sand.u32 %s34, 1
        %s296 = smul.addr %s295, 64
        %s297 = scalar_lea.vmem [#allocation2], %s296
        // Predicated region
        $region49: #{tpu_custom_call.1} parent=47 // pred_check
          %p298 = pneg %p47
        $region50: #{tpu_custom_call.1} parent=47 // pred_check_branch
          %300 = sbr.rel (%p298) target = $region52
        $region51: #{tpu_custom_call.1} parent=47 // pred_region
          %301 = dma.done %s294, 1024
        $region52: #{tpu_custom_call.1} parent=47 // pred_fallthru
          _
        // Predicated region
        $region53: #{tpu_custom_call.1} parent=47 // pred_check
          %p302 = pneg %p68
        $region54: #{tpu_custom_call.1} parent=47 // pred_check_branch
          %304 = sbr.rel (%p302) target = $region56
        $region55: #{tpu_custom_call.1} parent=47 // pred_region
          %305 = dma.done [#allocation6], 12288
        $region56: #{tpu_custom_call.1} parent=47 // pred_fallthru
          _
        // Predicated region
        $region57: #{tpu_custom_call.1} parent=47 // pred_check
          %p306 = pneg %p89
        $region58: #{tpu_custom_call.1} parent=47 // pred_check_branch
          %308 = sbr.rel (%p306) target = $region60
        $region59: #{tpu_custom_call.1} parent=47 // pred_region
          %309 = dma.done [#allocation6], 192
        $region60: #{tpu_custom_call.1} parent=47 // pred_fallthru
          _
        // Predicated region
        $region61: #{tpu_custom_call.1} parent=47 // pred_check
          %p310 = pneg %p110
        $region62: #{tpu_custom_call.1} parent=47 // pred_check_branch
          %312 = sbr.rel (%p310) target = $region64
        $region63: #{tpu_custom_call.1} parent=47 // pred_region
          %313 = dma.done [#allocation9], 4096
        $region64: #{tpu_custom_call.1} parent=47 // pred_fallthru
          _
        %s314 = sand.u32 %s34, 1
        %s315 = scalar_lea.sflag [#allocation3], %s314
        %s316 = sand.u32 %s34, 1
        %s317 = smul.addr %s316, 64
        %s318 = scalar_lea.vmem [#allocation2], %s317
        %p319 = pneg %p47
        %p320 = pneg %p44
        %p321 = pneg %p68
        %p322 = pneg %p65
        %p323 = pneg %p89
        %p324 = pneg %p86
        %p325 = pneg %p110
        %p326 = pneg %p107
        %p327 = pneg %p131
        %p328 = pneg %p128
        %p329 = pneg %p152
        %p330 = pneg %p149
        %p331 = pneg %p173
        %p332 = pneg %p170
        %p333 = pneg %p199
        %p334 = pneg %p196
        %s335 = sand.u32 %s186, 1
        %s336 = scalar_lea.sflag [#allocation4], %s335
        %s337 = sand.u32 %s186, 1
        %s338 = smul.addr %s337, 64
        %s339 = scalar_lea.vmem [#allocation10], %s338
        %s340 = smul.u32 4, %s26
        %s341 = smul.u32 4, %s26
        %v343 = vld [vmem:[%s297] sm:$0xff]
        %v344 = vld [vmem:[%s297 + $0x8] sm:$0xff]
        %v345 = vld [vmem:[%s297 + $0x10] sm:$0xff]
        %v346 = vld [vmem:[%s297 + $0x18] sm:$0xff]
        %v347 = vld [vmem:[%s297 + $0x20] sm:$0xff]
        %v348 = vld [vmem:[%s297 + $0x28] sm:$0xff]
        %v349 = vld [vmem:[%s297 + $0x30] sm:$0xff]
        %v350 = vld [vmem:[%s297 + $0x38] sm:$0xff]
        %v351 = vpack.c.bf16 %v344, %v343
        %v352 = vpack.c.bf16 %v346, %v345
        %v353 = vpack.c.bf16 %v348, %v347
        %v354 = vpack.c.bf16 %v350, %v349
        %v355 = vld [vmem:[#allocation5] sm:$0xff]
        %v356 = vld [vmem:[#allocation5 + $0x8] sm:$0xff]
        %v357 = vld [vmem:[#allocation5 + $0x10] sm:$0xff]
        %v358 = vld [vmem:[#allocation5 + $0x18] sm:$0xff]
        %v359 = vld [vmem:[#allocation5 + $0x20] sm:$0xff]
        %v360 = vld [vmem:[#allocation5 + $0x28] sm:$0xff]
        %v361 = vld [vmem:[#allocation5 + $0x30] sm:$0xff]
        %v362 = vld [vmem:[#allocation5 + $0x38] sm:$0xff]
        %v363 = vld [vmem:[#allocation5 + $0x40] sm:$0xff]
        %v364 = vld [vmem:[#allocation5 + $0x48] sm:$0xff]
        %v365 = vld [vmem:[#allocation5 + $0x50] sm:$0xff]
        %v366 = vld [vmem:[#allocation5 + $0x58] sm:$0xff]
        %v367 = vld [vmem:[#allocation5 + $0x60] sm:$0xff]
        %v368 = vld [vmem:[#allocation5 + $0x68] sm:$0xff]
        %v369 = vld [vmem:[#allocation5 + $0x70] sm:$0xff]
        %v370 = vld [vmem:[#allocation5 + $0x78] sm:$0xff]
        %v371 = vld [vmem:[#allocation5 + $0x80] sm:$0xff]
        %v372 = vld [vmem:[#allocation5 + $0x88] sm:$0xff]
        %v373 = vld [vmem:[#allocation5 + $0x90] sm:$0xff]
        %v374 = vld [vmem:[#allocation5 + $0x98] sm:$0xff]
        %v375 = vld [vmem:[#allocation5 + $0xa0] sm:$0xff]
        %v376 = vld [vmem:[#allocation5 + $0xa8] sm:$0xff]
        %v377 = vld [vmem:[#allocation5 + $0xb0] sm:$0xff]
        %v378 = vld [vmem:[#allocation5 + $0xb8] sm:$0xff]
        %v379 = vld [vmem:[#allocation5 + $0xc0] sm:$0xff]
        %v380 = vld [vmem:[#allocation5 + $0xc8] sm:$0xff]
        %v381 = vld [vmem:[#allocation5 + $0xd0] sm:$0xff]
        %v382 = vld [vmem:[#allocation5 + $0xd8] sm:$0xff]
        %v383 = vld [vmem:[#allocation5 + $0xe0] sm:$0xff]
        %v384 = vld [vmem:[#allocation5 + $0xe8] sm:$0xff]
        %v385 = vld [vmem:[#allocation5 + $0xf0] sm:$0xff]
        %v386 = vld [vmem:[#allocation5 + $0xf8] sm:$0xff]
        %v387 = vld [vmem:[#allocation5 + $0x100] sm:$0xff]
        %v388 = vld [vmem:[#allocation5 + $0x108] sm:$0xff]
        %v389 = vld [vmem:[#allocation5 + $0x110] sm:$0xff]
        %v390 = vld [vmem:[#allocation5 + $0x118] sm:$0xff]
        %v391 = vld [vmem:[#allocation5 + $0x120] sm:$0xff]
        %v392 = vld [vmem:[#allocation5 + $0x128] sm:$0xff]
        %v393 = vld [vmem:[#allocation5 + $0x130] sm:$0xff]
        %v394 = vld [vmem:[#allocation5 + $0x138] sm:$0xff]
        %v395 = vld [vmem:[#allocation5 + $0x140] sm:$0xff]
        %v396 = vld [vmem:[#allocation5 + $0x148] sm:$0xff]
        %v397 = vld [vmem:[#allocation5 + $0x150] sm:$0xff]
        %v398 = vld [vmem:[#allocation5 + $0x158] sm:$0xff]
        %v399 = vld [vmem:[#allocation5 + $0x160] sm:$0xff]
        %v400 = vld [vmem:[#allocation5 + $0x168] sm:$0xff]
        %v401 = vld [vmem:[#allocation5 + $0x170] sm:$0xff]
        %v402 = vld [vmem:[#allocation5 + $0x178] sm:$0xff]
        %v403 = vld [vmem:[#allocation5 + $0x180] sm:$0xff]
        %v404 = vld [vmem:[#allocation5 + $0x188] sm:$0xff]
        %v405 = vld [vmem:[#allocation5 + $0x190] sm:$0xff]
        %v406 = vld [vmem:[#allocation5 + $0x198] sm:$0xff]
        %v407 = vld [vmem:[#allocation5 + $0x1a0] sm:$0xff]
        %v408 = vld [vmem:[#allocation5 + $0x1a8] sm:$0xff]
        %v409 = vld [vmem:[#allocation5 + $0x1b0] sm:$0xff]
        %v410 = vld [vmem:[#allocation5 + $0x1b8] sm:$0xff]
        %v411 = vld [vmem:[#allocation5 + $0x1c0] sm:$0xff]
        %v412 = vld [vmem:[#allocation5 + $0x1c8] sm:$0xff]
        %v413 = vld [vmem:[#allocation5 + $0x1d0] sm:$0xff]
        %v414 = vld [vmem:[#allocation5 + $0x1d8] sm:$0xff]
        %v415 = vld [vmem:[#allocation5 + $0x1e0] sm:$0xff]
        %v416 = vld [vmem:[#allocation5 + $0x1e8] sm:$0xff]
        %v417 = vld [vmem:[#allocation5 + $0x1f0] sm:$0xff]
        %v418 = vld [vmem:[#allocation5 + $0x1f8] sm:$0xff]
        %v419 = vld [vmem:[#allocation5 + $0x200] sm:$0xff]
        %v420 = vld [vmem:[#allocation5 + $0x208] sm:$0xff]
        %v421 = vld [vmem:[#allocation5 + $0x210] sm:$0xff]
        %v422 = vld [vmem:[#allocation5 + $0x218] sm:$0xff]
        %v423 = vld [vmem:[#allocation5 + $0x220] sm:$0xff]
        %v424 = vld [vmem:[#allocation5 + $0x228] sm:$0xff]
        %v425 = vld [vmem:[#allocation5 + $0x230] sm:$0xff]
        %v426 = vld [vmem:[#allocation5 + $0x238] sm:$0xff]
        %v427 = vld [vmem:[#allocation5 + $0x240] sm:$0xff]
        %v428 = vld [vmem:[#allocation5 + $0x248] sm:$0xff]
        %v429 = vld [vmem:[#allocation5 + $0x250] sm:$0xff]
        %v430 = vld [vmem:[#allocation5 + $0x258] sm:$0xff]
        %v431 = vld [vmem:[#allocation5 + $0x260] sm:$0xff]
        %v432 = vld [vmem:[#allocation5 + $0x268] sm:$0xff]
        %v433 = vld [vmem:[#allocation5 + $0x270] sm:$0xff]
        %v434 = vld [vmem:[#allocation5 + $0x278] sm:$0xff]
        %v435 = vld [vmem:[#allocation5 + $0x280] sm:$0xff]
        %v436 = vld [vmem:[#allocation5 + $0x288] sm:$0xff]
        %v437 = vld [vmem:[#allocation5 + $0x290] sm:$0xff]
        %v438 = vld [vmem:[#allocation5 + $0x298] sm:$0xff]
        %v439 = vld [vmem:[#allocation5 + $0x2a0] sm:$0xff]
        %v440 = vld [vmem:[#allocation5 + $0x2a8] sm:$0xff]
        %v441 = vld [vmem:[#allocation5 + $0x2b0] sm:$0xff]
        %v442 = vld [vmem:[#allocation5 + $0x2b8] sm:$0xff]
        %v443 = vld [vmem:[#allocation5 + $0x2c0] sm:$0xff]
        %v444 = vld [vmem:[#allocation5 + $0x2c8] sm:$0xff]
        %v445 = vld [vmem:[#allocation5 + $0x2d0] sm:$0xff]
        %v446 = vld [vmem:[#allocation5 + $0x2d8] sm:$0xff]
        %v447 = vld [vmem:[#allocation5 + $0x2e0] sm:$0xff]
        %v448 = vld [vmem:[#allocation5 + $0x2e8] sm:$0xff]
        %v449 = vld [vmem:[#allocation5 + $0x2f0] sm:$0xff]
        %v450 = vld [vmem:[#allocation5 + $0x2f8] sm:$0xff]
        %v451 = vld [vmem:[#allocation7] sm:$0xff]
        %v452 = vld [vmem:[#allocation7 + $0x8] sm:$0xf]
        %v455 = vlaneseq
        %v456 = vshrl.u32 %v455, 7
        %v457 = vsub.s32 0, %v456
        %v458 = vrot.slane %v451, %v457
        %v459 = vlaneseq
        %v460 = vshrl.u32 %v459, 7
        %v461 = vsub.s32 1, %v460
        %v462 = vrot.slane %v451, %v461
        %v463 = vlaneseq
        %v464 = vshrl.u32 %v463, 7
        %v465 = vsub.s32 2, %v464
        %v466 = vrot.slane %v451, %v465
        %v467 = vlaneseq
        %v468 = vshrl.u32 %v467, 7
        %v469 = vsub.s32 3, %v468
        %v470 = vrot.slane %v451, %v469
        %v471 = vlaneseq
        %v472 = vshrl.u32 %v471, 7
        %v473 = vsub.s32 4, %v472
        %v474 = vrot.slane %v451, %v473
        %v475 = vlaneseq
        %v476 = vshrl.u32 %v475, 7
        %v477 = vsub.s32 5, %v476
        %v478 = vrot.slane %v451, %v477
        %v479 = vlaneseq
        %v480 = vshrl.u32 %v479, 7
        %v481 = vsub.s32 6, %v480
        %v482 = vrot.slane %v451, %v481
        %v483 = vlaneseq
        %v484 = vshrl.u32 %v483, 7
        %v485 = vsub.s32 7, %v484
        %v486 = vrot.slane %v451, %v485
        %v487 = vlaneseq
        %v488 = vshrl.u32 %v487, 7
        %v489 = vsub.s32 0, %v488
        %v490 = vrot.slane %v452, %v489
        %v491 = vlaneseq
        %v492 = vshrl.u32 %v491, 7
        %v493 = vsub.s32 1, %v492
        %v494 = vrot.slane %v452, %v493
        %v495 = vlaneseq
        %v496 = vshrl.u32 %v495, 7
        %v497 = vsub.s32 2, %v496
        %v498 = vrot.slane %v452, %v497
        %v499 = vlaneseq
        %v500 = vshrl.u32 %v499, 7
        %v501 = vsub.s32 3, %v500
        %v502 = vrot.slane %v452, %v501
        %v611 = vunpack.c.l.b16 %v355
        %v612 = vunpack.c.h.b16 %v355
        %v613 = vunpack.c.l.b16 %v356
        %v614 = vunpack.c.h.b16 %v356
        %v615 = vunpack.c.l.b16 %v357
        %v616 = vunpack.c.h.b16 %v357
        %v617 = vunpack.c.l.b16 %v358
        %v618 = vunpack.c.h.b16 %v358
        %v619 = vunpack.c.l.b16 %v359
        %v620 = vunpack.c.h.b16 %v359
        %v621 = vunpack.c.l.b16 %v360
        %v622 = vunpack.c.h.b16 %v360
        %v623 = vunpack.c.l.b16 %v361
        %v624 = vunpack.c.h.b16 %v361
        %v625 = vunpack.c.l.b16 %v362
        %v626 = vunpack.c.h.b16 %v362
        %v627 = vunpack.c.l.b16 %v363
        %v628 = vunpack.c.h.b16 %v363
        %v629 = vunpack.c.l.b16 %v364
        %v630 = vunpack.c.h.b16 %v364
        %v631 = vunpack.c.l.b16 %v365
        %v632 = vunpack.c.h.b16 %v365
        %v633 = vunpack.c.l.b16 %v366
        %v634 = vunpack.c.h.b16 %v366
        %v635 = vunpack.c.l.b16 %v367
        %v636 = vunpack.c.h.b16 %v367
        %v637 = vunpack.c.l.b16 %v368
        %v638 = vunpack.c.h.b16 %v368
        %v639 = vunpack.c.l.b16 %v369
        %v640 = vunpack.c.h.b16 %v369
        %v641 = vunpack.c.l.b16 %v370
        %v642 = vunpack.c.h.b16 %v370
        %v643 = vunpack.c.l.b16 %v371
        %v644 = vunpack.c.h.b16 %v371
        %v645 = vunpack.c.l.b16 %v372
        %v646 = vunpack.c.h.b16 %v372
        %v647 = vunpack.c.l.b16 %v373
        %v648 = vunpack.c.h.b16 %v373
        %v649 = vunpack.c.l.b16 %v374
        %v650 = vunpack.c.h.b16 %v374
        %v651 = vunpack.c.l.b16 %v375
        %v652 = vunpack.c.h.b16 %v375
        %v653 = vunpack.c.l.b16 %v376
        %v654 = vunpack.c.h.b16 %v376
        %v655 = vunpack.c.l.b16 %v377
        %v656 = vunpack.c.h.b16 %v377
        %v657 = vunpack.c.l.b16 %v378
        %v658 = vunpack.c.h.b16 %v378
        %v659 = vunpack.c.l.b16 %v379
        %v660 = vunpack.c.h.b16 %v379
        %v661 = vunpack.c.l.b16 %v380
        %v662 = vunpack.c.h.b16 %v380
        %v663 = vunpack.c.l.b16 %v381
        %v664 = vunpack.c.h.b16 %v381
        %v665 = vunpack.c.l.b16 %v382
        %v666 = vunpack.c.h.b16 %v382
        %v667 = vunpack.c.l.b16 %v383
        %v668 = vunpack.c.h.b16 %v383
        %v669 = vunpack.c.l.b16 %v384
        %v670 = vunpack.c.h.b16 %v384
        %v671 = vunpack.c.l.b16 %v385
        %v672 = vunpack.c.h.b16 %v385
        %v673 = vunpack.c.l.b16 %v386
        %v674 = vunpack.c.h.b16 %v386
        %v675 = vunpack.c.l.b16 %v387
        %v676 = vunpack.c.h.b16 %v387
        %v677 = vunpack.c.l.b16 %v388
        %v678 = vunpack.c.h.b16 %v388
        %v679 = vunpack.c.l.b16 %v389
        %v680 = vunpack.c.h.b16 %v389
        %v681 = vunpack.c.l.b16 %v390
        %v682 = vunpack.c.h.b16 %v390
        %v683 = vunpack.c.l.b16 %v391
        %v684 = vunpack.c.h.b16 %v391
        %v685 = vunpack.c.l.b16 %v392
        %v686 = vunpack.c.h.b16 %v392
        %v687 = vunpack.c.l.b16 %v393
        %v688 = vunpack.c.h.b16 %v393
        %v689 = vunpack.c.l.b16 %v394
        %v690 = vunpack.c.h.b16 %v394
        %v691 = vunpack.c.l.b16 %v395
        %v692 = vunpack.c.h.b16 %v395
        %v693 = vunpack.c.l.b16 %v396
        %v694 = vunpack.c.h.b16 %v396
        %v695 = vunpack.c.l.b16 %v397
        %v696 = vunpack.c.h.b16 %v397
        %v697 = vunpack.c.l.b16 %v398
        %v698 = vunpack.c.h.b16 %v398
        %v699 = vunpack.c.l.b16 %v399
        %v700 = vunpack.c.h.b16 %v399
        %v701 = vunpack.c.l.b16 %v400
        %v702 = vunpack.c.h.b16 %v400
        %v703 = vunpack.c.l.b16 %v401
        %v704 = vunpack.c.h.b16 %v401
        %v705 = vunpack.c.l.b16 %v402
        %v706 = vunpack.c.h.b16 %v402
        %v707 = vunpack.c.l.b16 %v403
        %v708 = vunpack.c.h.b16 %v403
        %v709 = vunpack.c.l.b16 %v404
        %v710 = vunpack.c.h.b16 %v404
        %v711 = vunpack.c.l.b16 %v405
        %v712 = vunpack.c.h.b16 %v405
        %v713 = vunpack.c.l.b16 %v406
        %v714 = vunpack.c.h.b16 %v406
        %v715 = vunpack.c.l.b16 %v407
        %v716 = vunpack.c.h.b16 %v407
        %v717 = vunpack.c.l.b16 %v408
        %v718 = vunpack.c.h.b16 %v408
        %v719 = vunpack.c.l.b16 %v409
        %v720 = vunpack.c.h.b16 %v409
        %v721 = vunpack.c.l.b16 %v410
        %v722 = vunpack.c.h.b16 %v410
        %v723 = vunpack.c.l.b16 %v411
        %v724 = vunpack.c.h.b16 %v411
        %v725 = vunpack.c.l.b16 %v412
        %v726 = vunpack.c.h.b16 %v412
        %v727 = vunpack.c.l.b16 %v413
        %v728 = vunpack.c.h.b16 %v413
        %v729 = vunpack.c.l.b16 %v414
        %v730 = vunpack.c.h.b16 %v414
        %v731 = vunpack.c.l.b16 %v415
        %v732 = vunpack.c.h.b16 %v415
        %v733 = vunpack.c.l.b16 %v416
        %v734 = vunpack.c.h.b16 %v416
        %v735 = vunpack.c.l.b16 %v417
        %v736 = vunpack.c.h.b16 %v417
        %v737 = vunpack.c.l.b16 %v418
        %v738 = vunpack.c.h.b16 %v418
        %v739 = vunpack.c.l.b16 %v419
        %v740 = vunpack.c.h.b16 %v419
        %v741 = vunpack.c.l.b16 %v420
        %v742 = vunpack.c.h.b16 %v420
        %v743 = vunpack.c.l.b16 %v421
        %v744 = vunpack.c.h.b16 %v421
        %v745 = vunpack.c.l.b16 %v422
        %v746 = vunpack.c.h.b16 %v422
        %v747 = vunpack.c.l.b16 %v423
        %v748 = vunpack.c.h.b16 %v423
        %v749 = vunpack.c.l.b16 %v424
        %v750 = vunpack.c.h.b16 %v424
        %v751 = vunpack.c.l.b16 %v425
        %v752 = vunpack.c.h.b16 %v425
        %v753 = vunpack.c.l.b16 %v426
        %v754 = vunpack.c.h.b16 %v426
        %v755 = vunpack.c.l.b16 %v427
        %v756 = vunpack.c.h.b16 %v427
        %v757 = vunpack.c.l.b16 %v428
        %v758 = vunpack.c.h.b16 %v428
        %v759 = vunpack.c.l.b16 %v429
        %v760 = vunpack.c.h.b16 %v429
        %v761 = vunpack.c.l.b16 %v430
        %v762 = vunpack.c.h.b16 %v430
        %v763 = vunpack.c.l.b16 %v431
        %v764 = vunpack.c.h.b16 %v431
        %v765 = vunpack.c.l.b16 %v432
        %v766 = vunpack.c.h.b16 %v432
        %v767 = vunpack.c.l.b16 %v433
        %v768 = vunpack.c.h.b16 %v433
        %v769 = vunpack.c.l.b16 %v434
        %v770 = vunpack.c.h.b16 %v434
        %v771 = vunpack.c.l.b16 %v435
        %v772 = vunpack.c.h.b16 %v435
        %v773 = vunpack.c.l.b16 %v436
        %v774 = vunpack.c.h.b16 %v436
        %v775 = vunpack.c.l.b16 %v437
        %v776 = vunpack.c.h.b16 %v437
        %v777 = vunpack.c.l.b16 %v438
        %v778 = vunpack.c.h.b16 %v438
        %v779 = vunpack.c.l.b16 %v439
        %v780 = vunpack.c.h.b16 %v439
        %v781 = vunpack.c.l.b16 %v440
        %v782 = vunpack.c.h.b16 %v440
        %v783 = vunpack.c.l.b16 %v441
        %v784 = vunpack.c.h.b16 %v441
        %v785 = vunpack.c.l.b16 %v442
        %v786 = vunpack.c.h.b16 %v442
        %v787 = vunpack.c.l.b16 %v443
        %v788 = vunpack.c.h.b16 %v443
        %v789 = vunpack.c.l.b16 %v444
        %v790 = vunpack.c.h.b16 %v444
        %v791 = vunpack.c.l.b16 %v445
        %v792 = vunpack.c.h.b16 %v445
        %v793 = vunpack.c.l.b16 %v446
        %v794 = vunpack.c.h.b16 %v446
        %v795 = vunpack.c.l.b16 %v447
        %v796 = vunpack.c.h.b16 %v447
        %v797 = vunpack.c.l.b16 %v448
        %v798 = vunpack.c.h.b16 %v448
        %v799 = vunpack.c.l.b16 %v449
        %v800 = vunpack.c.h.b16 %v449
        %v801 = vunpack.c.l.b16 %v450
        %v802 = vunpack.c.h.b16 %v450
        %v803 = vpack.c.b16 %v623, %v611
        %v804 = vpack.c.b16 %v624, %v612
        %v805 = vpack.c.b16 %v625, %v613
        %v806 = vpack.c.b16 %v626, %v614
        %v807 = vpack.c.b16 %v627, %v615
        %v808 = vpack.c.b16 %v628, %v616
        %v809 = vpack.c.b16 %v629, %v617
        %v810 = vpack.c.b16 %v630, %v618
        %v811 = vpack.c.b16 %v631, %v619
        %v812 = vpack.c.b16 %v632, %v620
        %v813 = vpack.c.b16 %v633, %v621
        %v814 = vpack.c.b16 %v634, %v622
        %v815 = vpack.c.b16 %v647, %v635
        %v816 = vpack.c.b16 %v648, %v636
        %v817 = vpack.c.b16 %v649, %v637
        %v818 = vpack.c.b16 %v650, %v638
        %v819 = vpack.c.b16 %v651, %v639
        %v820 = vpack.c.b16 %v652, %v640
        %v821 = vpack.c.b16 %v653, %v641
        %v822 = vpack.c.b16 %v654, %v642
        %v823 = vpack.c.b16 %v655, %v643
        %v824 = vpack.c.b16 %v656, %v644
        %v825 = vpack.c.b16 %v657, %v645
        %v826 = vpack.c.b16 %v658, %v646
        %v827 = vpack.c.b16 %v671, %v659
        %v828 = vpack.c.b16 %v672, %v660
        %v829 = vpack.c.b16 %v673, %v661
        %v830 = vpack.c.b16 %v674, %v662
        %v831 = vpack.c.b16 %v675, %v663
        %v832 = vpack.c.b16 %v676, %v664
        %v833 = vpack.c.b16 %v677, %v665
        %v834 = vpack.c.b16 %v678, %v666
        %v835 = vpack.c.b16 %v679, %v667
        %v836 = vpack.c.b16 %v680, %v668
        %v837 = vpack.c.b16 %v681, %v669
        %v838 = vpack.c.b16 %v682, %v670
        %v839 = vpack.c.b16 %v695, %v683
        %v840 = vpack.c.b16 %v696, %v684
        %v841 = vpack.c.b16 %v697, %v685
        %v842 = vpack.c.b16 %v698, %v686
        %v843 = vpack.c.b16 %v699, %v687
        %v844 = vpack.c.b16 %v700, %v688
        %v845 = vpack.c.b16 %v701, %v689
        %v846 = vpack.c.b16 %v702, %v690
        %v847 = vpack.c.b16 %v703, %v691
        %v848 = vpack.c.b16 %v704, %v692
        %v849 = vpack.c.b16 %v705, %v693
        %v850 = vpack.c.b16 %v706, %v694
        %v851 = vpack.c.b16 %v719, %v707
        %v852 = vpack.c.b16 %v720, %v708
        %v853 = vpack.c.b16 %v721, %v709
        %v854 = vpack.c.b16 %v722, %v710
        %v855 = vpack.c.b16 %v723, %v711
        %v856 = vpack.c.b16 %v724, %v712
        %v857 = vpack.c.b16 %v725, %v713
        %v858 = vpack.c.b16 %v726, %v714
        %v859 = vpack.c.b16 %v727, %v715
        %v860 = vpack.c.b16 %v728, %v716
        %v861 = vpack.c.b16 %v729, %v717
        %v862 = vpack.c.b16 %v730, %v718
        %v863 = vpack.c.b16 %v743, %v731
        %v864 = vpack.c.b16 %v744, %v732
        %v865 = vpack.c.b16 %v745, %v733
        %v866 = vpack.c.b16 %v746, %v734
        %v867 = vpack.c.b16 %v747, %v735
        %v868 = vpack.c.b16 %v748, %v736
        %v869 = vpack.c.b16 %v749, %v737
        %v870 = vpack.c.b16 %v750, %v738
        %v871 = vpack.c.b16 %v751, %v739
        %v872 = vpack.c.b16 %v752, %v740
        %v873 = vpack.c.b16 %v753, %v741
        %v874 = vpack.c.b16 %v754, %v742
        %v875 = vpack.c.b16 %v767, %v755
        %v876 = vpack.c.b16 %v768, %v756
        %v877 = vpack.c.b16 %v769, %v757
        %v878 = vpack.c.b16 %v770, %v758
        %v879 = vpack.c.b16 %v771, %v759
        %v880 = vpack.c.b16 %v772, %v760
        %v881 = vpack.c.b16 %v773, %v761
        %v882 = vpack.c.b16 %v774, %v762
        %v883 = vpack.c.b16 %v775, %v763
        %v884 = vpack.c.b16 %v776, %v764
        %v885 = vpack.c.b16 %v777, %v765
        %v886 = vpack.c.b16 %v778, %v766
        %v887 = vpack.c.b16 %v791, %v779
        %v888 = vpack.c.b16 %v792, %v780
        %v889 = vpack.c.b16 %v793, %v781
        %v890 = vpack.c.b16 %v794, %v782
        %v891 = vpack.c.b16 %v795, %v783
        %v892 = vpack.c.b16 %v796, %v784
        %v893 = vpack.c.b16 %v797, %v785
        %v894 = vpack.c.b16 %v798, %v786
        %v895 = vpack.c.b16 %v799, %v787
        %v896 = vpack.c.b16 %v800, %v788
        %v897 = vpack.c.b16 %v801, %v789
        %v898 = vpack.c.b16 %v802, %v790
        %995 = vmatprep.subr.bf16.mxu0 %v888
        %996 = vmatpush1.bf16.msra.mxu0 %v887
        %997 = vmatprep.subr.bf16.mxu0 %v876
        %998 = vmatpush1.bf16.msra.mxu0 %v875
        %999 = vmatprep.subr.bf16.mxu0 %v864
        %1000 = vmatpush1.bf16.msra.mxu0 %v863
        %1001 = vmatprep.subr.bf16.mxu0 %v852
        %1002 = vmatpush1.bf16.msra.mxu0 %v851
        %1003 = vmatprep.subr.bf16.mxu0 %v840
        %1004 = vmatpush1.bf16.msra.mxu0 %v839
        %1005 = vmatprep.subr.bf16.mxu0 %v828
        %1006 = vmatpush1.bf16.msra.mxu0 %v827
        %1007 = vmatprep.subr.bf16.mxu0 %v816
        %1008 = vmatpush1.bf16.msra.mxu0 %v815
        %1009 = vmatprep.subr.bf16.mxu0 %v804
        %1010 = vmatpush1.bf16.msra.mxu0 %v803
        %1011 = vmatprep.subr.bf16.mxu0 0
        %1012 = vmatpush2.bf16.msra.mxu0 0
        %1013 = vmatprep.subr.bf16.mxu0 0
        %1014 = vmatpush2.bf16.msra.mxu0 0
        %1015 = vmatprep.subr.bf16.mxu0 0
        %1016 = vmatpush2.bf16.msra.mxu0 0
        %1017 = vmatprep.subr.bf16.mxu0 0
        %1018 = vmatpush2.bf16.msra.mxu0 0
        %1019 = vmatprep.subr.bf16.mxu0 0
        %1020 = vmatpush2.bf16.msra.mxu0 0
        %1021 = vmatprep.subr.bf16.mxu0 0
        %1022 = vmatpush2.bf16.msra.mxu0 0
        %1023 = vmatprep.subr.bf16.mxu0 0
        %1024 = vmatpush2.bf16.msra.mxu0 0
        %1025 = vmatprep.subr.bf16.mxu0 0
        %1026 = vmatpush2.bf16.msra.mxu0 0
        %1027 = vmatprep.mubr.bf16.mxu0 0
        %1028 = vmatmul.mubr.bf16.gmra.mxu0 %v351
        %v1029 = vpop.f32.mrf.mxu0
        %v1030 = vadd.f32 %v458, %v1029
        %v1031 = vpop.f32.mrf.mxu0
        %v1032 = vadd.f32 %v462, %v1031
        %v1033 = vpop.f32.mrf.mxu0
        %v1034 = vadd.f32 %v458, %v1033
        %v1035 = vpop.f32.mrf.mxu0
        %v1036 = vadd.f32 %v462, %v1035
        %1037 = vmatprep.mubr.bf16.mxu0 0
        %1038 = vmatmul.mubr.bf16.gmra.mxu0 %v352
        %v1039 = vpop.f32.mrf.mxu0
        %v1040 = vadd.f32 %v458, %v1039
        %v1041 = vpop.f32.mrf.mxu0
        %v1042 = vadd.f32 %v462, %v1041
        %v1043 = vpop.f32.mrf.mxu0
        %v1044 = vadd.f32 %v458, %v1043
        %v1045 = vpop.f32.mrf.mxu0
        %v1046 = vadd.f32 %v462, %v1045
        %1047 = vmatprep.mubr.bf16.mxu0 0
        %1048 = vmatmul.mubr.bf16.gmra.mxu0 %v353
        %v1049 = vpop.f32.mrf.mxu0
        %v1050 = vadd.f32 %v458, %v1049
        %v1051 = vpop.f32.mrf.mxu0
        %v1052 = vadd.f32 %v462, %v1051
        %v1053 = vpop.f32.mrf.mxu0
        %v1054 = vadd.f32 %v458, %v1053
        %v1055 = vpop.f32.mrf.mxu0
        %v1056 = vadd.f32 %v462, %v1055
        %1057 = vmatprep.mubr.bf16.mxu0 0
        %1058 = vmatmul.mubr.bf16.gmra.mxu0 %v354
        %v1059 = vpop.f32.mrf.mxu0
        %v1060 = vadd.f32 %v458, %v1059
        %v1061 = vpop.f32.mrf.mxu0
        %v1062 = vadd.f32 %v462, %v1061
        %v1063 = vpop.f32.mrf.mxu0
        %v1064 = vadd.f32 %v458, %v1063
        %v1065 = vpop.f32.mrf.mxu0
        %v1066 = vadd.f32 %v462, %v1065
        %1067 = vdwg.mxu0
        %1068 = vmatprep.subr.bf16.mxu0 %v890
        %1069 = vmatpush1.bf16.msra.mxu0 %v889
        %1070 = vmatprep.subr.bf16.mxu0 %v878
        %1071 = vmatpush1.bf16.msra.mxu0 %v877
        %1072 = vmatprep.subr.bf16.mxu0 %v866
        %1073 = vmatpush1.bf16.msra.mxu0 %v865
        %1074 = vmatprep.subr.bf16.mxu0 %v854
        %1075 = vmatpush1.bf16.msra.mxu0 %v853
        %1076 = vmatprep.subr.bf16.mxu0 %v842
        %1077 = vmatpush1.bf16.msra.mxu0 %v841
        %1078 = vmatprep.subr.bf16.mxu0 %v830
        %1079 = vmatpush1.bf16.msra.mxu0 %v829
        %1080 = vmatprep.subr.bf16.mxu0 %v818
        %1081 = vmatpush1.bf16.msra.mxu0 %v817
        %1082 = vmatprep.subr.bf16.mxu0 %v806
        %1083 = vmatpush1.bf16.msra.mxu0 %v805
        %1084 = vmatprep.subr.bf16.mxu0 0
        %1085 = vmatpush2.bf16.msra.mxu0 0
        %1086 = vmatprep.subr.bf16.mxu0 0
        %1087 = vmatpush2.bf16.msra.mxu0 0
        %1088 = vmatprep.subr.bf16.mxu0 0
        %1089 = vmatpush2.bf16.msra.mxu0 0
        %1090 = vmatprep.subr.bf16.mxu0 0
        %1091 = vmatpush2.bf16.msra.mxu0 0
        %1092 = vmatprep.subr.bf16.mxu0 0
        %1093 = vmatpush2.bf16.msra.mxu0 0
        %1094 = vmatprep.subr.bf16.mxu0 0
        %1095 = vmatpush2.bf16.msra.mxu0 0
        %1096 = vmatprep.subr.bf16.mxu0 0
        %1097 = vmatpush2.bf16.msra.mxu0 0
        %1098 = vmatprep.subr.bf16.mxu0 0
        %1099 = vmatpush2.bf16.msra.mxu0 0
        %1100 = vmatprep.mubr.bf16.mxu0 0
        %1101 = vmatmul.mubr.bf16.gmra.mxu0 %v351
        %v1102 = vpop.f32.mrf.mxu0
        %v1103 = vadd.f32 %v466, %v1102
        %v1104 = vpop.f32.mrf.mxu0
        %v1105 = vadd.f32 %v470, %v1104
        %v1106 = vpop.f32.mrf.mxu0
        %v1107 = vadd.f32 %v466, %v1106
        %v1108 = vpop.f32.mrf.mxu0
        %v1109 = vadd.f32 %v470, %v1108
        %1110 = vmatprep.mubr.bf16.mxu0 0
        %1111 = vmatmul.mubr.bf16.gmra.mxu0 %v352
        %v1112 = vpop.f32.mrf.mxu0
        %v1113 = vadd.f32 %v466, %v1112
        %v1114 = vpop.f32.mrf.mxu0
        %v1115 = vadd.f32 %v470, %v1114
        %v1116 = vpop.f32.mrf.mxu0
        %v1117 = vadd.f32 %v466, %v1116
        %v1118 = vpop.f32.mrf.mxu0
        %v1119 = vadd.f32 %v470, %v1118
        %1120 = vmatprep.mubr.bf16.mxu0 0
        %1121 = vmatmul.mubr.bf16.gmra.mxu0 %v353
        %v1122 = vpop.f32.mrf.mxu0
        %v1123 = vadd.f32 %v466, %v1122
        %v1124 = vpop.f32.mrf.mxu0
        %v1125 = vadd.f32 %v470, %v1124
        %v1126 = vpop.f32.mrf.mxu0
        %v1127 = vadd.f32 %v466, %v1126
        %v1128 = vpop.f32.mrf.mxu0
        %v1129 = vadd.f32 %v470, %v1128
        %1130 = vmatprep.mubr.bf16.mxu0 0
        %1131 = vmatmul.mubr.bf16.gmra.mxu0 %v354
        %v1132 = vpop.f32.mrf.mxu0
        %v1133 = vadd.f32 %v466, %v1132
        %v1134 = vpop.f32.mrf.mxu0
        %v1135 = vadd.f32 %v470, %v1134
        %v1136 = vpop.f32.mrf.mxu0
        %v1137 = vadd.f32 %v466, %v1136
        %v1138 = vpop.f32.mrf.mxu0
        %v1139 = vadd.f32 %v470, %v1138
        %1140 = vdwg.mxu0
        %1141 = vmatprep.subr.bf16.mxu0 %v892
        %1142 = vmatpush1.bf16.msra.mxu0 %v891
        %1143 = vmatprep.subr.bf16.mxu0 %v880
        %1144 = vmatpush1.bf16.msra.mxu0 %v879
        %1145 = vmatprep.subr.bf16.mxu0 %v868
        %1146 = vmatpush1.bf16.msra.mxu0 %v867
        %1147 = vmatprep.subr.bf16.mxu0 %v856
        %1148 = vmatpush1.bf16.msra.mxu0 %v855
        %1149 = vmatprep.subr.bf16.mxu0 %v844
        %1150 = vmatpush1.bf16.msra.mxu0 %v843
        %1151 = vmatprep.subr.bf16.mxu0 %v832
        %1152 = vmatpush1.bf16.msra.mxu0 %v831
        %1153 = vmatprep.subr.bf16.mxu0 %v820
        %1154 = vmatpush1.bf16.msra.mxu0 %v819
        %1155 = vmatprep.subr.bf16.mxu0 %v808
        %1156 = vmatpush1.bf16.msra.mxu0 %v807
        %1157 = vmatprep.subr.bf16.mxu0 0
        %1158 = vmatpush2.bf16.msra.mxu0 0
        %1159 = vmatprep.subr.bf16.mxu0 0
        %1160 = vmatpush2.bf16.msra.mxu0 0
        %1161 = vmatprep.subr.bf16.mxu0 0
        %1162 = vmatpush2.bf16.msra.mxu0 0
        %1163 = vmatprep.subr.bf16.mxu0 0
        %1164 = vmatpush2.bf16.msra.mxu0 0
        %1165 = vmatprep.subr.bf16.mxu0 0
        %1166 = vmatpush2.bf16.msra.mxu0 0
        %1167 = vmatprep.subr.bf16.mxu0 0
        %1168 = vmatpush2.bf16.msra.mxu0 0
        %1169 = vmatprep.subr.bf16.mxu0 0
        %1170 = vmatpush2.bf16.msra.mxu0 0
        %1171 = vmatprep.subr.bf16.mxu0 0
        %1172 = vmatpush2.bf16.msra.mxu0 0
        %1173 = vmatprep.mubr.bf16.mxu0 0
        %1174 = vmatmul.mubr.bf16.gmra.mxu0 %v351
        %v1175 = vpop.f32.mrf.mxu0
        %v1176 = vadd.f32 %v474, %v1175
        %v1177 = vpop.f32.mrf.mxu0
        %v1178 = vadd.f32 %v478, %v1177
        %v1179 = vpop.f32.mrf.mxu0
        %v1180 = vadd.f32 %v474, %v1179
        %v1181 = vpop.f32.mrf.mxu0
        %v1182 = vadd.f32 %v478, %v1181
        %1183 = vmatprep.mubr.bf16.mxu0 0
        %1184 = vmatmul.mubr.bf16.gmra.mxu0 %v352
        %v1185 = vpop.f32.mrf.mxu0
        %v1186 = vadd.f32 %v474, %v1185
        %v1187 = vpop.f32.mrf.mxu0
        %v1188 = vadd.f32 %v478, %v1187
        %v1189 = vpop.f32.mrf.mxu0
        %v1190 = vadd.f32 %v474, %v1189
        %v1191 = vpop.f32.mrf.mxu0
        %v1192 = vadd.f32 %v478, %v1191
        %1193 = vmatprep.mubr.bf16.mxu0 0
        %1194 = vmatmul.mubr.bf16.gmra.mxu0 %v353
        %v1195 = vpop.f32.mrf.mxu0
        %v1196 = vadd.f32 %v474, %v1195
        %v1197 = vpop.f32.mrf.mxu0
        %v1198 = vadd.f32 %v478, %v1197
        %v1199 = vpop.f32.mrf.mxu0
        %v1200 = vadd.f32 %v474, %v1199
        %v1201 = vpop.f32.mrf.mxu0
        %v1202 = vadd.f32 %v478, %v1201
        %1203 = vmatprep.mubr.bf16.mxu0 0
        %1204 = vmatmul.mubr.bf16.gmra.mxu0 %v354
        %v1205 = vpop.f32.mrf.mxu0
        %v1206 = vadd.f32 %v474, %v1205
        %v1207 = vpop.f32.mrf.mxu0
        %v1208 = vadd.f32 %v478, %v1207
        %v1209 = vpop.f32.mrf.mxu0
        %v1210 = vadd.f32 %v474, %v1209
        %v1211 = vpop.f32.mrf.mxu0
        %v1212 = vadd.f32 %v478, %v1211
        %1213 = vdwg.mxu0
        %1214 = vmatprep.subr.bf16.mxu0 %v894
        %1215 = vmatpush1.bf16.msra.mxu0 %v893
        %1216 = vmatprep.subr.bf16.mxu0 %v882
        %1217 = vmatpush1.bf16.msra.mxu0 %v881
        %1218 = vmatprep.subr.bf16.mxu0 %v870
        %1219 = vmatpush1.bf16.msra.mxu0 %v869
        %1220 = vmatprep.subr.bf16.mxu0 %v858
        %1221 = vmatpush1.bf16.msra.mxu0 %v857
        %1222 = vmatprep.subr.bf16.mxu0 %v846
        %1223 = vmatpush1.bf16.msra.mxu0 %v845
        %1224 = vmatprep.subr.bf16.mxu0 %v834
        %1225 = vmatpush1.bf16.msra.mxu0 %v833
        %1226 = vmatprep.subr.bf16.mxu0 %v822
        %1227 = vmatpush1.bf16.msra.mxu0 %v821
        %1228 = vmatprep.subr.bf16.mxu0 %v810
        %1229 = vmatpush1.bf16.msra.mxu0 %v809
        %1230 = vmatprep.subr.bf16.mxu0 0
        %1231 = vmatpush2.bf16.msra.mxu0 0
        %1232 = vmatprep.subr.bf16.mxu0 0
        %1233 = vmatpush2.bf16.msra.mxu0 0
        %1234 = vmatprep.subr.bf16.mxu0 0
        %1235 = vmatpush2.bf16.msra.mxu0 0
        %1236 = vmatprep.subr.bf16.mxu0 0
        %1237 = vmatpush2.bf16.msra.mxu0 0
        %1238 = vmatprep.subr.bf16.mxu0 0
        %1239 = vmatpush2.bf16.msra.mxu0 0
        %1240 = vmatprep.subr.bf16.mxu0 0
        %1241 = vmatpush2.bf16.msra.mxu0 0
        %1242 = vmatprep.subr.bf16.mxu0 0
        %1243 = vmatpush2.bf16.msra.mxu0 0
        %1244 = vmatprep.subr.bf16.mxu0 0
        %1245 = vmatpush2.bf16.msra.mxu0 0
        %1246 = vmatprep.mubr.bf16.mxu0 0
        %1247 = vmatmul.mubr.bf16.gmra.mxu0 %v351
        %v1248 = vpop.f32.mrf.mxu0
        %v1249 = vadd.f32 %v482, %v1248
        %v1250 = vpop.f32.mrf.mxu0
        %v1251 = vadd.f32 %v486, %v1250
        %v1252 = vpop.f32.mrf.mxu0
        %v1253 = vadd.f32 %v482, %v1252
        %v1254 = vpop.f32.mrf.mxu0
        %v1255 = vadd.f32 %v486, %v1254
        %1256 = vmatprep.mubr.bf16.mxu0 0
        %1257 = vmatmul.mubr.bf16.gmra.mxu0 %v352
        %v1258 = vpop.f32.mrf.mxu0
        %v1259 = vadd.f32 %v482, %v1258
        %v1260 = vpop.f32.mrf.mxu0
        %v1261 = vadd.f32 %v486, %v1260
        %v1262 = vpop.f32.mrf.mxu0
        %v1263 = vadd.f32 %v482, %v1262
        %v1264 = vpop.f32.mrf.mxu0
        %v1265 = vadd.f32 %v486, %v1264
        %1266 = vmatprep.mubr.bf16.mxu0 0
        %1267 = vmatmul.mubr.bf16.gmra.mxu0 %v353
        %v1268 = vpop.f32.mrf.mxu0
        %v1269 = vadd.f32 %v482, %v1268
        %v1270 = vpop.f32.mrf.mxu0
        %v1271 = vadd.f32 %v486, %v1270
        %v1272 = vpop.f32.mrf.mxu0
        %v1273 = vadd.f32 %v482, %v1272
        %v1274 = vpop.f32.mrf.mxu0
        %v1275 = vadd.f32 %v486, %v1274
        %1276 = vmatprep.mubr.bf16.mxu0 0
        %1277 = vmatmul.mubr.bf16.gmra.mxu0 %v354
        %v1278 = vpop.f32.mrf.mxu0
        %v1279 = vadd.f32 %v482, %v1278
        %v1280 = vpop.f32.mrf.mxu0
        %v1281 = vadd.f32 %v486, %v1280
        %v1282 = vpop.f32.mrf.mxu0
        %v1283 = vadd.f32 %v482, %v1282
        %v1284 = vpop.f32.mrf.mxu0
        %v1285 = vadd.f32 %v486, %v1284
        %1286 = vdwg.mxu0
        %1287 = vmatprep.subr.bf16.mxu0 %v896
        %1288 = vmatpush1.bf16.msra.mxu0 %v895
        %1289 = vmatprep.subr.bf16.mxu0 %v884
        %1290 = vmatpush1.bf16.msra.mxu0 %v883
        %1291 = vmatprep.subr.bf16.mxu0 %v872
        %1292 = vmatpush1.bf16.msra.mxu0 %v871
        %1293 = vmatprep.subr.bf16.mxu0 %v860
        %1294 = vmatpush1.bf16.msra.mxu0 %v859
        %1295 = vmatprep.subr.bf16.mxu0 %v848
        %1296 = vmatpush1.bf16.msra.mxu0 %v847
        %1297 = vmatprep.subr.bf16.mxu0 %v836
        %1298 = vmatpush1.bf16.msra.mxu0 %v835
        %1299 = vmatprep.subr.bf16.mxu0 %v824
        %1300 = vmatpush1.bf16.msra.mxu0 %v823
        %1301 = vmatprep.subr.bf16.mxu0 %v812
        %1302 = vmatpush1.bf16.msra.mxu0 %v811
        %1303 = vmatprep.subr.bf16.mxu0 0
        %1304 = vmatpush2.bf16.msra.mxu0 0
        %1305 = vmatprep.subr.bf16.mxu0 0
        %1306 = vmatpush2.bf16.msra.mxu0 0
        %1307 = vmatprep.subr.bf16.mxu0 0
        %1308 = vmatpush2.bf16.msra.mxu0 0
        %1309 = vmatprep.subr.bf16.mxu0 0
        %1310 = vmatpush2.bf16.msra.mxu0 0
        %1311 = vmatprep.subr.bf16.mxu0 0
        %1312 = vmatpush2.bf16.msra.mxu0 0
        %1313 = vmatprep.subr.bf16.mxu0 0
        %1314 = vmatpush2.bf16.msra.mxu0 0
        %1315 = vmatprep.subr.bf16.mxu0 0
        %1316 = vmatpush2.bf16.msra.mxu0 0
        %1317 = vmatprep.subr.bf16.mxu0 0
        %1318 = vmatpush2.bf16.msra.mxu0 0
        %1319 = vmatprep.mubr.bf16.mxu0 0
        %1320 = vmatmul.mubr.bf16.gmra.mxu0 %v351
        %v1321 = vpop.f32.mrf.mxu0
        %v1322 = vadd.f32 %v490, %v1321
        %v1323 = vpop.f32.mrf.mxu0
        %v1324 = vadd.f32 %v494, %v1323
        %v1325 = vpop.f32.mrf.mxu0
        %v1326 = vadd.f32 %v490, %v1325
        %v1327 = vpop.f32.mrf.mxu0
        %v1328 = vadd.f32 %v494, %v1327
        %1329 = vmatprep.mubr.bf16.mxu0 0
        %1330 = vmatmul.mubr.bf16.gmra.mxu0 %v352
        %v1331 = vpop.f32.mrf.mxu0
        %v1332 = vadd.f32 %v490, %v1331
        %v1333 = vpop.f32.mrf.mxu0
        %v1334 = vadd.f32 %v494, %v1333
        %v1335 = vpop.f32.mrf.mxu0
        %v1336 = vadd.f32 %v490, %v1335
        %v1337 = vpop.f32.mrf.mxu0
        %v1338 = vadd.f32 %v494, %v1337
        %1339 = vmatprep.mubr.bf16.mxu0 0
        %1340 = vmatmul.mubr.bf16.gmra.mxu0 %v353
        %v1341 = vpop.f32.mrf.mxu0
        %v1342 = vadd.f32 %v490, %v1341
        %v1343 = vpop.f32.mrf.mxu0
        %v1344 = vadd.f32 %v494, %v1343
        %v1345 = vpop.f32.mrf.mxu0
        %v1346 = vadd.f32 %v490, %v1345
        %v1347 = vpop.f32.mrf.mxu0
        %v1348 = vadd.f32 %v494, %v1347
        %1349 = vmatprep.mubr.bf16.mxu0 0
        %1350 = vmatmul.mubr.bf16.gmra.mxu0 %v354
        %v1351 = vpop.f32.mrf.mxu0
        %v1352 = vadd.f32 %v490, %v1351
        %v1353 = vpop.f32.mrf.mxu0
        %v1354 = vadd.f32 %v494, %v1353
        %v1355 = vpop.f32.mrf.mxu0
        %v1356 = vadd.f32 %v490, %v1355
        %v1357 = vpop.f32.mrf.mxu0
        %v1358 = vadd.f32 %v494, %v1357
        %1359 = vdwg.mxu0
        %1360 = vmatprep.subr.bf16.mxu0 %v898
        %1361 = vmatpush1.bf16.msra.mxu0 %v897
        %1362 = vmatprep.subr.bf16.mxu0 %v886
        %1363 = vmatpush1.bf16.msra.mxu0 %v885
        %1364 = vmatprep.subr.bf16.mxu0 %v874
        %1365 = vmatpush1.bf16.msra.mxu0 %v873
        %1366 = vmatprep.subr.bf16.mxu0 %v862
        %1367 = vmatpush1.bf16.msra.mxu0 %v861
        %1368 = vmatprep.subr.bf16.mxu0 %v850
        %1369 = vmatpush1.bf16.msra.mxu0 %v849
        %1370 = vmatprep.subr.bf16.mxu0 %v838
        %1371 = vmatpush1.bf16.msra.mxu0 %v837
        %1372 = vmatprep.subr.bf16.mxu0 %v826
        %1373 = vmatpush1.bf16.msra.mxu0 %v825
        %1374 = vmatprep.subr.bf16.mxu0 %v814
        %1375 = vmatpush1.bf16.msra.mxu0 %v813
        %1376 = vmatprep.subr.bf16.mxu0 0
        %1377 = vmatpush2.bf16.msra.mxu0 0
        %1378 = vmatprep.subr.bf16.mxu0 0
        %1379 = vmatpush2.bf16.msra.mxu0 0
        %1380 = vmatprep.subr.bf16.mxu0 0
        %1381 = vmatpush2.bf16.msra.mxu0 0
        %1382 = vmatprep.subr.bf16.mxu0 0
        %1383 = vmatpush2.bf16.msra.mxu0 0
        %1384 = vmatprep.subr.bf16.mxu0 0
        %1385 = vmatpush2.bf16.msra.mxu0 0
        %1386 = vmatprep.subr.bf16.mxu0 0
        %1387 = vmatpush2.bf16.msra.mxu0 0
        %1388 = vmatprep.subr.bf16.mxu0 0
        %1389 = vmatpush2.bf16.msra.mxu0 0
        %1390 = vmatprep.subr.bf16.mxu0 0
        %1391 = vmatpush2.bf16.msra.mxu0 0
        %1392 = vmatprep.mubr.bf16.mxu0 0
        %1393 = vmatmul.mubr.bf16.gmra.mxu0 %v351
        %v1394 = vpop.f32.mrf.mxu0
        %v1395 = vadd.f32 %v498, %v1394
        %v1396 = vpop.f32.mrf.mxu0
        %v1397 = vadd.f32 %v502, %v1396
        %v1398 = vpop.f32.mrf.mxu0
        %v1399 = vadd.f32 %v498, %v1398
        %v1400 = vpop.f32.mrf.mxu0
        %v1401 = vadd.f32 %v502, %v1400
        %1402 = vmatprep.mubr.bf16.mxu0 0
        %1403 = vmatmul.mubr.bf16.gmra.mxu0 %v352
        %v1404 = vpop.f32.mrf.mxu0
        %v1405 = vadd.f32 %v498, %v1404
        %v1406 = vpop.f32.mrf.mxu0
        %v1407 = vadd.f32 %v502, %v1406
        %v1408 = vpop.f32.mrf.mxu0
        %v1409 = vadd.f32 %v498, %v1408
        %v1410 = vpop.f32.mrf.mxu0
        %v1411 = vadd.f32 %v502, %v1410
        %1412 = vmatprep.mubr.bf16.mxu0 0
        %1413 = vmatmul.mubr.bf16.gmra.mxu0 %v353
        %v1414 = vpop.f32.mrf.mxu0
        %v1415 = vadd.f32 %v498, %v1414
        %v1416 = vpop.f32.mrf.mxu0
        %v1417 = vadd.f32 %v502, %v1416
        %v1418 = vpop.f32.mrf.mxu0
        %v1419 = vadd.f32 %v498, %v1418
        %v1420 = vpop.f32.mrf.mxu0
        %v1421 = vadd.f32 %v502, %v1420
        %1422 = vmatprep.mubr.bf16.mxu0 0
        %1423 = vmatmul.mubr.bf16.gmra.mxu0 %v354
        %v1424 = vpop.f32.mrf.mxu0
        %v1425 = vadd.f32 %v498, %v1424
        %v1426 = vpop.f32.mrf.mxu0
        %v1427 = vadd.f32 %v502, %v1426
        %v1428 = vpop.f32.mrf.mxu0
        %v1429 = vadd.f32 %v498, %v1428
        %v1430 = vpop.f32.mrf.mxu0
        %v1431 = vadd.f32 %v502, %v1430
        %1432 = vdwg.mxu0
        %v1433 = vld [vmem:[#allocation8] sm:$0xf]
        %v1434 = vld [vmem:[#allocation8 + $0x4] sm:$0xf]
        %v1435 = vld [vmem:[#allocation8 + $0x8] sm:$0xf]
        %v1436 = vld [vmem:[#allocation8 + $0xc] sm:$0xf]
        %v1437 = vld [vmem:[#allocation8 + $0x10] sm:$0xf]
        %v1438 = vld [vmem:[#allocation8 + $0x14] sm:$0xf]
        %v1439 = vld [vmem:[#allocation8 + $0x18] sm:$0xf]
        %v1440 = vld [vmem:[#allocation8 + $0x1c] sm:$0xf]
        %v1441 = vld [vmem:[#allocation8 + $0x20] sm:$0xf]
        %v1442 = vld [vmem:[#allocation8 + $0x24] sm:$0xf]
        %v1443 = vld [vmem:[#allocation8 + $0x28] sm:$0xf]
        %v1444 = vld [vmem:[#allocation8 + $0x2c] sm:$0xf]
        %v1445 = vld [vmem:[#allocation8 + $0x30] sm:$0xf]
        %v1446 = vld [vmem:[#allocation8 + $0x34] sm:$0xf]
        %v1447 = vld [vmem:[#allocation8 + $0x38] sm:$0xf]
        %v1448 = vld [vmem:[#allocation8 + $0x3c] sm:$0xf]
        %v1449 = vld [vmem:[#allocation8 + $0x40] sm:$0xf]
        %v1450 = vld [vmem:[#allocation8 + $0x44] sm:$0xf]
        %v1451 = vld [vmem:[#allocation8 + $0x48] sm:$0xf]
        %v1452 = vld [vmem:[#allocation8 + $0x4c] sm:$0xf]
        %v1453 = vld [vmem:[#allocation8 + $0x50] sm:$0xf]
        %v1454 = vld [vmem:[#allocation8 + $0x54] sm:$0xf]
        %v1455 = vld [vmem:[#allocation8 + $0x58] sm:$0xf]
        %v1456 = vld [vmem:[#allocation8 + $0x5c] sm:$0xf]
        %v1457 = vld [vmem:[#allocation8 + $0x60] sm:$0xf]
        %v1458 = vld [vmem:[#allocation8 + $0x64] sm:$0xf]
        %v1459 = vld [vmem:[#allocation8 + $0x68] sm:$0xf]
        %v1460 = vld [vmem:[#allocation8 + $0x6c] sm:$0xf]
        %v1461 = vld [vmem:[#allocation8 + $0x70] sm:$0xf]
        %v1462 = vld [vmem:[#allocation8 + $0x74] sm:$0xf]
        %v1463 = vld [vmem:[#allocation8 + $0x78] sm:$0xf]
        %v1464 = vld [vmem:[#allocation8 + $0x7c] sm:$0xf]
        %v1465 = vld [vmem:[#allocation8 + $0x80] sm:$0xf]
        %v1466 = vld [vmem:[#allocation8 + $0x84] sm:$0xf]
        %v1467 = vld [vmem:[#allocation8 + $0x88] sm:$0xf]
        %v1468 = vld [vmem:[#allocation8 + $0x8c] sm:$0xf]
        %v1469 = vld [vmem:[#allocation8 + $0x90] sm:$0xf]
        %v1470 = vld [vmem:[#allocation8 + $0x94] sm:$0xf]
        %v1471 = vld [vmem:[#allocation8 + $0x98] sm:$0xf]
        %v1472 = vld [vmem:[#allocation8 + $0x9c] sm:$0xf]
        %v1473 = vld [vmem:[#allocation8 + $0xa0] sm:$0xf]
        %v1474 = vld [vmem:[#allocation8 + $0xa4] sm:$0xf]
        %v1475 = vld [vmem:[#allocation8 + $0xa8] sm:$0xf]
        %v1476 = vld [vmem:[#allocation8 + $0xac] sm:$0xf]
        %v1477 = vld [vmem:[#allocation8 + $0xb0] sm:$0xf]
        %v1478 = vld [vmem:[#allocation8 + $0xb4] sm:$0xf]
        %v1479 = vld [vmem:[#allocation8 + $0xb8] sm:$0xf]
        %v1480 = vld [vmem:[#allocation8 + $0xbc] sm:$0xf]
        %v1481 = vld [vmem:[#allocation8 + $0xc0] sm:$0xf]
        %v1482 = vld [vmem:[#allocation8 + $0xc4] sm:$0xf]
        %v1483 = vld [vmem:[#allocation8 + $0xc8] sm:$0xf]
        %v1484 = vld [vmem:[#allocation8 + $0xcc] sm:$0xf]
        %v1485 = vld [vmem:[#allocation8 + $0xd0] sm:$0xf]
        %v1486 = vld [vmem:[#allocation8 + $0xd4] sm:$0xf]
        %v1487 = vld [vmem:[#allocation8 + $0xd8] sm:$0xf]
        %v1488 = vld [vmem:[#allocation8 + $0xdc] sm:$0xf]
        %v1489 = vld [vmem:[#allocation8 + $0xe0] sm:$0xf]
        %v1490 = vld [vmem:[#allocation8 + $0xe4] sm:$0xf]
        %v1491 = vld [vmem:[#allocation8 + $0xe8] sm:$0xf]
        %v1492 = vld [vmem:[#allocation8 + $0xec] sm:$0xf]
        %v1493 = vld [vmem:[#allocation8 + $0xf0] sm:$0xf]
        %v1494 = vld [vmem:[#allocation8 + $0xf4] sm:$0xf]
        %v1495 = vld [vmem:[#allocation8 + $0xf8] sm:$0xf]
        %v1496 = vld [vmem:[#allocation8 + $0xfc] sm:$0xf]
        %v1497 = vld [vmem:[%s4] sm:$0x1]
        %v1499 = vlaneseq
        %v1500 = vshrl.u32 %v1499, 7
        %v1501 = vsub.s32 0, %v1500
        %v1502 = vrot.slane %v1497, %v1501
        %v1504 = vpack.c.bf16 %v1034, %v1030
        %v1505 = vpack.c.bf16 %v1044, %v1040
        %v1506 = vpack.c.bf16 %v1054, %v1050
        %v1507 = vpack.c.bf16 %v1064, %v1060
        %v1508 = vpack.c.bf16 %v1180, %v1176
        %v1509 = vpack.c.bf16 %v1190, %v1186
        %v1510 = vpack.c.bf16 %v1200, %v1196
        %v1511 = vpack.c.bf16 %v1210, %v1206
        %v1512 = vpack.c.bf16 %v1326, %v1322
        %v1513 = vpack.c.bf16 %v1336, %v1332
        %v1514 = vpack.c.bf16 %v1346, %v1342
        %v1515 = vpack.c.bf16 %v1356, %v1352
        %1516 = vmatprep.subr.bf16.mxu0 0
        %1517 = vmatpush1.bf16.xpose.msra.mxu0 0
        %1518 = vmatprep.subr.bf16.mxu0 0
        %1519 = vmatpush1.bf16.xpose.msra.mxu0 0
        %1520 = vmatprep.subr.bf16.mxu0 0
        %1521 = vmatpush1.bf16.xpose.msra.mxu0 0
        %1522 = vmatprep.subr.bf16.mxu0 0
        %1523 = vmatpush1.bf16.xpose.msra.mxu0 0
        %1524 = vmatprep.subr.bf16.mxu0 0
        %1525 = vmatpush1.bf16.xpose.msra.mxu0 0
        %1526 = vmatprep.subr.bf16.mxu0 0
        %1527 = vmatpush1.bf16.xpose.msra.mxu0 0
        %1528 = vmatprep.subr.bf16.mxu0 0
        %1529 = vmatpush1.bf16.xpose.msra.mxu0 0
        %1530 = vmatprep.subr.bf16.mxu0 0
        %1531 = vmatpush1.bf16.xpose.msra.mxu0 %v1508
        %1532 = vmatprep.subr.bf16.mxu0 0
        %1533 = vmatpush2.bf16.xpose.msra.mxu0 0
        %1534 = vmatprep.subr.bf16.mxu0 0
        %1535 = vmatpush2.bf16.xpose.msra.mxu0 0
        %1536 = vmatprep.subr.bf16.mxu0 0
        %1537 = vmatpush2.bf16.xpose.msra.mxu0 0
        %1538 = vmatprep.subr.bf16.mxu0 0
        %1539 = vmatpush2.bf16.xpose.msra.mxu0 0
        %1540 = vmatprep.subr.bf16.mxu0 0
        %1541 = vmatpush2.bf16.xpose.msra.mxu0 0
        %1542 = vmatprep.subr.bf16.mxu0 0
        %1543 = vmatpush2.bf16.xpose.msra.mxu0 0
        %1544 = vmatprep.subr.bf16.mxu0 0
        %1545 = vmatpush2.bf16.xpose.msra.mxu0 0
        %1546 = vmatprep.subr.bf16.mxu0 0
        %1547 = vmatpush2.bf16.xpose.msra.mxu0 0
        %1548 = vmatprep.mubr.bf16.mxu0 0
        %1549 = vmatmul.mubr.bf16.gmra.mxu0 %v1504
        %v1550 = vpop.f32.mrf.mxu0
        %v1551 = vadd.f32 0.0, %v1550
        %v1552 = vpop.f32.mrf.mxu0
        %v1553 = vpop.f32.mrf.mxu0
        %v1554 = vadd.f32 0.0, %v1553
        %v1555 = vpop.f32.mrf.mxu0
        %1556 = vdwg.mxu0
        %1557 = vmatprep.subr.bf16.mxu0 0
        %1558 = vmatpush1.bf16.xpose.msra.mxu0 0
        %1559 = vmatprep.subr.bf16.mxu0 0
        %1560 = vmatpush1.bf16.xpose.msra.mxu0 0
        %1561 = vmatprep.subr.bf16.mxu0 0
        %1562 = vmatpush1.bf16.xpose.msra.mxu0 0
        %1563 = vmatprep.subr.bf16.mxu0 0
        %1564 = vmatpush1.bf16.xpose.msra.mxu0 0
        %1565 = vmatprep.subr.bf16.mxu0 0
        %1566 = vmatpush1.bf16.xpose.msra.mxu0 0
        %1567 = vmatprep.subr.bf16.mxu0 0
        %1568 = vmatpush1.bf16.xpose.msra.mxu0 0
        %1569 = vmatprep.subr.bf16.mxu0 0
        %1570 = vmatpush1.bf16.xpose.msra.mxu0 0
        %1571 = vmatprep.subr.bf16.mxu0 0
        %1572 = vmatpush1.bf16.xpose.msra.mxu0 %v1509
        %1573 = vmatprep.subr.bf16.mxu0 0
        %1574 = vmatpush2.bf16.xpose.msra.mxu0 0
        %1575 = vmatprep.subr.bf16.mxu0 0
        %1576 = vmatpush2.bf16.xpose.msra.mxu0 0
        %1577 = vmatprep.subr.bf16.mxu0 0
        %1578 = vmatpush2.bf16.xpose.msra.mxu0 0
        %1579 = vmatprep.subr.bf16.mxu0 0
        %1580 = vmatpush2.bf16.xpose.msra.mxu0 0
        %1581 = vmatprep.subr.bf16.mxu0 0
        %1582 = vmatpush2.bf16.xpose.msra.mxu0 0
        %1583 = vmatprep.subr.bf16.mxu0 0
        %1584 = vmatpush2.bf16.xpose.msra.mxu0 0
        %1585 = vmatprep.subr.bf16.mxu0 0
        %1586 = vmatpush2.bf16.xpose.msra.mxu0 0
        %1587 = vmatprep.subr.bf16.mxu0 0
        %1588 = vmatpush2.bf16.xpose.msra.mxu0 0
        %1589 = vmatprep.mubr.bf16.mxu0 0
        %1590 = vmatmul.mubr.bf16.gmra.mxu0 %v1505
        %v1591 = vpop.f32.mrf.mxu0
        %v1592 = vadd.f32 0.0, %v1591
        %v1593 = vpop.f32.mrf.mxu0
        %v1594 = vpop.f32.mrf.mxu0
        %v1595 = vadd.f32 0.0, %v1594
        %v1596 = vpop.f32.mrf.mxu0
        %1597 = vdwg.mxu0
        %1598 = vmatprep.subr.bf16.mxu0 0
        %1599 = vmatpush1.bf16.xpose.msra.mxu0 0
        %1600 = vmatprep.subr.bf16.mxu0 0
        %1601 = vmatpush1.bf16.xpose.msra.mxu0 0
        %1602 = vmatprep.subr.bf16.mxu0 0
        %1603 = vmatpush1.bf16.xpose.msra.mxu0 0
        %1604 = vmatprep.subr.bf16.mxu0 0
        %1605 = vmatpush1.bf16.xpose.msra.mxu0 0
        %1606 = vmatprep.subr.bf16.mxu0 0
        %1607 = vmatpush1.bf16.xpose.msra.mxu0 0
        %1608 = vmatprep.subr.bf16.mxu0 0
        %1609 = vmatpush1.bf16.xpose.msra.mxu0 0
        %1610 = vmatprep.subr.bf16.mxu0 0
        %1611 = vmatpush1.bf16.xpose.msra.mxu0 0
        %1612 = vmatprep.subr.bf16.mxu0 0
        %1613 = vmatpush1.bf16.xpose.msra.mxu0 %v1510
        %1614 = vmatprep.subr.bf16.mxu0 0
        %1615 = vmatpush2.bf16.xpose.msra.mxu0 0
        %1616 = vmatprep.subr.bf16.mxu0 0
        %1617 = vmatpush2.bf16.xpose.msra.mxu0 0
        %1618 = vmatprep.subr.bf16.mxu0 0
        %1619 = vmatpush2.bf16.xpose.msra.mxu0 0
        %1620 = vmatprep.subr.bf16.mxu0 0
        %1621 = vmatpush2.bf16.xpose.msra.mxu0 0
        %1622 = vmatprep.subr.bf16.mxu0 0
        %1623 = vmatpush2.bf16.xpose.msra.mxu0 0
        %1624 = vmatprep.subr.bf16.mxu0 0
        %1625 = vmatpush2.bf16.xpose.msra.mxu0 0
        %1626 = vmatprep.subr.bf16.mxu0 0
        %1627 = vmatpush2.bf16.xpose.msra.mxu0 0
        %1628 = vmatprep.subr.bf16.mxu0 0
        %1629 = vmatpush2.bf16.xpose.msra.mxu0 0
        %1630 = vmatprep.mubr.bf16.mxu0 0
        %1631 = vmatmul.mubr.bf16.gmra.mxu0 %v1506
        %v1632 = vpop.f32.mrf.mxu0
        %v1633 = vadd.f32 0.0, %v1632
        %v1634 = vpop.f32.mrf.mxu0
        %v1635 = vpop.f32.mrf.mxu0
        %v1636 = vadd.f32 0.0, %v1635
        %v1637 = vpop.f32.mrf.mxu0
        %1638 = vdwg.mxu0
        %1639 = vmatprep.subr.bf16.mxu0 0
        %1640 = vmatpush1.bf16.xpose.msra.mxu0 0
        %1641 = vmatprep.subr.bf16.mxu0 0
        %1642 = vmatpush1.bf16.xpose.msra.mxu0 0
        %1643 = vmatprep.subr.bf16.mxu0 0
        %1644 = vmatpush1.bf16.xpose.msra.mxu0 0
        %1645 = vmatprep.subr.bf16.mxu0 0
        %1646 = vmatpush1.bf16.xpose.msra.mxu0 0
        %1647 = vmatprep.subr.bf16.mxu0 0
        %1648 = vmatpush1.bf16.xpose.msra.mxu0 0
        %1649 = vmatprep.subr.bf16.mxu0 0
        %1650 = vmatpush1.bf16.xpose.msra.mxu0 0
        %1651 = vmatprep.subr.bf16.mxu0 0
        %1652 = vmatpush1.bf16.xpose.msra.mxu0 0
        %1653 = vmatprep.subr.bf16.mxu0 0
        %1654 = vmatpush1.bf16.xpose.msra.mxu0 %v1511
        %1655 = vmatprep.subr.bf16.mxu0 0
        %1656 = vmatpush2.bf16.xpose.msra.mxu0 0
        %1657 = vmatprep.subr.bf16.mxu0 0
        %1658 = vmatpush2.bf16.xpose.msra.mxu0 0
        %1659 = vmatprep.subr.bf16.mxu0 0
        %1660 = vmatpush2.bf16.xpose.msra.mxu0 0
        %1661 = vmatprep.subr.bf16.mxu0 0
        %1662 = vmatpush2.bf16.xpose.msra.mxu0 0
        %1663 = vmatprep.subr.bf16.mxu0 0
        %1664 = vmatpush2.bf16.xpose.msra.mxu0 0
        %1665 = vmatprep.subr.bf16.mxu0 0
        %1666 = vmatpush2.bf16.xpose.msra.mxu0 0
        %1667 = vmatprep.subr.bf16.mxu0 0
        %1668 = vmatpush2.bf16.xpose.msra.mxu0 0
        %1669 = vmatprep.subr.bf16.mxu0 0
        %1670 = vmatpush2.bf16.xpose.msra.mxu0 0
        %1671 = vmatprep.mubr.bf16.mxu0 0
        %1672 = vmatmul.mubr.bf16.gmra.mxu0 %v1507
        %v1673 = vpop.f32.mrf.mxu0
        %v1674 = vadd.f32 0.0, %v1673
        %v1675 = vpop.f32.mrf.mxu0
        %v1676 = vpop.f32.mrf.mxu0
        %v1677 = vadd.f32 0.0, %v1676
        %v1678 = vpop.f32.mrf.mxu0
        %1679 = vdwg.mxu0
        %vm1680 = vcmask 130048
        %v1681 = vsel %vm1680, %v1551, -inf
        %1682 = vmax.xlane.f32.xlu0 %v1681
        %v1683 = vpop.xlane.xlu0 %1682
        %v1684 = vsel %vm1680, %v1554, -inf
        %1685 = vmax.xlane.f32.xlu0 %v1684
        %v1686 = vpop.xlane.xlu0 %1685
        %v1687 = vsel %vm1680, %v1592, -inf
        %1688 = vmax.xlane.f32.xlu0 %v1687
        %v1689 = vpop.xlane.xlu0 %1688
        %v1690 = vsel %vm1680, %v1595, -inf
        %1691 = vmax.xlane.f32.xlu0 %v1690
        %v1692 = vpop.xlane.xlu0 %1691
        %v1693 = vsel %vm1680, %v1633, -inf
        %1694 = vmax.xlane.f32.xlu0 %v1693
        %v1695 = vpop.xlane.xlu0 %1694
        %v1696 = vsel %vm1680, %v1636, -inf
        %1697 = vmax.xlane.f32.xlu0 %v1696
        %v1698 = vpop.xlane.xlu0 %1697
        %v1699 = vsel %vm1680, %v1674, -inf
        %1700 = vmax.xlane.f32.xlu0 %v1699
        %v1701 = vpop.xlane.xlu0 %1700
        %v1702 = vsel %vm1680, %v1677, -inf
        %1703 = vmax.xlane.f32.xlu0 %v1702
        %v1704 = vpop.xlane.xlu0 %1703
        %v1705 = vsub.f32 %v1551, %v1683
        %v1706 = vsub.f32 %v1554, %v1686
        %v1707 = vsub.f32 %v1592, %v1689
        %v1708 = vsub.f32 %v1595, %v1692
        %v1709 = vsub.f32 %v1633, %v1695
        %v1710 = vsub.f32 %v1636, %v1698
        %v1711 = vsub.f32 %v1674, %v1701
        %v1712 = vsub.f32 %v1677, %v1704
        %v1713 = vmul.f32 %v1705, 1.442695
        %v1714 = vpow.pop %v1713
        %v1715 = vmul.f32 %v1706, 1.442695
        %v1716 = vpow.pop %v1715
        %v1717 = vmul.f32 %v1707, 1.442695
        %v1718 = vpow.pop %v1717
        %v1719 = vmul.f32 %v1708, 1.442695
        %v1720 = vpow.pop %v1719
        %v1721 = vmul.f32 %v1709, 1.442695
        %v1722 = vpow.pop %v1721
        %v1723 = vmul.f32 %v1710, 1.442695
        %v1724 = vpow.pop %v1723
        %v1725 = vmul.f32 %v1711, 1.442695
        %v1726 = vpow.pop %v1725
        %v1727 = vmul.f32 %v1712, 1.442695
        %v1728 = vpow.pop %v1727
        %v1729 = vsel %vm1680, %v1714, 0.0
        %1730 = vadd.xlane.f32.xlu0 %v1729
        %v1731 = vpop.xlane.xlu0 %1730
        %v1732 = vsel %vm1680, %v1716, 0.0
        %1733 = vadd.xlane.f32.xlu0 %v1732
        %v1734 = vpop.xlane.xlu0 %1733
        %v1735 = vsel %vm1680, %v1718, 0.0
        %1736 = vadd.xlane.f32.xlu0 %v1735
        %v1737 = vpop.xlane.xlu0 %1736
        %v1738 = vsel %vm1680, %v1720, 0.0
        %1739 = vadd.xlane.f32.xlu0 %v1738
        %v1740 = vpop.xlane.xlu0 %1739
        %v1741 = vsel %vm1680, %v1722, 0.0
        %1742 = vadd.xlane.f32.xlu0 %v1741
        %v1743 = vpop.xlane.xlu0 %1742
        %v1744 = vsel %vm1680, %v1724, 0.0
        %1745 = vadd.xlane.f32.xlu0 %v1744
        %v1746 = vpop.xlane.xlu0 %1745
        %v1747 = vsel %vm1680, %v1726, 0.0
        %1748 = vadd.xlane.f32.xlu0 %v1747
        %v1749 = vpop.xlane.xlu0 %1748
        %v1750 = vsel %vm1680, %v1728, 0.0
        %1751 = vadd.xlane.f32.xlu0 %v1750
        %v1752 = vpop.xlane.xlu0 %1751
        %v1753 = vrcp.pop %v1731
        %v1754 = vrcp.pop %v1734
        %v1755 = vrcp.pop %v1737
        %v1756 = vrcp.pop %v1740
        %v1757 = vrcp.pop %v1743
        %v1758 = vrcp.pop %v1746
        %v1759 = vrcp.pop %v1749
        %v1760 = vrcp.pop %v1752
        %v1761 = vmul.f32 %v1714, %v1753
        %v1762 = vmul.f32 %v1716, %v1754
        %v1763 = vmul.f32 %v1718, %v1755
        %v1764 = vmul.f32 %v1720, %v1756
        %v1765 = vmul.f32 %v1722, %v1757
        %v1766 = vmul.f32 %v1724, %v1758
        %v1767 = vmul.f32 %v1726, %v1759
        %v1768 = vmul.f32 %v1728, %v1760
        %v1769 = vpack.c.bf16 %v1762, %v1761
        %v1770 = vpack.c.bf16 %v1764, %v1763
        %v1771 = vpack.c.bf16 %v1766, %v1765
        %v1772 = vpack.c.bf16 %v1768, %v1767
        %v1774 = vsel %vm1680, %v1769, 0
        %1776 = vmatprep.subr.bf16.mxu0 0
        %1777 = vmatpush1.bf16.msra.mxu0 0
        %1778 = vmatprep.subr.bf16.mxu0 0
        %1779 = vmatpush1.bf16.msra.mxu0 0
        %1780 = vmatprep.subr.bf16.mxu0 0
        %1781 = vmatpush1.bf16.msra.mxu0 0
        %1782 = vmatprep.subr.bf16.mxu0 0
        %1783 = vmatpush1.bf16.msra.mxu0 0
        %1784 = vmatprep.subr.bf16.mxu0 0
        %1785 = vmatpush1.bf16.msra.mxu0 0
        %1786 = vmatprep.subr.bf16.mxu0 0
        %1787 = vmatpush1.bf16.msra.mxu0 0
        %1788 = vmatprep.subr.bf16.mxu0 0
        %1789 = vmatpush1.bf16.msra.mxu0 0
        %1790 = vmatprep.subr.bf16.mxu0 0
        %1791 = vmatpush1.bf16.msra.mxu0 %v1512
        %1792 = vmatprep.subr.bf16.mxu0 0
        %1793 = vmatpush2.bf16.msra.mxu0 0
        %1794 = vmatprep.subr.bf16.mxu0 0
        %1795 = vmatpush2.bf16.msra.mxu0 0
        %1796 = vmatprep.subr.bf16.mxu0 0
        %1797 = vmatpush2.bf16.msra.mxu0 0
        %1798 = vmatprep.subr.bf16.mxu0 0
        %1799 = vmatpush2.bf16.msra.mxu0 0
        %1800 = vmatprep.subr.bf16.mxu0 0
        %1801 = vmatpush2.bf16.msra.mxu0 0
        %1802 = vmatprep.subr.bf16.mxu0 0
        %1803 = vmatpush2.bf16.msra.mxu0 0
        %1804 = vmatprep.subr.bf16.mxu0 0
        %1805 = vmatpush2.bf16.msra.mxu0 0
        %1806 = vmatprep.subr.bf16.mxu0 0
        %1807 = vmatpush2.bf16.msra.mxu0 0
        %1808 = vmatprep.mubr.bf16.mxu0 0
        %1809 = vmatmul.mubr.bf16.gmra.mxu0 %v1774
        %v1810 = vpop.f32.mrf.mxu0
        %v1811 = vadd.f32 0.0, %v1810
        %v1812 = vpop.f32.mrf.mxu0
        %v1813 = vpop.f32.mrf.mxu0
        %v1814 = vadd.f32 0.0, %v1813
        %v1815 = vpop.f32.mrf.mxu0
        %1816 = vdwg.mxu0
        %v1818 = vsel %vm1680, %v1770, 0
        %1820 = vmatprep.subr.bf16.mxu0 0
        %1821 = vmatpush1.bf16.msra.mxu0 0
        %1822 = vmatprep.subr.bf16.mxu0 0
        %1823 = vmatpush1.bf16.msra.mxu0 0
        %1824 = vmatprep.subr.bf16.mxu0 0
        %1825 = vmatpush1.bf16.msra.mxu0 0
        %1826 = vmatprep.subr.bf16.mxu0 0
        %1827 = vmatpush1.bf16.msra.mxu0 0
        %1828 = vmatprep.subr.bf16.mxu0 0
        %1829 = vmatpush1.bf16.msra.mxu0 0
        %1830 = vmatprep.subr.bf16.mxu0 0
        %1831 = vmatpush1.bf16.msra.mxu0 0
        %1832 = vmatprep.subr.bf16.mxu0 0
        %1833 = vmatpush1.bf16.msra.mxu0 0
        %1834 = vmatprep.subr.bf16.mxu0 0
        %1835 = vmatpush1.bf16.msra.mxu0 %v1513
        %1836 = vmatprep.subr.bf16.mxu0 0
        %1837 = vmatpush2.bf16.msra.mxu0 0
        %1838 = vmatprep.subr.bf16.mxu0 0
        %1839 = vmatpush2.bf16.msra.mxu0 0
        %1840 = vmatprep.subr.bf16.mxu0 0
        %1841 = vmatpush2.bf16.msra.mxu0 0
        %1842 = vmatprep.subr.bf16.mxu0 0
        %1843 = vmatpush2.bf16.msra.mxu0 0
        %1844 = vmatprep.subr.bf16.mxu0 0
        %1845 = vmatpush2.bf16.msra.mxu0 0
        %1846 = vmatprep.subr.bf16.mxu0 0
        %1847 = vmatpush2.bf16.msra.mxu0 0
        %1848 = vmatprep.subr.bf16.mxu0 0
        %1849 = vmatpush2.bf16.msra.mxu0 0
        %1850 = vmatprep.subr.bf16.mxu0 0
        %1851 = vmatpush2.bf16.msra.mxu0 0
        %1852 = vmatprep.mubr.bf16.mxu0 0
        %1853 = vmatmul.mubr.bf16.gmra.mxu0 %v1818
        %v1854 = vpop.f32.mrf.mxu0
        %v1855 = vadd.f32 0.0, %v1854
        %v1856 = vpop.f32.mrf.mxu0
        %v1857 = vpop.f32.mrf.mxu0
        %v1858 = vadd.f32 0.0, %v1857
        %v1859 = vpop.f32.mrf.mxu0
        %1860 = vdwg.mxu0
        %v1862 = vsel %vm1680, %v1771, 0
        %1864 = vmatprep.subr.bf16.mxu0 0
        %1865 = vmatpush1.bf16.msra.mxu0 0
        %1866 = vmatprep.subr.bf16.mxu0 0
        %1867 = vmatpush1.bf16.msra.mxu0 0
        %1868 = vmatprep.subr.bf16.mxu0 0
        %1869 = vmatpush1.bf16.msra.mxu0 0
        %1870 = vmatprep.subr.bf16.mxu0 0
        %1871 = vmatpush1.bf16.msra.mxu0 0
        %1872 = vmatprep.subr.bf16.mxu0 0
        %1873 = vmatpush1.bf16.msra.mxu0 0
        %1874 = vmatprep.subr.bf16.mxu0 0
        %1875 = vmatpush1.bf16.msra.mxu0 0
        %1876 = vmatprep.subr.bf16.mxu0 0
        %1877 = vmatpush1.bf16.msra.mxu0 0
        %1878 = vmatprep.subr.bf16.mxu0 0
        %1879 = vmatpush1.bf16.msra.mxu0 %v1514
        %1880 = vmatprep.subr.bf16.mxu0 0
        %1881 = vmatpush2.bf16.msra.mxu0 0
        %1882 = vmatprep.subr.bf16.mxu0 0
        %1883 = vmatpush2.bf16.msra.mxu0 0
        %1884 = vmatprep.subr.bf16.mxu0 0
        %1885 = vmatpush2.bf16.msra.mxu0 0
        %1886 = vmatprep.subr.bf16.mxu0 0
        %1887 = vmatpush2.bf16.msra.mxu0 0
        %1888 = vmatprep.subr.bf16.mxu0 0
        %1889 = vmatpush2.bf16.msra.mxu0 0
        %1890 = vmatprep.subr.bf16.mxu0 0
        %1891 = vmatpush2.bf16.msra.mxu0 0
        %1892 = vmatprep.subr.bf16.mxu0 0
        %1893 = vmatpush2.bf16.msra.mxu0 0
        %1894 = vmatprep.subr.bf16.mxu0 0
        %1895 = vmatpush2.bf16.msra.mxu0 0
        %1896 = vmatprep.mubr.bf16.mxu0 0
        %1897 = vmatmul.mubr.bf16.gmra.mxu0 %v1862
        %v1898 = vpop.f32.mrf.mxu0
        %v1899 = vadd.f32 0.0, %v1898
        %v1900 = vpop.f32.mrf.mxu0
        %v1901 = vpop.f32.mrf.mxu0
        %v1902 = vadd.f32 0.0, %v1901
        %v1903 = vpop.f32.mrf.mxu0
        %1904 = vdwg.mxu0
        %v1906 = vsel %vm1680, %v1772, 0
        %1908 = vmatprep.subr.bf16.mxu0 0
        %1909 = vmatpush1.bf16.msra.mxu0 0
        %1910 = vmatprep.subr.bf16.mxu0 0
        %1911 = vmatpush1.bf16.msra.mxu0 0
        %1912 = vmatprep.subr.bf16.mxu0 0
        %1913 = vmatpush1.bf16.msra.mxu0 0
        %1914 = vmatprep.subr.bf16.mxu0 0
        %1915 = vmatpush1.bf16.msra.mxu0 0
        %1916 = vmatprep.subr.bf16.mxu0 0
        %1917 = vmatpush1.bf16.msra.mxu0 0
        %1918 = vmatprep.subr.bf16.mxu0 0
        %1919 = vmatpush1.bf16.msra.mxu0 0
        %1920 = vmatprep.subr.bf16.mxu0 0
        %1921 = vmatpush1.bf16.msra.mxu0 0
        %1922 = vmatprep.subr.bf16.mxu0 0
        %1923 = vmatpush1.bf16.msra.mxu0 %v1515
        %1924 = vmatprep.subr.bf16.mxu0 0
        %1925 = vmatpush2.bf16.msra.mxu0 0
        %1926 = vmatprep.subr.bf16.mxu0 0
        %1927 = vmatpush2.bf16.msra.mxu0 0
        %1928 = vmatprep.subr.bf16.mxu0 0
        %1929 = vmatpush2.bf16.msra.mxu0 0
        %1930 = vmatprep.subr.bf16.mxu0 0
        %1931 = vmatpush2.bf16.msra.mxu0 0
        %1932 = vmatprep.subr.bf16.mxu0 0
        %1933 = vmatpush2.bf16.msra.mxu0 0
        %1934 = vmatprep.subr.bf16.mxu0 0
        %1935 = vmatpush2.bf16.msra.mxu0 0
        %1936 = vmatprep.subr.bf16.mxu0 0
        %1937 = vmatpush2.bf16.msra.mxu0 0
        %1938 = vmatprep.subr.bf16.mxu0 0
        %1939 = vmatpush2.bf16.msra.mxu0 0
        %1940 = vmatprep.mubr.bf16.mxu0 0
        %1941 = vmatmul.mubr.bf16.gmra.mxu0 %v1906
        %v1942 = vpop.f32.mrf.mxu0
        %v1943 = vadd.f32 0.0, %v1942
        %v1944 = vpop.f32.mrf.mxu0
        %v1945 = vpop.f32.mrf.mxu0
        %v1946 = vadd.f32 0.0, %v1945
        %v1947 = vpop.f32.mrf.mxu0
        %1948 = vdwg.mxu0
        %v1949 = vpack.c.bf16 %v1814, %v1811
        %v1950 = vpack.c.bf16 %v1858, %v1855
        %v1951 = vpack.c.bf16 %v1902, %v1899
        %v1952 = vpack.c.bf16 %v1946, %v1943
        %v1969 = vunpack.c.l.b16 %v1433
        %v1970 = vunpack.c.l.b16 %v1434
        %v1971 = vunpack.c.l.b16 %v1435
        %v1972 = vunpack.c.l.b16 %v1436
        %v1973 = vunpack.c.l.b16 %v1437
        %v1974 = vunpack.c.l.b16 %v1438
        %v1975 = vunpack.c.l.b16 %v1439
        %v1976 = vunpack.c.l.b16 %v1440
        %v1977 = vunpack.c.l.b16 %v1441
        %v1978 = vunpack.c.l.b16 %v1442
        %v1979 = vunpack.c.l.b16 %v1443
        %v1980 = vunpack.c.l.b16 %v1444
        %v1981 = vunpack.c.l.b16 %v1445
        %v1982 = vunpack.c.l.b16 %v1446
        %v1983 = vunpack.c.l.b16 %v1447
        %v1984 = vunpack.c.l.b16 %v1448
        %v1985 = vpack.c.b16 %v1970, %v1969
        %v1986 = vpack.c.b16 %v1972, %v1971
        %v1987 = vpack.c.b16 %v1974, %v1973
        %v1988 = vpack.c.b16 %v1976, %v1975
        %v1989 = vpack.c.b16 %v1978, %v1977
        %v1990 = vpack.c.b16 %v1980, %v1979
        %v1991 = vpack.c.b16 %v1982, %v1981
        %v1992 = vpack.c.b16 %v1984, %v1983
        %2001 = vmatprep.subr.bf16.mxu0 0
        %2002 = vmatpush1.bf16.msra.mxu0 %v1992
        %2003 = vmatprep.subr.bf16.mxu0 0
        %2004 = vmatpush1.bf16.msra.mxu0 %v1991
        %2005 = vmatprep.subr.bf16.mxu0 0
        %2006 = vmatpush1.bf16.msra.mxu0 %v1990
        %2007 = vmatprep.subr.bf16.mxu0 0
        %2008 = vmatpush1.bf16.msra.mxu0 %v1989
        %2009 = vmatprep.subr.bf16.mxu0 0
        %2010 = vmatpush1.bf16.msra.mxu0 %v1988
        %2011 = vmatprep.subr.bf16.mxu0 0
        %2012 = vmatpush1.bf16.msra.mxu0 %v1987
        %2013 = vmatprep.subr.bf16.mxu0 0
        %2014 = vmatpush1.bf16.msra.mxu0 %v1986
        %2015 = vmatprep.subr.bf16.mxu0 0
        %2016 = vmatpush1.bf16.msra.mxu0 %v1985
        %2017 = vmatprep.subr.bf16.mxu0 0
        %2018 = vmatpush2.bf16.msra.mxu0 0
        %2019 = vmatprep.subr.bf16.mxu0 0
        %2020 = vmatpush2.bf16.msra.mxu0 0
        %2021 = vmatprep.subr.bf16.mxu0 0
        %2022 = vmatpush2.bf16.msra.mxu0 0
        %2023 = vmatprep.subr.bf16.mxu0 0
        %2024 = vmatpush2.bf16.msra.mxu0 0
        %2025 = vmatprep.subr.bf16.mxu0 0
        %2026 = vmatpush2.bf16.msra.mxu0 0
        %2027 = vmatprep.subr.bf16.mxu0 0
        %2028 = vmatpush2.bf16.msra.mxu0 0
        %2029 = vmatprep.subr.bf16.mxu0 0
        %2030 = vmatpush2.bf16.msra.mxu0 0
        %2031 = vmatprep.subr.bf16.mxu0 0
        %2032 = vmatpush2.bf16.msra.mxu0 0
        %2033 = vmatprep.mubr.bf16.mxu0 0
        %2034 = vmatmul.mubr.bf16.gmra.mxu0 %v1949
        %v2035 = vpop.f32.mrf.mxu0
        %v2036 = vadd.f32 0.0, %v2035
        %v2037 = vpop.f32.mrf.mxu0
        %v2038 = vpop.f32.mrf.mxu0
        %v2039 = vadd.f32 0.0, %v2038
        %v2040 = vpop.f32.mrf.mxu0
        %2041 = vmatprep.mubr.bf16.mxu0 0
        %2042 = vmatmul.mubr.bf16.gmra.mxu0 %v1950
        %v2043 = vpop.f32.mrf.mxu0
        %v2044 = vadd.f32 0.0, %v2043
        %v2045 = vpop.f32.mrf.mxu0
        %v2046 = vpop.f32.mrf.mxu0
        %v2047 = vadd.f32 0.0, %v2046
        %v2048 = vpop.f32.mrf.mxu0
        %2049 = vmatprep.mubr.bf16.mxu0 0
        %2050 = vmatmul.mubr.bf16.gmra.mxu0 %v1951
        %v2051 = vpop.f32.mrf.mxu0
        %v2052 = vadd.f32 0.0, %v2051
        %v2053 = vpop.f32.mrf.mxu0
        %v2054 = vpop.f32.mrf.mxu0
        %v2055 = vadd.f32 0.0, %v2054
        %v2056 = vpop.f32.mrf.mxu0
        %2057 = vmatprep.mubr.bf16.mxu0 0
        %2058 = vmatmul.mubr.bf16.gmra.mxu0 %v1952
        %v2059 = vpop.f32.mrf.mxu0
        %v2060 = vadd.f32 0.0, %v2059
        %v2061 = vpop.f32.mrf.mxu0
        %v2062 = vpop.f32.mrf.mxu0
        %v2063 = vadd.f32 0.0, %v2062
        %v2064 = vpop.f32.mrf.mxu0
        %2065 = vdwg.mxu0
        %v2066 = vadd.f32 %v1502, %v2036
        %v2067 = vadd.f32 %v1502, %v2039
        %v2068 = vadd.f32 %v1502, %v2044
        %v2069 = vadd.f32 %v1502, %v2047
        %v2070 = vadd.f32 %v1502, %v2052
        %v2071 = vadd.f32 %v1502, %v2055
        %v2072 = vadd.f32 %v1502, %v2060
        %v2073 = vadd.f32 %v1502, %v2063
        %v2074 = vpack.c.bf16 %v1036, %v1032
        %v2075 = vpack.c.bf16 %v1046, %v1042
        %v2076 = vpack.c.bf16 %v1056, %v1052
        %v2077 = vpack.c.bf16 %v1066, %v1062
        %v2078 = vpack.c.bf16 %v1182, %v1178
        %v2079 = vpack.c.bf16 %v1192, %v1188
        %v2080 = vpack.c.bf16 %v1202, %v1198
        %v2081 = vpack.c.bf16 %v1212, %v1208
        %v2082 = vpack.c.bf16 %v1328, %v1324
        %v2083 = vpack.c.bf16 %v1338, %v1334
        %v2084 = vpack.c.bf16 %v1348, %v1344
        %v2085 = vpack.c.bf16 %v1358, %v1354
        %2086 = vmatprep.subr.bf16.mxu0 0
        %2087 = vmatpush1.bf16.xpose.msra.mxu0 0
        %2088 = vmatprep.subr.bf16.mxu0 0
        %2089 = vmatpush1.bf16.xpose.msra.mxu0 0
        %2090 = vmatprep.subr.bf16.mxu0 0
        %2091 = vmatpush1.bf16.xpose.msra.mxu0 0
        %2092 = vmatprep.subr.bf16.mxu0 0
        %2093 = vmatpush1.bf16.xpose.msra.mxu0 0
        %2094 = vmatprep.subr.bf16.mxu0 0
        %2095 = vmatpush1.bf16.xpose.msra.mxu0 0
        %2096 = vmatprep.subr.bf16.mxu0 0
        %2097 = vmatpush1.bf16.xpose.msra.mxu0 0
        %2098 = vmatprep.subr.bf16.mxu0 0
        %2099 = vmatpush1.bf16.xpose.msra.mxu0 0
        %2100 = vmatprep.subr.bf16.mxu0 0
        %2101 = vmatpush1.bf16.xpose.msra.mxu0 %v2078
        %2102 = vmatprep.subr.bf16.mxu0 0
        %2103 = vmatpush2.bf16.xpose.msra.mxu0 0
        %2104 = vmatprep.subr.bf16.mxu0 0
        %2105 = vmatpush2.bf16.xpose.msra.mxu0 0
        %2106 = vmatprep.subr.bf16.mxu0 0
        %2107 = vmatpush2.bf16.xpose.msra.mxu0 0
        %2108 = vmatprep.subr.bf16.mxu0 0
        %2109 = vmatpush2.bf16.xpose.msra.mxu0 0
        %2110 = vmatprep.subr.bf16.mxu0 0
        %2111 = vmatpush2.bf16.xpose.msra.mxu0 0
        %2112 = vmatprep.subr.bf16.mxu0 0
        %2113 = vmatpush2.bf16.xpose.msra.mxu0 0
        %2114 = vmatprep.subr.bf16.mxu0 0
        %2115 = vmatpush2.bf16.xpose.msra.mxu0 0
        %2116 = vmatprep.subr.bf16.mxu0 0
        %2117 = vmatpush2.bf16.xpose.msra.mxu0 0
        %2118 = vmatprep.mubr.bf16.mxu0 0
        %2119 = vmatmul.mubr.bf16.gmra.mxu0 %v2074
        %v2120 = vpop.f32.mrf.mxu0
        %v2121 = vadd.f32 0.0, %v2120
        %v2122 = vpop.f32.mrf.mxu0
        %v2123 = vpop.f32.mrf.mxu0
        %v2124 = vadd.f32 0.0, %v2123
        %v2125 = vpop.f32.mrf.mxu0
        %2126 = vdwg.mxu0
        %2127 = vmatprep.subr.bf16.mxu0 0
        %2128 = vmatpush1.bf16.xpose.msra.mxu0 0
        %2129 = vmatprep.subr.bf16.mxu0 0
        %2130 = vmatpush1.bf16.xpose.msra.mxu0 0
        %2131 = vmatprep.subr.bf16.mxu0 0
        %2132 = vmatpush1.bf16.xpose.msra.mxu0 0
        %2133 = vmatprep.subr.bf16.mxu0 0
        %2134 = vmatpush1.bf16.xpose.msra.mxu0 0
        %2135 = vmatprep.subr.bf16.mxu0 0
        %2136 = vmatpush1.bf16.xpose.msra.mxu0 0
        %2137 = vmatprep.subr.bf16.mxu0 0
        %2138 = vmatpush1.bf16.xpose.msra.mxu0 0
        %2139 = vmatprep.subr.bf16.mxu0 0
        %2140 = vmatpush1.bf16.xpose.msra.mxu0 0
        %2141 = vmatprep.subr.bf16.mxu0 0
        %2142 = vmatpush1.bf16.xpose.msra.mxu0 %v2079
        %2143 = vmatprep.subr.bf16.mxu0 0
        %2144 = vmatpush2.bf16.xpose.msra.mxu0 0
        %2145 = vmatprep.subr.bf16.mxu0 0
        %2146 = vmatpush2.bf16.xpose.msra.mxu0 0
        %2147 = vmatprep.subr.bf16.mxu0 0
        %2148 = vmatpush2.bf16.xpose.msra.mxu0 0
        %2149 = vmatprep.subr.bf16.mxu0 0
        %2150 = vmatpush2.bf16.xpose.msra.mxu0 0
        %2151 = vmatprep.subr.bf16.mxu0 0
        %2152 = vmatpush2.bf16.xpose.msra.mxu0 0
        %2153 = vmatprep.subr.bf16.mxu0 0
        %2154 = vmatpush2.bf16.xpose.msra.mxu0 0
        %2155 = vmatprep.subr.bf16.mxu0 0
        %2156 = vmatpush2.bf16.xpose.msra.mxu0 0
        %2157 = vmatprep.subr.bf16.mxu0 0
        %2158 = vmatpush2.bf16.xpose.msra.mxu0 0
        %2159 = vmatprep.mubr.bf16.mxu0 0
        %2160 = vmatmul.mubr.bf16.gmra.mxu0 %v2075
        %v2161 = vpop.f32.mrf.mxu0
        %v2162 = vadd.f32 0.0, %v2161
        %v2163 = vpop.f32.mrf.mxu0
        %v2164 = vpop.f32.mrf.mxu0
        %v2165 = vadd.f32 0.0, %v2164
        %v2166 = vpop.f32.mrf.mxu0
        %2167 = vdwg.mxu0
        %2168 = vmatprep.subr.bf16.mxu0 0
        %2169 = vmatpush1.bf16.xpose.msra.mxu0 0
        %2170 = vmatprep.subr.bf16.mxu0 0
        %2171 = vmatpush1.bf16.xpose.msra.mxu0 0
        %2172 = vmatprep.subr.bf16.mxu0 0
        %2173 = vmatpush1.bf16.xpose.msra.mxu0 0
        %2174 = vmatprep.subr.bf16.mxu0 0
        %2175 = vmatpush1.bf16.xpose.msra.mxu0 0
        %2176 = vmatprep.subr.bf16.mxu0 0
        %2177 = vmatpush1.bf16.xpose.msra.mxu0 0
        %2178 = vmatprep.subr.bf16.mxu0 0
        %2179 = vmatpush1.bf16.xpose.msra.mxu0 0
        %2180 = vmatprep.subr.bf16.mxu0 0
        %2181 = vmatpush1.bf16.xpose.msra.mxu0 0
        %2182 = vmatprep.subr.bf16.mxu0 0
        %2183 = vmatpush1.bf16.xpose.msra.mxu0 %v2080
        %2184 = vmatprep.subr.bf16.mxu0 0
        %2185 = vmatpush2.bf16.xpose.msra.mxu0 0
        %2186 = vmatprep.subr.bf16.mxu0 0
        %2187 = vmatpush2.bf16.xpose.msra.mxu0 0
        %2188 = vmatprep.subr.bf16.mxu0 0
        %2189 = vmatpush2.bf16.xpose.msra.mxu0 0
        %2190 = vmatprep.subr.bf16.mxu0 0
        %2191 = vmatpush2.bf16.xpose.msra.mxu0 0
        %2192 = vmatprep.subr.bf16.mxu0 0
        %2193 = vmatpush2.bf16.xpose.msra.mxu0 0
        %2194 = vmatprep.subr.bf16.mxu0 0
        %2195 = vmatpush2.bf16.xpose.msra.mxu0 0
        %2196 = vmatprep.subr.bf16.mxu0 0
        %2197 = vmatpush2.bf16.xpose.msra.mxu0 0
        %2198 = vmatprep.subr.bf16.mxu0 0
        %2199 = vmatpush2.bf16.xpose.msra.mxu0 0
        %2200 = vmatprep.mubr.bf16.mxu0 0
        %2201 = vmatmul.mubr.bf16.gmra.mxu0 %v2076
        %v2202 = vpop.f32.mrf.mxu0
        %v2203 = vadd.f32 0.0, %v2202
        %v2204 = vpop.f32.mrf.mxu0
        %v2205 = vpop.f32.mrf.mxu0
        %v2206 = vadd.f32 0.0, %v2205
        %v2207 = vpop.f32.mrf.mxu0
        %2208 = vdwg.mxu0
        %2209 = vmatprep.subr.bf16.mxu0 0
        %2210 = vmatpush1.bf16.xpose.msra.mxu0 0
        %2211 = vmatprep.subr.bf16.mxu0 0
        %2212 = vmatpush1.bf16.xpose.msra.mxu0 0
        %2213 = vmatprep.subr.bf16.mxu0 0
        %2214 = vmatpush1.bf16.xpose.msra.mxu0 0
        %2215 = vmatprep.subr.bf16.mxu0 0
        %2216 = vmatpush1.bf16.xpose.msra.mxu0 0
        %2217 = vmatprep.subr.bf16.mxu0 0
        %2218 = vmatpush1.bf16.xpose.msra.mxu0 0
        %2219 = vmatprep.subr.bf16.mxu0 0
        %2220 = vmatpush1.bf16.xpose.msra.mxu0 0
        %2221 = vmatprep.subr.bf16.mxu0 0
        %2222 = vmatpush1.bf16.xpose.msra.mxu0 0
        %2223 = vmatprep.subr.bf16.mxu0 0
        %2224 = vmatpush1.bf16.xpose.msra.mxu0 %v2081
        %2225 = vmatprep.subr.bf16.mxu0 0
        %2226 = vmatpush2.bf16.xpose.msra.mxu0 0
        %2227 = vmatprep.subr.bf16.mxu0 0
        %2228 = vmatpush2.bf16.xpose.msra.mxu0 0
        %2229 = vmatprep.subr.bf16.mxu0 0
        %2230 = vmatpush2.bf16.xpose.msra.mxu0 0
        %2231 = vmatprep.subr.bf16.mxu0 0
        %2232 = vmatpush2.bf16.xpose.msra.mxu0 0
        %2233 = vmatprep.subr.bf16.mxu0 0
        %2234 = vmatpush2.bf16.xpose.msra.mxu0 0
        %2235 = vmatprep.subr.bf16.mxu0 0
        %2236 = vmatpush2.bf16.xpose.msra.mxu0 0
        %2237 = vmatprep.subr.bf16.mxu0 0
        %2238 = vmatpush2.bf16.xpose.msra.mxu0 0
        %2239 = vmatprep.subr.bf16.mxu0 0
        %2240 = vmatpush2.bf16.xpose.msra.mxu0 0
        %2241 = vmatprep.mubr.bf16.mxu0 0
        %2242 = vmatmul.mubr.bf16.gmra.mxu0 %v2077
        %v2243 = vpop.f32.mrf.mxu0
        %v2244 = vadd.f32 0.0, %v2243
        %v2245 = vpop.f32.mrf.mxu0
        %v2246 = vpop.f32.mrf.mxu0
        %v2247 = vadd.f32 0.0, %v2246
        %v2248 = vpop.f32.mrf.mxu0
        %2249 = vdwg.mxu0
        %v2250 = vsel %vm1680, %v2121, -inf
        %2251 = vmax.xlane.f32.xlu0 %v2250
        %v2252 = vpop.xlane.xlu0 %2251
        %v2253 = vsel %vm1680, %v2124, -inf
        %2254 = vmax.xlane.f32.xlu0 %v2253
        %v2255 = vpop.xlane.xlu0 %2254
        %v2256 = vsel %vm1680, %v2162, -inf
        %2257 = vmax.xlane.f32.xlu0 %v2256
        %v2258 = vpop.xlane.xlu0 %2257
        %v2259 = vsel %vm1680, %v2165, -inf
        %2260 = vmax.xlane.f32.xlu0 %v2259
        %v2261 = vpop.xlane.xlu0 %2260
        %v2262 = vsel %vm1680, %v2203, -inf
        %2263 = vmax.xlane.f32.xlu0 %v2262
        %v2264 = vpop.xlane.xlu0 %2263
        %v2265 = vsel %vm1680, %v2206, -inf
        %2266 = vmax.xlane.f32.xlu0 %v2265
        %v2267 = vpop.xlane.xlu0 %2266
        %v2268 = vsel %vm1680, %v2244, -inf
        %2269 = vmax.xlane.f32.xlu0 %v2268
        %v2270 = vpop.xlane.xlu0 %2269
        %v2271 = vsel %vm1680, %v2247, -inf
        %2272 = vmax.xlane.f32.xlu0 %v2271
        %v2273 = vpop.xlane.xlu0 %2272
        %v2274 = vsub.f32 %v2121, %v2252
        %v2275 = vsub.f32 %v2124, %v2255
        %v2276 = vsub.f32 %v2162, %v2258
        %v2277 = vsub.f32 %v2165, %v2261
        %v2278 = vsub.f32 %v2203, %v2264
        %v2279 = vsub.f32 %v2206, %v2267
        %v2280 = vsub.f32 %v2244, %v2270
        %v2281 = vsub.f32 %v2247, %v2273
        %v2282 = vmul.f32 %v2274, 1.442695
        %v2283 = vpow.pop %v2282
        %v2284 = vmul.f32 %v2275, 1.442695
        %v2285 = vpow.pop %v2284
        %v2286 = vmul.f32 %v2276, 1.442695
        %v2287 = vpow.pop %v2286
        %v2288 = vmul.f32 %v2277, 1.442695
        %v2289 = vpow.pop %v2288
        %v2290 = vmul.f32 %v2278, 1.442695
        %v2291 = vpow.pop %v2290
        %v2292 = vmul.f32 %v2279, 1.442695
        %v2293 = vpow.pop %v2292
        %v2294 = vmul.f32 %v2280, 1.442695
        %v2295 = vpow.pop %v2294
        %v2296 = vmul.f32 %v2281, 1.442695
        %v2297 = vpow.pop %v2296
        %v2298 = vsel %vm1680, %v2283, 0.0
        %2299 = vadd.xlane.f32.xlu0 %v2298
        %v2300 = vpop.xlane.xlu0 %2299
        %v2301 = vsel %vm1680, %v2285, 0.0
        %2302 = vadd.xlane.f32.xlu0 %v2301
        %v2303 = vpop.xlane.xlu0 %2302
        %v2304 = vsel %vm1680, %v2287, 0.0
        %2305 = vadd.xlane.f32.xlu0 %v2304
        %v2306 = vpop.xlane.xlu0 %2305
        %v2307 = vsel %vm1680, %v2289, 0.0
        %2308 = vadd.xlane.f32.xlu0 %v2307
        %v2309 = vpop.xlane.xlu0 %2308
        %v2310 = vsel %vm1680, %v2291, 0.0
        %2311 = vadd.xlane.f32.xlu0 %v2310
        %v2312 = vpop.xlane.xlu0 %2311
        %v2313 = vsel %vm1680, %v2293, 0.0
        %2314 = vadd.xlane.f32.xlu0 %v2313
        %v2315 = vpop.xlane.xlu0 %2314
        %v2316 = vsel %vm1680, %v2295, 0.0
        %2317 = vadd.xlane.f32.xlu0 %v2316
        %v2318 = vpop.xlane.xlu0 %2317
        %v2319 = vsel %vm1680, %v2297, 0.0
        %2320 = vadd.xlane.f32.xlu0 %v2319
        %v2321 = vpop.xlane.xlu0 %2320
        %v2322 = vrcp.pop %v2300
        %v2323 = vrcp.pop %v2303
        %v2324 = vrcp.pop %v2306
        %v2325 = vrcp.pop %v2309
        %v2326 = vrcp.pop %v2312
        %v2327 = vrcp.pop %v2315
        %v2328 = vrcp.pop %v2318
        %v2329 = vrcp.pop %v2321
        %v2330 = vmul.f32 %v2283, %v2322
        %v2331 = vmul.f32 %v2285, %v2323
        %v2332 = vmul.f32 %v2287, %v2324
        %v2333 = vmul.f32 %v2289, %v2325
        %v2334 = vmul.f32 %v2291, %v2326
        %v2335 = vmul.f32 %v2293, %v2327
        %v2336 = vmul.f32 %v2295, %v2328
        %v2337 = vmul.f32 %v2297, %v2329
        %v2338 = vpack.c.bf16 %v2331, %v2330
        %v2339 = vpack.c.bf16 %v2333, %v2332
        %v2340 = vpack.c.bf16 %v2335, %v2334
        %v2341 = vpack.c.bf16 %v2337, %v2336
        %v2343 = vsel %vm1680, %v2338, 0
        %2345 = vmatprep.subr.bf16.mxu0 0
        %2346 = vmatpush1.bf16.msra.mxu0 0
        %2347 = vmatprep.subr.bf16.mxu0 0
        %2348 = vmatpush1.bf16.msra.mxu0 0
        %2349 = vmatprep.subr.bf16.mxu0 0
        %2350 = vmatpush1.bf16.msra.mxu0 0
        %2351 = vmatprep.subr.bf16.mxu0 0
        %2352 = vmatpush1.bf16.msra.mxu0 0
        %2353 = vmatprep.subr.bf16.mxu0 0
        %2354 = vmatpush1.bf16.msra.mxu0 0
        %2355 = vmatprep.subr.bf16.mxu0 0
        %2356 = vmatpush1.bf16.msra.mxu0 0
        %2357 = vmatprep.subr.bf16.mxu0 0
        %2358 = vmatpush1.bf16.msra.mxu0 0
        %2359 = vmatprep.subr.bf16.mxu0 0
        %2360 = vmatpush1.bf16.msra.mxu0 %v2082
        %2361 = vmatprep.subr.bf16.mxu0 0
        %2362 = vmatpush2.bf16.msra.mxu0 0
        %2363 = vmatprep.subr.bf16.mxu0 0
        %2364 = vmatpush2.bf16.msra.mxu0 0
        %2365 = vmatprep.subr.bf16.mxu0 0
        %2366 = vmatpush2.bf16.msra.mxu0 0
        %2367 = vmatprep.subr.bf16.mxu0 0
        %2368 = vmatpush2.bf16.msra.mxu0 0
        %2369 = vmatprep.subr.bf16.mxu0 0
        %2370 = vmatpush2.bf16.msra.mxu0 0
        %2371 = vmatprep.subr.bf16.mxu0 0
        %2372 = vmatpush2.bf16.msra.mxu0 0
        %2373 = vmatprep.subr.bf16.mxu0 0
        %2374 = vmatpush2.bf16.msra.mxu0 0
        %2375 = vmatprep.subr.bf16.mxu0 0
        %2376 = vmatpush2.bf16.msra.mxu0 0
        %2377 = vmatprep.mubr.bf16.mxu0 0
        %2378 = vmatmul.mubr.bf16.gmra.mxu0 %v2343
        %v2379 = vpop.f32.mrf.mxu0
        %v2380 = vadd.f32 0.0, %v2379
        %v2381 = vpop.f32.mrf.mxu0
        %v2382 = vpop.f32.mrf.mxu0
        %v2383 = vadd.f32 0.0, %v2382
        %v2384 = vpop.f32.mrf.mxu0
        %2385 = vdwg.mxu0
        %v2387 = vsel %vm1680, %v2339, 0
        %2389 = vmatprep.subr.bf16.mxu0 0
        %2390 = vmatpush1.bf16.msra.mxu0 0
        %2391 = vmatprep.subr.bf16.mxu0 0
        %2392 = vmatpush1.bf16.msra.mxu0 0
        %2393 = vmatprep.subr.bf16.mxu0 0
        %2394 = vmatpush1.bf16.msra.mxu0 0
        %2395 = vmatprep.subr.bf16.mxu0 0
        %2396 = vmatpush1.bf16.msra.mxu0 0
        %2397 = vmatprep.subr.bf16.mxu0 0
        %2398 = vmatpush1.bf16.msra.mxu0 0
        %2399 = vmatprep.subr.bf16.mxu0 0
        %2400 = vmatpush1.bf16.msra.mxu0 0
        %2401 = vmatprep.subr.bf16.mxu0 0
        %2402 = vmatpush1.bf16.msra.mxu0 0
        %2403 = vmatprep.subr.bf16.mxu0 0
        %2404 = vmatpush1.bf16.msra.mxu0 %v2083
        %2405 = vmatprep.subr.bf16.mxu0 0
        %2406 = vmatpush2.bf16.msra.mxu0 0
        %2407 = vmatprep.subr.bf16.mxu0 0
        %2408 = vmatpush2.bf16.msra.mxu0 0
        %2409 = vmatprep.subr.bf16.mxu0 0
        %2410 = vmatpush2.bf16.msra.mxu0 0
        %2411 = vmatprep.subr.bf16.mxu0 0
        %2412 = vmatpush2.bf16.msra.mxu0 0
        %2413 = vmatprep.subr.bf16.mxu0 0
        %2414 = vmatpush2.bf16.msra.mxu0 0
        %2415 = vmatprep.subr.bf16.mxu0 0
        %2416 = vmatpush2.bf16.msra.mxu0 0
        %2417 = vmatprep.subr.bf16.mxu0 0
        %2418 = vmatpush2.bf16.msra.mxu0 0
        %2419 = vmatprep.subr.bf16.mxu0 0
        %2420 = vmatpush2.bf16.msra.mxu0 0
        %2421 = vmatprep.mubr.bf16.mxu0 0
        %2422 = vmatmul.mubr.bf16.gmra.mxu0 %v2387
        %v2423 = vpop.f32.mrf.mxu0
        %v2424 = vadd.f32 0.0, %v2423
        %v2425 = vpop.f32.mrf.mxu0
        %v2426 = vpop.f32.mrf.mxu0
        %v2427 = vadd.f32 0.0, %v2426
        %v2428 = vpop.f32.mrf.mxu0
        %2429 = vdwg.mxu0
        %v2431 = vsel %vm1680, %v2340, 0
        %2433 = vmatprep.subr.bf16.mxu0 0
        %2434 = vmatpush1.bf16.msra.mxu0 0
        %2435 = vmatprep.subr.bf16.mxu0 0
        %2436 = vmatpush1.bf16.msra.mxu0 0
        %2437 = vmatprep.subr.bf16.mxu0 0
        %2438 = vmatpush1.bf16.msra.mxu0 0
        %2439 = vmatprep.subr.bf16.mxu0 0
        %2440 = vmatpush1.bf16.msra.mxu0 0
        %2441 = vmatprep.subr.bf16.mxu0 0
        %2442 = vmatpush1.bf16.msra.mxu0 0
        %2443 = vmatprep.subr.bf16.mxu0 0
        %2444 = vmatpush1.bf16.msra.mxu0 0
        %2445 = vmatprep.subr.bf16.mxu0 0
        %2446 = vmatpush1.bf16.msra.mxu0 0
        %2447 = vmatprep.subr.bf16.mxu0 0
        %2448 = vmatpush1.bf16.msra.mxu0 %v2084
        %2449 = vmatprep.subr.bf16.mxu0 0
        %2450 = vmatpush2.bf16.msra.mxu0 0
        %2451 = vmatprep.subr.bf16.mxu0 0
        %2452 = vmatpush2.bf16.msra.mxu0 0
        %2453 = vmatprep.subr.bf16.mxu0 0
        %2454 = vmatpush2.bf16.msra.mxu0 0
        %2455 = vmatprep.subr.bf16.mxu0 0
        %2456 = vmatpush2.bf16.msra.mxu0 0
        %2457 = vmatprep.subr.bf16.mxu0 0
        %2458 = vmatpush2.bf16.msra.mxu0 0
        %2459 = vmatprep.subr.bf16.mxu0 0
        %2460 = vmatpush2.bf16.msra.mxu0 0
        %2461 = vmatprep.subr.bf16.mxu0 0
        %2462 = vmatpush2.bf16.msra.mxu0 0
        %2463 = vmatprep.subr.bf16.mxu0 0
        %2464 = vmatpush2.bf16.msra.mxu0 0
        %2465 = vmatprep.mubr.bf16.mxu0 0
        %2466 = vmatmul.mubr.bf16.gmra.mxu0 %v2431
        %v2467 = vpop.f32.mrf.mxu0
        %v2468 = vadd.f32 0.0, %v2467
        %v2469 = vpop.f32.mrf.mxu0
        %v2470 = vpop.f32.mrf.mxu0
        %v2471 = vadd.f32 0.0, %v2470
        %v2472 = vpop.f32.mrf.mxu0
        %2473 = vdwg.mxu0
        %v2475 = vsel %vm1680, %v2341, 0
        %2477 = vmatprep.subr.bf16.mxu0 0
        %2478 = vmatpush1.bf16.msra.mxu0 0
        %2479 = vmatprep.subr.bf16.mxu0 0
        %2480 = vmatpush1.bf16.msra.mxu0 0
        %2481 = vmatprep.subr.bf16.mxu0 0
        %2482 = vmatpush1.bf16.msra.mxu0 0
        %2483 = vmatprep.subr.bf16.mxu0 0
        %2484 = vmatpush1.bf16.msra.mxu0 0
        %2485 = vmatprep.subr.bf16.mxu0 0
        %2486 = vmatpush1.bf16.msra.mxu0 0
        %2487 = vmatprep.subr.bf16.mxu0 0
        %2488 = vmatpush1.bf16.msra.mxu0 0
        %2489 = vmatprep.subr.bf16.mxu0 0
        %2490 = vmatpush1.bf16.msra.mxu0 0
        %2491 = vmatprep.subr.bf16.mxu0 0
        %2492 = vmatpush1.bf16.msra.mxu0 %v2085
        %2493 = vmatprep.subr.bf16.mxu0 0
        %2494 = vmatpush2.bf16.msra.mxu0 0
        %2495 = vmatprep.subr.bf16.mxu0 0
        %2496 = vmatpush2.bf16.msra.mxu0 0
        %2497 = vmatprep.subr.bf16.mxu0 0
        %2498 = vmatpush2.bf16.msra.mxu0 0
        %2499 = vmatprep.subr.bf16.mxu0 0
        %2500 = vmatpush2.bf16.msra.mxu0 0
        %2501 = vmatprep.subr.bf16.mxu0 0
        %2502 = vmatpush2.bf16.msra.mxu0 0
        %2503 = vmatprep.subr.bf16.mxu0 0
        %2504 = vmatpush2.bf16.msra.mxu0 0
        %2505 = vmatprep.subr.bf16.mxu0 0
        %2506 = vmatpush2.bf16.msra.mxu0 0
        %2507 = vmatprep.subr.bf16.mxu0 0
        %2508 = vmatpush2.bf16.msra.mxu0 0
        %2509 = vmatprep.mubr.bf16.mxu0 0
        %2510 = vmatmul.mubr.bf16.gmra.mxu0 %v2475
        %v2511 = vpop.f32.mrf.mxu0
        %v2512 = vadd.f32 0.0, %v2511
        %v2513 = vpop.f32.mrf.mxu0
        %v2514 = vpop.f32.mrf.mxu0
        %v2515 = vadd.f32 0.0, %v2514
        %v2516 = vpop.f32.mrf.mxu0
        %2517 = vdwg.mxu0
        %v2518 = vpack.c.bf16 %v2383, %v2380
        %v2519 = vpack.c.bf16 %v2427, %v2424
        %v2520 = vpack.c.bf16 %v2471, %v2468
        %v2521 = vpack.c.bf16 %v2515, %v2512
        %v2538 = vunpack.c.l.b16 %v1449
        %v2539 = vunpack.c.l.b16 %v1450
        %v2540 = vunpack.c.l.b16 %v1451
        %v2541 = vunpack.c.l.b16 %v1452
        %v2542 = vunpack.c.l.b16 %v1453
        %v2543 = vunpack.c.l.b16 %v1454
        %v2544 = vunpack.c.l.b16 %v1455
        %v2545 = vunpack.c.l.b16 %v1456
        %v2546 = vunpack.c.l.b16 %v1457
        %v2547 = vunpack.c.l.b16 %v1458
        %v2548 = vunpack.c.l.b16 %v1459
        %v2549 = vunpack.c.l.b16 %v1460
        %v2550 = vunpack.c.l.b16 %v1461
        %v2551 = vunpack.c.l.b16 %v1462
        %v2552 = vunpack.c.l.b16 %v1463
        %v2553 = vunpack.c.l.b16 %v1464
        %v2554 = vpack.c.b16 %v2539, %v2538
        %v2555 = vpack.c.b16 %v2541, %v2540
        %v2556 = vpack.c.b16 %v2543, %v2542
        %v2557 = vpack.c.b16 %v2545, %v2544
        %v2558 = vpack.c.b16 %v2547, %v2546
        %v2559 = vpack.c.b16 %v2549, %v2548
        %v2560 = vpack.c.b16 %v2551, %v2550
        %v2561 = vpack.c.b16 %v2553, %v2552
        %2570 = vmatprep.subr.bf16.mxu0 0
        %2571 = vmatpush1.bf16.msra.mxu0 %v2561
        %2572 = vmatprep.subr.bf16.mxu0 0
        %2573 = vmatpush1.bf16.msra.mxu0 %v2560
        %2574 = vmatprep.subr.bf16.mxu0 0
        %2575 = vmatpush1.bf16.msra.mxu0 %v2559
        %2576 = vmatprep.subr.bf16.mxu0 0
        %2577 = vmatpush1.bf16.msra.mxu0 %v2558
        %2578 = vmatprep.subr.bf16.mxu0 0
        %2579 = vmatpush1.bf16.msra.mxu0 %v2557
        %2580 = vmatprep.subr.bf16.mxu0 0
        %2581 = vmatpush1.bf16.msra.mxu0 %v2556
        %2582 = vmatprep.subr.bf16.mxu0 0
        %2583 = vmatpush1.bf16.msra.mxu0 %v2555
        %2584 = vmatprep.subr.bf16.mxu0 0
        %2585 = vmatpush1.bf16.msra.mxu0 %v2554
        %2586 = vmatprep.subr.bf16.mxu0 0
        %2587 = vmatpush2.bf16.msra.mxu0 0
        %2588 = vmatprep.subr.bf16.mxu0 0
        %2589 = vmatpush2.bf16.msra.mxu0 0
        %2590 = vmatprep.subr.bf16.mxu0 0
        %2591 = vmatpush2.bf16.msra.mxu0 0
        %2592 = vmatprep.subr.bf16.mxu0 0
        %2593 = vmatpush2.bf16.msra.mxu0 0
        %2594 = vmatprep.subr.bf16.mxu0 0
        %2595 = vmatpush2.bf16.msra.mxu0 0
        %2596 = vmatprep.subr.bf16.mxu0 0
        %2597 = vmatpush2.bf16.msra.mxu0 0
        %2598 = vmatprep.subr.bf16.mxu0 0
        %2599 = vmatpush2.bf16.msra.mxu0 0
        %2600 = vmatprep.subr.bf16.mxu0 0
        %2601 = vmatpush2.bf16.msra.mxu0 0
        %2602 = vmatprep.mubr.bf16.mxu0 0
        %2603 = vmatmul.mubr.bf16.gmra.mxu0 %v2518
        %v2604 = vpop.f32.mrf.mxu0
        %v2605 = vadd.f32 0.0, %v2604
        %v2606 = vpop.f32.mrf.mxu0
        %v2607 = vpop.f32.mrf.mxu0
        %v2608 = vadd.f32 0.0, %v2607
        %v2609 = vpop.f32.mrf.mxu0
        %2610 = vmatprep.mubr.bf16.mxu0 0
        %2611 = vmatmul.mubr.bf16.gmra.mxu0 %v2519
        %v2612 = vpop.f32.mrf.mxu0
        %v2613 = vadd.f32 0.0, %v2612
        %v2614 = vpop.f32.mrf.mxu0
        %v2615 = vpop.f32.mrf.mxu0
        %v2616 = vadd.f32 0.0, %v2615
        %v2617 = vpop.f32.mrf.mxu0
        %2618 = vmatprep.mubr.bf16.mxu0 0
        %2619 = vmatmul.mubr.bf16.gmra.mxu0 %v2520
        %v2620 = vpop.f32.mrf.mxu0
        %v2621 = vadd.f32 0.0, %v2620
        %v2622 = vpop.f32.mrf.mxu0
        %v2623 = vpop.f32.mrf.mxu0
        %v2624 = vadd.f32 0.0, %v2623
        %v2625 = vpop.f32.mrf.mxu0
        %2626 = vmatprep.mubr.bf16.mxu0 0
        %2627 = vmatmul.mubr.bf16.gmra.mxu0 %v2521
        %v2628 = vpop.f32.mrf.mxu0
        %v2629 = vadd.f32 0.0, %v2628
        %v2630 = vpop.f32.mrf.mxu0
        %v2631 = vpop.f32.mrf.mxu0
        %v2632 = vadd.f32 0.0, %v2631
        %v2633 = vpop.f32.mrf.mxu0
        %2634 = vdwg.mxu0
        %v2635 = vadd.f32 %v2066, %v2605
        %v2636 = vadd.f32 %v2067, %v2608
        %v2637 = vadd.f32 %v2068, %v2613
        %v2638 = vadd.f32 %v2069, %v2616
        %v2639 = vadd.f32 %v2070, %v2621
        %v2640 = vadd.f32 %v2071, %v2624
        %v2641 = vadd.f32 %v2072, %v2629
        %v2642 = vadd.f32 %v2073, %v2632
        %v2643 = vpack.c.bf16 %v1107, %v1103
        %v2644 = vpack.c.bf16 %v1117, %v1113
        %v2645 = vpack.c.bf16 %v1127, %v1123
        %v2646 = vpack.c.bf16 %v1137, %v1133
        %v2647 = vpack.c.bf16 %v1253, %v1249
        %v2648 = vpack.c.bf16 %v1263, %v1259
        %v2649 = vpack.c.bf16 %v1273, %v1269
        %v2650 = vpack.c.bf16 %v1283, %v1279
        %v2651 = vpack.c.bf16 %v1399, %v1395
        %v2652 = vpack.c.bf16 %v1409, %v1405
        %v2653 = vpack.c.bf16 %v1419, %v1415
        %v2654 = vpack.c.bf16 %v1429, %v1425
        %2655 = vmatprep.subr.bf16.mxu0 0
        %2656 = vmatpush1.bf16.xpose.msra.mxu0 0
        %2657 = vmatprep.subr.bf16.mxu0 0
        %2658 = vmatpush1.bf16.xpose.msra.mxu0 0
        %2659 = vmatprep.subr.bf16.mxu0 0
        %2660 = vmatpush1.bf16.xpose.msra.mxu0 0
        %2661 = vmatprep.subr.bf16.mxu0 0
        %2662 = vmatpush1.bf16.xpose.msra.mxu0 0
        %2663 = vmatprep.subr.bf16.mxu0 0
        %2664 = vmatpush1.bf16.xpose.msra.mxu0 0
        %2665 = vmatprep.subr.bf16.mxu0 0
        %2666 = vmatpush1.bf16.xpose.msra.mxu0 0
        %2667 = vmatprep.subr.bf16.mxu0 0
        %2668 = vmatpush1.bf16.xpose.msra.mxu0 0
        %2669 = vmatprep.subr.bf16.mxu0 0
        %2670 = vmatpush1.bf16.xpose.msra.mxu0 %v2647
        %2671 = vmatprep.subr.bf16.mxu0 0
        %2672 = vmatpush2.bf16.xpose.msra.mxu0 0
        %2673 = vmatprep.subr.bf16.mxu0 0
        %2674 = vmatpush2.bf16.xpose.msra.mxu0 0
        %2675 = vmatprep.subr.bf16.mxu0 0
        %2676 = vmatpush2.bf16.xpose.msra.mxu0 0
        %2677 = vmatprep.subr.bf16.mxu0 0
        %2678 = vmatpush2.bf16.xpose.msra.mxu0 0
        %2679 = vmatprep.subr.bf16.mxu0 0
        %2680 = vmatpush2.bf16.xpose.msra.mxu0 0
        %2681 = vmatprep.subr.bf16.mxu0 0
        %2682 = vmatpush2.bf16.xpose.msra.mxu0 0
        %2683 = vmatprep.subr.bf16.mxu0 0
        %2684 = vmatpush2.bf16.xpose.msra.mxu0 0
        %2685 = vmatprep.subr.bf16.mxu0 0
        %2686 = vmatpush2.bf16.xpose.msra.mxu0 0
        %2687 = vmatprep.mubr.bf16.mxu0 0
        %2688 = vmatmul.mubr.bf16.gmra.mxu0 %v2643
        %v2689 = vpop.f32.mrf.mxu0
        %v2690 = vadd.f32 0.0, %v2689
        %v2691 = vpop.f32.mrf.mxu0
        %v2692 = vpop.f32.mrf.mxu0
        %v2693 = vadd.f32 0.0, %v2692
        %v2694 = vpop.f32.mrf.mxu0
        %2695 = vdwg.mxu0
        %2696 = vmatprep.subr.bf16.mxu0 0
        %2697 = vmatpush1.bf16.xpose.msra.mxu0 0
        %2698 = vmatprep.subr.bf16.mxu0 0
        %2699 = vmatpush1.bf16.xpose.msra.mxu0 0
        %2700 = vmatprep.subr.bf16.mxu0 0
        %2701 = vmatpush1.bf16.xpose.msra.mxu0 0
        %2702 = vmatprep.subr.bf16.mxu0 0
        %2703 = vmatpush1.bf16.xpose.msra.mxu0 0
        %2704 = vmatprep.subr.bf16.mxu0 0
        %2705 = vmatpush1.bf16.xpose.msra.mxu0 0
        %2706 = vmatprep.subr.bf16.mxu0 0
        %2707 = vmatpush1.bf16.xpose.msra.mxu0 0
        %2708 = vmatprep.subr.bf16.mxu0 0
        %2709 = vmatpush1.bf16.xpose.msra.mxu0 0
        %2710 = vmatprep.subr.bf16.mxu0 0
        %2711 = vmatpush1.bf16.xpose.msra.mxu0 %v2648
        %2712 = vmatprep.subr.bf16.mxu0 0
        %2713 = vmatpush2.bf16.xpose.msra.mxu0 0
        %2714 = vmatprep.subr.bf16.mxu0 0
        %2715 = vmatpush2.bf16.xpose.msra.mxu0 0
        %2716 = vmatprep.subr.bf16.mxu0 0
        %2717 = vmatpush2.bf16.xpose.msra.mxu0 0
        %2718 = vmatprep.subr.bf16.mxu0 0
        %2719 = vmatpush2.bf16.xpose.msra.mxu0 0
        %2720 = vmatprep.subr.bf16.mxu0 0
        %2721 = vmatpush2.bf16.xpose.msra.mxu0 0
        %2722 = vmatprep.subr.bf16.mxu0 0
        %2723 = vmatpush2.bf16.xpose.msra.mxu0 0
        %2724 = vmatprep.subr.bf16.mxu0 0
        %2725 = vmatpush2.bf16.xpose.msra.mxu0 0
        %2726 = vmatprep.subr.bf16.mxu0 0
        %2727 = vmatpush2.bf16.xpose.msra.mxu0 0
        %2728 = vmatprep.mubr.bf16.mxu0 0
        %2729 = vmatmul.mubr.bf16.gmra.mxu0 %v2644
        %v2730 = vpop.f32.mrf.mxu0
        %v2731 = vadd.f32 0.0, %v2730
        %v2732 = vpop.f32.mrf.mxu0
        %v2733 = vpop.f32.mrf.mxu0
        %v2734 = vadd.f32 0.0, %v2733
        %v2735 = vpop.f32.mrf.mxu0
        %2736 = vdwg.mxu0
        %2737 = vmatprep.subr.bf16.mxu0 0
        %2738 = vmatpush1.bf16.xpose.msra.mxu0 0
        %2739 = vmatprep.subr.bf16.mxu0 0
        %2740 = vmatpush1.bf16.xpose.msra.mxu0 0
        %2741 = vmatprep.subr.bf16.mxu0 0
        %2742 = vmatpush1.bf16.xpose.msra.mxu0 0
        %2743 = vmatprep.subr.bf16.mxu0 0
        %2744 = vmatpush1.bf16.xpose.msra.mxu0 0
        %2745 = vmatprep.subr.bf16.mxu0 0
        %2746 = vmatpush1.bf16.xpose.msra.mxu0 0
        %2747 = vmatprep.subr.bf16.mxu0 0
        %2748 = vmatpush1.bf16.xpose.msra.mxu0 0
        %2749 = vmatprep.subr.bf16.mxu0 0
        %2750 = vmatpush1.bf16.xpose.msra.mxu0 0
        %2751 = vmatprep.subr.bf16.mxu0 0
        %2752 = vmatpush1.bf16.xpose.msra.mxu0 %v2649
        %2753 = vmatprep.subr.bf16.mxu0 0
        %2754 = vmatpush2.bf16.xpose.msra.mxu0 0
        %2755 = vmatprep.subr.bf16.mxu0 0
        %2756 = vmatpush2.bf16.xpose.msra.mxu0 0
        %2757 = vmatprep.subr.bf16.mxu0 0
        %2758 = vmatpush2.bf16.xpose.msra.mxu0 0
        %2759 = vmatprep.subr.bf16.mxu0 0
        %2760 = vmatpush2.bf16.xpose.msra.mxu0 0
        %2761 = vmatprep.subr.bf16.mxu0 0
        %2762 = vmatpush2.bf16.xpose.msra.mxu0 0
        %2763 = vmatprep.subr.bf16.mxu0 0
        %2764 = vmatpush2.bf16.xpose.msra.mxu0 0
        %2765 = vmatprep.subr.bf16.mxu0 0
        %2766 = vmatpush2.bf16.xpose.msra.mxu0 0
        %2767 = vmatprep.subr.bf16.mxu0 0
        %2768 = vmatpush2.bf16.xpose.msra.mxu0 0
        %2769 = vmatprep.mubr.bf16.mxu0 0
        %2770 = vmatmul.mubr.bf16.gmra.mxu0 %v2645
        %v2771 = vpop.f32.mrf.mxu0
        %v2772 = vadd.f32 0.0, %v2771
        %v2773 = vpop.f32.mrf.mxu0
        %v2774 = vpop.f32.mrf.mxu0
        %v2775 = vadd.f32 0.0, %v2774
        %v2776 = vpop.f32.mrf.mxu0
        %2777 = vdwg.mxu0
        %2778 = vmatprep.subr.bf16.mxu0 0
        %2779 = vmatpush1.bf16.xpose.msra.mxu0 0
        %2780 = vmatprep.subr.bf16.mxu0 0
        %2781 = vmatpush1.bf16.xpose.msra.mxu0 0
        %2782 = vmatprep.subr.bf16.mxu0 0
        %2783 = vmatpush1.bf16.xpose.msra.mxu0 0
        %2784 = vmatprep.subr.bf16.mxu0 0
        %2785 = vmatpush1.bf16.xpose.msra.mxu0 0
        %2786 = vmatprep.subr.bf16.mxu0 0
        %2787 = vmatpush1.bf16.xpose.msra.mxu0 0
        %2788 = vmatprep.subr.bf16.mxu0 0
        %2789 = vmatpush1.bf16.xpose.msra.mxu0 0
        %2790 = vmatprep.subr.bf16.mxu0 0
        %2791 = vmatpush1.bf16.xpose.msra.mxu0 0
        %2792 = vmatprep.subr.bf16.mxu0 0
        %2793 = vmatpush1.bf16.xpose.msra.mxu0 %v2650
        %2794 = vmatprep.subr.bf16.mxu0 0
        %2795 = vmatpush2.bf16.xpose.msra.mxu0 0
        %2796 = vmatprep.subr.bf16.mxu0 0
        %2797 = vmatpush2.bf16.xpose.msra.mxu0 0
        %2798 = vmatprep.subr.bf16.mxu0 0
        %2799 = vmatpush2.bf16.xpose.msra.mxu0 0
        %2800 = vmatprep.subr.bf16.mxu0 0
        %2801 = vmatpush2.bf16.xpose.msra.mxu0 0
        %2802 = vmatprep.subr.bf16.mxu0 0
        %2803 = vmatpush2.bf16.xpose.msra.mxu0 0
        %2804 = vmatprep.subr.bf16.mxu0 0
        %2805 = vmatpush2.bf16.xpose.msra.mxu0 0
        %2806 = vmatprep.subr.bf16.mxu0 0
        %2807 = vmatpush2.bf16.xpose.msra.mxu0 0
        %2808 = vmatprep.subr.bf16.mxu0 0
        %2809 = vmatpush2.bf16.xpose.msra.mxu0 0
        %2810 = vmatprep.mubr.bf16.mxu0 0
        %2811 = vmatmul.mubr.bf16.gmra.mxu0 %v2646
        %v2812 = vpop.f32.mrf.mxu0
        %v2813 = vadd.f32 0.0, %v2812
        %v2814 = vpop.f32.mrf.mxu0
        %v2815 = vpop.f32.mrf.mxu0
        %v2816 = vadd.f32 0.0, %v2815
        %v2817 = vpop.f32.mrf.mxu0
        %2818 = vdwg.mxu0
        %v2819 = vsel %vm1680, %v2690, -inf
        %2820 = vmax.xlane.f32.xlu0 %v2819
        %v2821 = vpop.xlane.xlu0 %2820
        %v2822 = vsel %vm1680, %v2693, -inf
        %2823 = vmax.xlane.f32.xlu0 %v2822
        %v2824 = vpop.xlane.xlu0 %2823
        %v2825 = vsel %vm1680, %v2731, -inf
        %2826 = vmax.xlane.f32.xlu0 %v2825
        %v2827 = vpop.xlane.xlu0 %2826
        %v2828 = vsel %vm1680, %v2734, -inf
        %2829 = vmax.xlane.f32.xlu0 %v2828
        %v2830 = vpop.xlane.xlu0 %2829
        %v2831 = vsel %vm1680, %v2772, -inf
        %2832 = vmax.xlane.f32.xlu0 %v2831
        %v2833 = vpop.xlane.xlu0 %2832
        %v2834 = vsel %vm1680, %v2775, -inf
        %2835 = vmax.xlane.f32.xlu0 %v2834
        %v2836 = vpop.xlane.xlu0 %2835
        %v2837 = vsel %vm1680, %v2813, -inf
        %2838 = vmax.xlane.f32.xlu0 %v2837
        %v2839 = vpop.xlane.xlu0 %2838
        %v2840 = vsel %vm1680, %v2816, -inf
        %2841 = vmax.xlane.f32.xlu0 %v2840
        %v2842 = vpop.xlane.xlu0 %2841
        %v2843 = vsub.f32 %v2690, %v2821
        %v2844 = vsub.f32 %v2693, %v2824
        %v2845 = vsub.f32 %v2731, %v2827
        %v2846 = vsub.f32 %v2734, %v2830
        %v2847 = vsub.f32 %v2772, %v2833
        %v2848 = vsub.f32 %v2775, %v2836
        %v2849 = vsub.f32 %v2813, %v2839
        %v2850 = vsub.f32 %v2816, %v2842
        %v2851 = vmul.f32 %v2843, 1.442695
        %v2852 = vpow.pop %v2851
        %v2853 = vmul.f32 %v2844, 1.442695
        %v2854 = vpow.pop %v2853
        %v2855 = vmul.f32 %v2845, 1.442695
        %v2856 = vpow.pop %v2855
        %v2857 = vmul.f32 %v2846, 1.442695
        %v2858 = vpow.pop %v2857
        %v2859 = vmul.f32 %v2847, 1.442695
        %v2860 = vpow.pop %v2859
        %v2861 = vmul.f32 %v2848, 1.442695
        %v2862 = vpow.pop %v2861
        %v2863 = vmul.f32 %v2849, 1.442695
        %v2864 = vpow.pop %v2863
        %v2865 = vmul.f32 %v2850, 1.442695
        %v2866 = vpow.pop %v2865
        %v2867 = vsel %vm1680, %v2852, 0.0
        %2868 = vadd.xlane.f32.xlu0 %v2867
        %v2869 = vpop.xlane.xlu0 %2868
        %v2870 = vsel %vm1680, %v2854, 0.0
        %2871 = vadd.xlane.f32.xlu0 %v2870
        %v2872 = vpop.xlane.xlu0 %2871
        %v2873 = vsel %vm1680, %v2856, 0.0
        %2874 = vadd.xlane.f32.xlu0 %v2873
        %v2875 = vpop.xlane.xlu0 %2874
        %v2876 = vsel %vm1680, %v2858, 0.0
        %2877 = vadd.xlane.f32.xlu0 %v2876
        %v2878 = vpop.xlane.xlu0 %2877
        %v2879 = vsel %vm1680, %v2860, 0.0
        %2880 = vadd.xlane.f32.xlu0 %v2879
        %v2881 = vpop.xlane.xlu0 %2880
        %v2882 = vsel %vm1680, %v2862, 0.0
        %2883 = vadd.xlane.f32.xlu0 %v2882
        %v2884 = vpop.xlane.xlu0 %2883
        %v2885 = vsel %vm1680, %v2864, 0.0
        %2886 = vadd.xlane.f32.xlu0 %v2885
        %v2887 = vpop.xlane.xlu0 %2886
        %v2888 = vsel %vm1680, %v2866, 0.0
        %2889 = vadd.xlane.f32.xlu0 %v2888
        %v2890 = vpop.xlane.xlu0 %2889
        %v2891 = vrcp.pop %v2869
        %v2892 = vrcp.pop %v2872
        %v2893 = vrcp.pop %v2875
        %v2894 = vrcp.pop %v2878
        %v2895 = vrcp.pop %v2881
        %v2896 = vrcp.pop %v2884
        %v2897 = vrcp.pop %v2887
        %v2898 = vrcp.pop %v2890
        %v2899 = vmul.f32 %v2852, %v2891
        %v2900 = vmul.f32 %v2854, %v2892
        %v2901 = vmul.f32 %v2856, %v2893
        %v2902 = vmul.f32 %v2858, %v2894
        %v2903 = vmul.f32 %v2860, %v2895
        %v2904 = vmul.f32 %v2862, %v2896
        %v2905 = vmul.f32 %v2864, %v2897
        %v2906 = vmul.f32 %v2866, %v2898
        %v2907 = vpack.c.bf16 %v2900, %v2899
        %v2908 = vpack.c.bf16 %v2902, %v2901
        %v2909 = vpack.c.bf16 %v2904, %v2903
        %v2910 = vpack.c.bf16 %v2906, %v2905
        %v2912 = vsel %vm1680, %v2907, 0
        %2914 = vmatprep.subr.bf16.mxu0 0
        %2915 = vmatpush1.bf16.msra.mxu0 0
        %2916 = vmatprep.subr.bf16.mxu0 0
        %2917 = vmatpush1.bf16.msra.mxu0 0
        %2918 = vmatprep.subr.bf16.mxu0 0
        %2919 = vmatpush1.bf16.msra.mxu0 0
        %2920 = vmatprep.subr.bf16.mxu0 0
        %2921 = vmatpush1.bf16.msra.mxu0 0
        %2922 = vmatprep.subr.bf16.mxu0 0
        %2923 = vmatpush1.bf16.msra.mxu0 0
        %2924 = vmatprep.subr.bf16.mxu0 0
        %2925 = vmatpush1.bf16.msra.mxu0 0
        %2926 = vmatprep.subr.bf16.mxu0 0
        %2927 = vmatpush1.bf16.msra.mxu0 0
        %2928 = vmatprep.subr.bf16.mxu0 0
        %2929 = vmatpush1.bf16.msra.mxu0 %v2651
        %2930 = vmatprep.subr.bf16.mxu0 0
        %2931 = vmatpush2.bf16.msra.mxu0 0
        %2932 = vmatprep.subr.bf16.mxu0 0
        %2933 = vmatpush2.bf16.msra.mxu0 0
        %2934 = vmatprep.subr.bf16.mxu0 0
        %2935 = vmatpush2.bf16.msra.mxu0 0
        %2936 = vmatprep.subr.bf16.mxu0 0
        %2937 = vmatpush2.bf16.msra.mxu0 0
        %2938 = vmatprep.subr.bf16.mxu0 0
        %2939 = vmatpush2.bf16.msra.mxu0 0
        %2940 = vmatprep.subr.bf16.mxu0 0
        %2941 = vmatpush2.bf16.msra.mxu0 0
        %2942 = vmatprep.subr.bf16.mxu0 0
        %2943 = vmatpush2.bf16.msra.mxu0 0
        %2944 = vmatprep.subr.bf16.mxu0 0
        %2945 = vmatpush2.bf16.msra.mxu0 0
        %2946 = vmatprep.mubr.bf16.mxu0 0
        %2947 = vmatmul.mubr.bf16.gmra.mxu0 %v2912
        %v2948 = vpop.f32.mrf.mxu0
        %v2949 = vadd.f32 0.0, %v2948
        %v2950 = vpop.f32.mrf.mxu0
        %v2951 = vpop.f32.mrf.mxu0
        %v2952 = vadd.f32 0.0, %v2951
        %v2953 = vpop.f32.mrf.mxu0
        %2954 = vdwg.mxu0
        %v2956 = vsel %vm1680, %v2908, 0
        %2958 = vmatprep.subr.bf16.mxu0 0
        %2959 = vmatpush1.bf16.msra.mxu0 0
        %2960 = vmatprep.subr.bf16.mxu0 0
        %2961 = vmatpush1.bf16.msra.mxu0 0
        %2962 = vmatprep.subr.bf16.mxu0 0
        %2963 = vmatpush1.bf16.msra.mxu0 0
        %2964 = vmatprep.subr.bf16.mxu0 0
        %2965 = vmatpush1.bf16.msra.mxu0 0
        %2966 = vmatprep.subr.bf16.mxu0 0
        %2967 = vmatpush1.bf16.msra.mxu0 0
        %2968 = vmatprep.subr.bf16.mxu0 0
        %2969 = vmatpush1.bf16.msra.mxu0 0
        %2970 = vmatprep.subr.bf16.mxu0 0
        %2971 = vmatpush1.bf16.msra.mxu0 0
        %2972 = vmatprep.subr.bf16.mxu0 0
        %2973 = vmatpush1.bf16.msra.mxu0 %v2652
        %2974 = vmatprep.subr.bf16.mxu0 0
        %2975 = vmatpush2.bf16.msra.mxu0 0
        %2976 = vmatprep.subr.bf16.mxu0 0
        %2977 = vmatpush2.bf16.msra.mxu0 0
        %2978 = vmatprep.subr.bf16.mxu0 0
        %2979 = vmatpush2.bf16.msra.mxu0 0
        %2980 = vmatprep.subr.bf16.mxu0 0
        %2981 = vmatpush2.bf16.msra.mxu0 0
        %2982 = vmatprep.subr.bf16.mxu0 0
        %2983 = vmatpush2.bf16.msra.mxu0 0
        %2984 = vmatprep.subr.bf16.mxu0 0
        %2985 = vmatpush2.bf16.msra.mxu0 0
        %2986 = vmatprep.subr.bf16.mxu0 0
        %2987 = vmatpush2.bf16.msra.mxu0 0
        %2988 = vmatprep.subr.bf16.mxu0 0
        %2989 = vmatpush2.bf16.msra.mxu0 0
        %2990 = vmatprep.mubr.bf16.mxu0 0
        %2991 = vmatmul.mubr.bf16.gmra.mxu0 %v2956
        %v2992 = vpop.f32.mrf.mxu0
        %v2993 = vadd.f32 0.0, %v2992
        %v2994 = vpop.f32.mrf.mxu0
        %v2995 = vpop.f32.mrf.mxu0
        %v2996 = vadd.f32 0.0, %v2995
        %v2997 = vpop.f32.mrf.mxu0
        %2998 = vdwg.mxu0
        %v3000 = vsel %vm1680, %v2909, 0
        %3002 = vmatprep.subr.bf16.mxu0 0
        %3003 = vmatpush1.bf16.msra.mxu0 0
        %3004 = vmatprep.subr.bf16.mxu0 0
        %3005 = vmatpush1.bf16.msra.mxu0 0
        %3006 = vmatprep.subr.bf16.mxu0 0
        %3007 = vmatpush1.bf16.msra.mxu0 0
        %3008 = vmatprep.subr.bf16.mxu0 0
        %3009 = vmatpush1.bf16.msra.mxu0 0
        %3010 = vmatprep.subr.bf16.mxu0 0
        %3011 = vmatpush1.bf16.msra.mxu0 0
        %3012 = vmatprep.subr.bf16.mxu0 0
        %3013 = vmatpush1.bf16.msra.mxu0 0
        %3014 = vmatprep.subr.bf16.mxu0 0
        %3015 = vmatpush1.bf16.msra.mxu0 0
        %3016 = vmatprep.subr.bf16.mxu0 0
        %3017 = vmatpush1.bf16.msra.mxu0 %v2653
        %3018 = vmatprep.subr.bf16.mxu0 0
        %3019 = vmatpush2.bf16.msra.mxu0 0
        %3020 = vmatprep.subr.bf16.mxu0 0
        %3021 = vmatpush2.bf16.msra.mxu0 0
        %3022 = vmatprep.subr.bf16.mxu0 0
        %3023 = vmatpush2.bf16.msra.mxu0 0
        %3024 = vmatprep.subr.bf16.mxu0 0
        %3025 = vmatpush2.bf16.msra.mxu0 0
        %3026 = vmatprep.subr.bf16.mxu0 0
        %3027 = vmatpush2.bf16.msra.mxu0 0
        %3028 = vmatprep.subr.bf16.mxu0 0
        %3029 = vmatpush2.bf16.msra.mxu0 0
        %3030 = vmatprep.subr.bf16.mxu0 0
        %3031 = vmatpush2.bf16.msra.mxu0 0
        %3032 = vmatprep.subr.bf16.mxu0 0
        %3033 = vmatpush2.bf16.msra.mxu0 0
        %3034 = vmatprep.mubr.bf16.mxu0 0
        %3035 = vmatmul.mubr.bf16.gmra.mxu0 %v3000
        %v3036 = vpop.f32.mrf.mxu0
        %v3037 = vadd.f32 0.0, %v3036
        %v3038 = vpop.f32.mrf.mxu0
        %v3039 = vpop.f32.mrf.mxu0
        %v3040 = vadd.f32 0.0, %v3039
        %v3041 = vpop.f32.mrf.mxu0
        %3042 = vdwg.mxu0
        %v3044 = vsel %vm1680, %v2910, 0
        %3046 = vmatprep.subr.bf16.mxu0 0
        %3047 = vmatpush1.bf16.msra.mxu0 0
        %3048 = vmatprep.subr.bf16.mxu0 0
        %3049 = vmatpush1.bf16.msra.mxu0 0
        %3050 = vmatprep.subr.bf16.mxu0 0
        %3051 = vmatpush1.bf16.msra.mxu0 0
        %3052 = vmatprep.subr.bf16.mxu0 0
        %3053 = vmatpush1.bf16.msra.mxu0 0
        %3054 = vmatprep.subr.bf16.mxu0 0
        %3055 = vmatpush1.bf16.msra.mxu0 0
        %3056 = vmatprep.subr.bf16.mxu0 0
        %3057 = vmatpush1.bf16.msra.mxu0 0
        %3058 = vmatprep.subr.bf16.mxu0 0
        %3059 = vmatpush1.bf16.msra.mxu0 0
        %3060 = vmatprep.subr.bf16.mxu0 0
        %3061 = vmatpush1.bf16.msra.mxu0 %v2654
        %3062 = vmatprep.subr.bf16.mxu0 0
        %3063 = vmatpush2.bf16.msra.mxu0 0
        %3064 = vmatprep.subr.bf16.mxu0 0
        %3065 = vmatpush2.bf16.msra.mxu0 0
        %3066 = vmatprep.subr.bf16.mxu0 0
        %3067 = vmatpush2.bf16.msra.mxu0 0
        %3068 = vmatprep.subr.bf16.mxu0 0
        %3069 = vmatpush2.bf16.msra.mxu0 0
        %3070 = vmatprep.subr.bf16.mxu0 0
        %3071 = vmatpush2.bf16.msra.mxu0 0
        %3072 = vmatprep.subr.bf16.mxu0 0
        %3073 = vmatpush2.bf16.msra.mxu0 0
        %3074 = vmatprep.subr.bf16.mxu0 0
        %3075 = vmatpush2.bf16.msra.mxu0 0
        %3076 = vmatprep.subr.bf16.mxu0 0
        %3077 = vmatpush2.bf16.msra.mxu0 0
        %3078 = vmatprep.mubr.bf16.mxu0 0
        %3079 = vmatmul.mubr.bf16.gmra.mxu0 %v3044
        %v3080 = vpop.f32.mrf.mxu0
        %v3081 = vadd.f32 0.0, %v3080
        %v3082 = vpop.f32.mrf.mxu0
        %v3083 = vpop.f32.mrf.mxu0
        %v3084 = vadd.f32 0.0, %v3083
        %v3085 = vpop.f32.mrf.mxu0
        %3086 = vdwg.mxu0
        %v3087 = vpack.c.bf16 %v2952, %v2949
        %v3088 = vpack.c.bf16 %v2996, %v2993
        %v3089 = vpack.c.bf16 %v3040, %v3037
        %v3090 = vpack.c.bf16 %v3084, %v3081
        %v3107 = vunpack.c.l.b16 %v1465
        %v3108 = vunpack.c.l.b16 %v1466
        %v3109 = vunpack.c.l.b16 %v1467
        %v3110 = vunpack.c.l.b16 %v1468
        %v3111 = vunpack.c.l.b16 %v1469
        %v3112 = vunpack.c.l.b16 %v1470
        %v3113 = vunpack.c.l.b16 %v1471
        %v3114 = vunpack.c.l.b16 %v1472
        %v3115 = vunpack.c.l.b16 %v1473
        %v3116 = vunpack.c.l.b16 %v1474
        %v3117 = vunpack.c.l.b16 %v1475
        %v3118 = vunpack.c.l.b16 %v1476
        %v3119 = vunpack.c.l.b16 %v1477
        %v3120 = vunpack.c.l.b16 %v1478
        %v3121 = vunpack.c.l.b16 %v1479
        %v3122 = vunpack.c.l.b16 %v1480
        %v3123 = vpack.c.b16 %v3108, %v3107
        %v3124 = vpack.c.b16 %v3110, %v3109
        %v3125 = vpack.c.b16 %v3112, %v3111
        %v3126 = vpack.c.b16 %v3114, %v3113
        %v3127 = vpack.c.b16 %v3116, %v3115
        %v3128 = vpack.c.b16 %v3118, %v3117
        %v3129 = vpack.c.b16 %v3120, %v3119
        %v3130 = vpack.c.b16 %v3122, %v3121
        %3139 = vmatprep.subr.bf16.mxu0 0
        %3140 = vmatpush1.bf16.msra.mxu0 %v3130
        %3141 = vmatprep.subr.bf16.mxu0 0
        %3142 = vmatpush1.bf16.msra.mxu0 %v3129
        %3143 = vmatprep.subr.bf16.mxu0 0
        %3144 = vmatpush1.bf16.msra.mxu0 %v3128
        %3145 = vmatprep.subr.bf16.mxu0 0
        %3146 = vmatpush1.bf16.msra.mxu0 %v3127
        %3147 = vmatprep.subr.bf16.mxu0 0
        %3148 = vmatpush1.bf16.msra.mxu0 %v3126
        %3149 = vmatprep.subr.bf16.mxu0 0
        %3150 = vmatpush1.bf16.msra.mxu0 %v3125
        %3151 = vmatprep.subr.bf16.mxu0 0
        %3152 = vmatpush1.bf16.msra.mxu0 %v3124
        %3153 = vmatprep.subr.bf16.mxu0 0
        %3154 = vmatpush1.bf16.msra.mxu0 %v3123
        %3155 = vmatprep.subr.bf16.mxu0 0
        %3156 = vmatpush2.bf16.msra.mxu0 0
        %3157 = vmatprep.subr.bf16.mxu0 0
        %3158 = vmatpush2.bf16.msra.mxu0 0
        %3159 = vmatprep.subr.bf16.mxu0 0
        %3160 = vmatpush2.bf16.msra.mxu0 0
        %3161 = vmatprep.subr.bf16.mxu0 0
        %3162 = vmatpush2.bf16.msra.mxu0 0
        %3163 = vmatprep.subr.bf16.mxu0 0
        %3164 = vmatpush2.bf16.msra.mxu0 0
        %3165 = vmatprep.subr.bf16.mxu0 0
        %3166 = vmatpush2.bf16.msra.mxu0 0
        %3167 = vmatprep.subr.bf16.mxu0 0
        %3168 = vmatpush2.bf16.msra.mxu0 0
        %3169 = vmatprep.subr.bf16.mxu0 0
        %3170 = vmatpush2.bf16.msra.mxu0 0
        %3171 = vmatprep.mubr.bf16.mxu0 0
        %3172 = vmatmul.mubr.bf16.gmra.mxu0 %v3087
        %v3173 = vpop.f32.mrf.mxu0
        %v3174 = vadd.f32 0.0, %v3173
        %v3175 = vpop.f32.mrf.mxu0
        %v3176 = vpop.f32.mrf.mxu0
        %v3177 = vadd.f32 0.0, %v3176
        %v3178 = vpop.f32.mrf.mxu0
        %3179 = vmatprep.mubr.bf16.mxu0 0
        %3180 = vmatmul.mubr.bf16.gmra.mxu0 %v3088
        %v3181 = vpop.f32.mrf.mxu0
        %v3182 = vadd.f32 0.0, %v3181
        %v3183 = vpop.f32.mrf.mxu0
        %v3184 = vpop.f32.mrf.mxu0
        %v3185 = vadd.f32 0.0, %v3184
        %v3186 = vpop.f32.mrf.mxu0
        %3187 = vmatprep.mubr.bf16.mxu0 0
        %3188 = vmatmul.mubr.bf16.gmra.mxu0 %v3089
        %v3189 = vpop.f32.mrf.mxu0
        %v3190 = vadd.f32 0.0, %v3189
        %v3191 = vpop.f32.mrf.mxu0
        %v3192 = vpop.f32.mrf.mxu0
        %v3193 = vadd.f32 0.0, %v3192
        %v3194 = vpop.f32.mrf.mxu0
        %3195 = vmatprep.mubr.bf16.mxu0 0
        %3196 = vmatmul.mubr.bf16.gmra.mxu0 %v3090
        %v3197 = vpop.f32.mrf.mxu0
        %v3198 = vadd.f32 0.0, %v3197
        %v3199 = vpop.f32.mrf.mxu0
        %v3200 = vpop.f32.mrf.mxu0
        %v3201 = vadd.f32 0.0, %v3200
        %v3202 = vpop.f32.mrf.mxu0
        %3203 = vdwg.mxu0
        %v3204 = vadd.f32 %v2635, %v3174
        %v3205 = vadd.f32 %v2636, %v3177
        %v3206 = vadd.f32 %v2637, %v3182
        %v3207 = vadd.f32 %v2638, %v3185
        %v3208 = vadd.f32 %v2639, %v3190
        %v3209 = vadd.f32 %v2640, %v3193
        %v3210 = vadd.f32 %v2641, %v3198
        %v3211 = vadd.f32 %v2642, %v3201
        %v3212 = vpack.c.bf16 %v1109, %v1105
        %v3213 = vpack.c.bf16 %v1119, %v1115
        %v3214 = vpack.c.bf16 %v1129, %v1125
        %v3215 = vpack.c.bf16 %v1139, %v1135
        %v3216 = vpack.c.bf16 %v1255, %v1251
        %v3217 = vpack.c.bf16 %v1265, %v1261
        %v3218 = vpack.c.bf16 %v1275, %v1271
        %v3219 = vpack.c.bf16 %v1285, %v1281
        %v3220 = vpack.c.bf16 %v1401, %v1397
        %v3221 = vpack.c.bf16 %v1411, %v1407
        %v3222 = vpack.c.bf16 %v1421, %v1417
        %v3223 = vpack.c.bf16 %v1431, %v1427
        %3224 = vmatprep.subr.bf16.mxu0 0
        %3225 = vmatpush1.bf16.xpose.msra.mxu0 0
        %3226 = vmatprep.subr.bf16.mxu0 0
        %3227 = vmatpush1.bf16.xpose.msra.mxu0 0
        %3228 = vmatprep.subr.bf16.mxu0 0
        %3229 = vmatpush1.bf16.xpose.msra.mxu0 0
        %3230 = vmatprep.subr.bf16.mxu0 0
        %3231 = vmatpush1.bf16.xpose.msra.mxu0 0
        %3232 = vmatprep.subr.bf16.mxu0 0
        %3233 = vmatpush1.bf16.xpose.msra.mxu0 0
        %3234 = vmatprep.subr.bf16.mxu0 0
        %3235 = vmatpush1.bf16.xpose.msra.mxu0 0
        %3236 = vmatprep.subr.bf16.mxu0 0
        %3237 = vmatpush1.bf16.xpose.msra.mxu0 0
        %3238 = vmatprep.subr.bf16.mxu0 0
        %3239 = vmatpush1.bf16.xpose.msra.mxu0 %v3216
        %3240 = vmatprep.subr.bf16.mxu0 0
        %3241 = vmatpush2.bf16.xpose.msra.mxu0 0
        %3242 = vmatprep.subr.bf16.mxu0 0
        %3243 = vmatpush2.bf16.xpose.msra.mxu0 0
        %3244 = vmatprep.subr.bf16.mxu0 0
        %3245 = vmatpush2.bf16.xpose.msra.mxu0 0
        %3246 = vmatprep.subr.bf16.mxu0 0
        %3247 = vmatpush2.bf16.xpose.msra.mxu0 0
        %3248 = vmatprep.subr.bf16.mxu0 0
        %3249 = vmatpush2.bf16.xpose.msra.mxu0 0
        %3250 = vmatprep.subr.bf16.mxu0 0
        %3251 = vmatpush2.bf16.xpose.msra.mxu0 0
        %3252 = vmatprep.subr.bf16.mxu0 0
        %3253 = vmatpush2.bf16.xpose.msra.mxu0 0
        %3254 = vmatprep.subr.bf16.mxu0 0
        %3255 = vmatpush2.bf16.xpose.msra.mxu0 0
        %3256 = vmatprep.mubr.bf16.mxu0 0
        %3257 = vmatmul.mubr.bf16.gmra.mxu0 %v3212
        %v3258 = vpop.f32.mrf.mxu0
        %v3259 = vadd.f32 0.0, %v3258
        %v3260 = vpop.f32.mrf.mxu0
        %v3261 = vpop.f32.mrf.mxu0
        %v3262 = vadd.f32 0.0, %v3261
        %v3263 = vpop.f32.mrf.mxu0
        %3264 = vdwg.mxu0
        %3265 = vmatprep.subr.bf16.mxu0 0
        %3266 = vmatpush1.bf16.xpose.msra.mxu0 0
        %3267 = vmatprep.subr.bf16.mxu0 0
        %3268 = vmatpush1.bf16.xpose.msra.mxu0 0
        %3269 = vmatprep.subr.bf16.mxu0 0
        %3270 = vmatpush1.bf16.xpose.msra.mxu0 0
        %3271 = vmatprep.subr.bf16.mxu0 0
        %3272 = vmatpush1.bf16.xpose.msra.mxu0 0
        %3273 = vmatprep.subr.bf16.mxu0 0
        %3274 = vmatpush1.bf16.xpose.msra.mxu0 0
        %3275 = vmatprep.subr.bf16.mxu0 0
        %3276 = vmatpush1.bf16.xpose.msra.mxu0 0
        %3277 = vmatprep.subr.bf16.mxu0 0
        %3278 = vmatpush1.bf16.xpose.msra.mxu0 0
        %3279 = vmatprep.subr.bf16.mxu0 0
        %3280 = vmatpush1.bf16.xpose.msra.mxu0 %v3217
        %3281 = vmatprep.subr.bf16.mxu0 0
        %3282 = vmatpush2.bf16.xpose.msra.mxu0 0
        %3283 = vmatprep.subr.bf16.mxu0 0
        %3284 = vmatpush2.bf16.xpose.msra.mxu0 0
        %3285 = vmatprep.subr.bf16.mxu0 0
        %3286 = vmatpush2.bf16.xpose.msra.mxu0 0
        %3287 = vmatprep.subr.bf16.mxu0 0
        %3288 = vmatpush2.bf16.xpose.msra.mxu0 0
        %3289 = vmatprep.subr.bf16.mxu0 0
        %3290 = vmatpush2.bf16.xpose.msra.mxu0 0
        %3291 = vmatprep.subr.bf16.mxu0 0
        %3292 = vmatpush2.bf16.xpose.msra.mxu0 0
        %3293 = vmatprep.subr.bf16.mxu0 0
        %3294 = vmatpush2.bf16.xpose.msra.mxu0 0
        %3295 = vmatprep.subr.bf16.mxu0 0
        %3296 = vmatpush2.bf16.xpose.msra.mxu0 0
        %3297 = vmatprep.mubr.bf16.mxu0 0
        %3298 = vmatmul.mubr.bf16.gmra.mxu0 %v3213
        %v3299 = vpop.f32.mrf.mxu0
        %v3300 = vadd.f32 0.0, %v3299
        %v3301 = vpop.f32.mrf.mxu0
        %v3302 = vpop.f32.mrf.mxu0
        %v3303 = vadd.f32 0.0, %v3302
        %v3304 = vpop.f32.mrf.mxu0
        %3305 = vdwg.mxu0
        %3306 = vmatprep.subr.bf16.mxu0 0
        %3307 = vmatpush1.bf16.xpose.msra.mxu0 0
        %3308 = vmatprep.subr.bf16.mxu0 0
        %3309 = vmatpush1.bf16.xpose.msra.mxu0 0
        %3310 = vmatprep.subr.bf16.mxu0 0
        %3311 = vmatpush1.bf16.xpose.msra.mxu0 0
        %3312 = vmatprep.subr.bf16.mxu0 0
        %3313 = vmatpush1.bf16.xpose.msra.mxu0 0
        %3314 = vmatprep.subr.bf16.mxu0 0
        %3315 = vmatpush1.bf16.xpose.msra.mxu0 0
        %3316 = vmatprep.subr.bf16.mxu0 0
        %3317 = vmatpush1.bf16.xpose.msra.mxu0 0
        %3318 = vmatprep.subr.bf16.mxu0 0
        %3319 = vmatpush1.bf16.xpose.msra.mxu0 0
        %3320 = vmatprep.subr.bf16.mxu0 0
        %3321 = vmatpush1.bf16.xpose.msra.mxu0 %v3218
        %3322 = vmatprep.subr.bf16.mxu0 0
        %3323 = vmatpush2.bf16.xpose.msra.mxu0 0
        %3324 = vmatprep.subr.bf16.mxu0 0
        %3325 = vmatpush2.bf16.xpose.msra.mxu0 0
        %3326 = vmatprep.subr.bf16.mxu0 0
        %3327 = vmatpush2.bf16.xpose.msra.mxu0 0
        %3328 = vmatprep.subr.bf16.mxu0 0
        %3329 = vmatpush2.bf16.xpose.msra.mxu0 0
        %3330 = vmatprep.subr.bf16.mxu0 0
        %3331 = vmatpush2.bf16.xpose.msra.mxu0 0
        %3332 = vmatprep.subr.bf16.mxu0 0
        %3333 = vmatpush2.bf16.xpose.msra.mxu0 0
        %3334 = vmatprep.subr.bf16.mxu0 0
        %3335 = vmatpush2.bf16.xpose.msra.mxu0 0
        %3336 = vmatprep.subr.bf16.mxu0 0
        %3337 = vmatpush2.bf16.xpose.msra.mxu0 0
        %3338 = vmatprep.mubr.bf16.mxu0 0
        %3339 = vmatmul.mubr.bf16.gmra.mxu0 %v3214
        %v3340 = vpop.f32.mrf.mxu0
        %v3341 = vadd.f32 0.0, %v3340
        %v3342 = vpop.f32.mrf.mxu0
        %v3343 = vpop.f32.mrf.mxu0
        %v3344 = vadd.f32 0.0, %v3343
        %v3345 = vpop.f32.mrf.mxu0
        %3346 = vdwg.mxu0
        %3347 = vmatprep.subr.bf16.mxu0 0
        %3348 = vmatpush1.bf16.xpose.msra.mxu0 0
        %3349 = vmatprep.subr.bf16.mxu0 0
        %3350 = vmatpush1.bf16.xpose.msra.mxu0 0
        %3351 = vmatprep.subr.bf16.mxu0 0
        %3352 = vmatpush1.bf16.xpose.msra.mxu0 0
        %3353 = vmatprep.subr.bf16.mxu0 0
        %3354 = vmatpush1.bf16.xpose.msra.mxu0 0
        %3355 = vmatprep.subr.bf16.mxu0 0
        %3356 = vmatpush1.bf16.xpose.msra.mxu0 0
        %3357 = vmatprep.subr.bf16.mxu0 0
        %3358 = vmatpush1.bf16.xpose.msra.mxu0 0
        %3359 = vmatprep.subr.bf16.mxu0 0
        %3360 = vmatpush1.bf16.xpose.msra.mxu0 0
        %3361 = vmatprep.subr.bf16.mxu0 0
        %3362 = vmatpush1.bf16.xpose.msra.mxu0 %v3219
        %3363 = vmatprep.subr.bf16.mxu0 0
        %3364 = vmatpush2.bf16.xpose.msra.mxu0 0
        %3365 = vmatprep.subr.bf16.mxu0 0
        %3366 = vmatpush2.bf16.xpose.msra.mxu0 0
        %3367 = vmatprep.subr.bf16.mxu0 0
        %3368 = vmatpush2.bf16.xpose.msra.mxu0 0
        %3369 = vmatprep.subr.bf16.mxu0 0
        %3370 = vmatpush2.bf16.xpose.msra.mxu0 0
        %3371 = vmatprep.subr.bf16.mxu0 0
        %3372 = vmatpush2.bf16.xpose.msra.mxu0 0
        %3373 = vmatprep.subr.bf16.mxu0 0
        %3374 = vmatpush2.bf16.xpose.msra.mxu0 0
        %3375 = vmatprep.subr.bf16.mxu0 0
        %3376 = vmatpush2.bf16.xpose.msra.mxu0 0
        %3377 = vmatprep.subr.bf16.mxu0 0
        %3378 = vmatpush2.bf16.xpose.msra.mxu0 0
        %3379 = vmatprep.mubr.bf16.mxu0 0
        %3380 = vmatmul.mubr.bf16.gmra.mxu0 %v3215
        %v3381 = vpop.f32.mrf.mxu0
        %v3382 = vadd.f32 0.0, %v3381
        %v3383 = vpop.f32.mrf.mxu0
        %v3384 = vpop.f32.mrf.mxu0
        %v3385 = vadd.f32 0.0, %v3384
        %v3386 = vpop.f32.mrf.mxu0
        %3387 = vdwg.mxu0
        %v3388 = vsel %vm1680, %v3259, -inf
        %3389 = vmax.xlane.f32.xlu0 %v3388
        %v3390 = vpop.xlane.xlu0 %3389
        %v3391 = vsel %vm1680, %v3262, -inf
        %3392 = vmax.xlane.f32.xlu0 %v3391
        %v3393 = vpop.xlane.xlu0 %3392
        %v3394 = vsel %vm1680, %v3300, -inf
        %3395 = vmax.xlane.f32.xlu0 %v3394
        %v3396 = vpop.xlane.xlu0 %3395
        %v3397 = vsel %vm1680, %v3303, -inf
        %3398 = vmax.xlane.f32.xlu0 %v3397
        %v3399 = vpop.xlane.xlu0 %3398
        %v3400 = vsel %vm1680, %v3341, -inf
        %3401 = vmax.xlane.f32.xlu0 %v3400
        %v3402 = vpop.xlane.xlu0 %3401
        %v3403 = vsel %vm1680, %v3344, -inf
        %3404 = vmax.xlane.f32.xlu0 %v3403
        %v3405 = vpop.xlane.xlu0 %3404
        %v3406 = vsel %vm1680, %v3382, -inf
        %3407 = vmax.xlane.f32.xlu0 %v3406
        %v3408 = vpop.xlane.xlu0 %3407
        %v3409 = vsel %vm1680, %v3385, -inf
        %3410 = vmax.xlane.f32.xlu0 %v3409
        %v3411 = vpop.xlane.xlu0 %3410
        %v3412 = vsub.f32 %v3259, %v3390
        %v3413 = vsub.f32 %v3262, %v3393
        %v3414 = vsub.f32 %v3300, %v3396
        %v3415 = vsub.f32 %v3303, %v3399
        %v3416 = vsub.f32 %v3341, %v3402
        %v3417 = vsub.f32 %v3344, %v3405
        %v3418 = vsub.f32 %v3382, %v3408
        %v3419 = vsub.f32 %v3385, %v3411
        %v3420 = vmul.f32 %v3412, 1.442695
        %v3421 = vpow.pop %v3420
        %v3422 = vmul.f32 %v3413, 1.442695
        %v3423 = vpow.pop %v3422
        %v3424 = vmul.f32 %v3414, 1.442695
        %v3425 = vpow.pop %v3424
        %v3426 = vmul.f32 %v3415, 1.442695
        %v3427 = vpow.pop %v3426
        %v3428 = vmul.f32 %v3416, 1.442695
        %v3429 = vpow.pop %v3428
        %v3430 = vmul.f32 %v3417, 1.442695
        %v3431 = vpow.pop %v3430
        %v3432 = vmul.f32 %v3418, 1.442695
        %v3433 = vpow.pop %v3432
        %v3434 = vmul.f32 %v3419, 1.442695
        %v3435 = vpow.pop %v3434
        %v3436 = vsel %vm1680, %v3421, 0.0
        %3437 = vadd.xlane.f32.xlu0 %v3436
        %v3438 = vpop.xlane.xlu0 %3437
        %v3439 = vsel %vm1680, %v3423, 0.0
        %3440 = vadd.xlane.f32.xlu0 %v3439
        %v3441 = vpop.xlane.xlu0 %3440
        %v3442 = vsel %vm1680, %v3425, 0.0
        %3443 = vadd.xlane.f32.xlu0 %v3442
        %v3444 = vpop.xlane.xlu0 %3443
        %v3445 = vsel %vm1680, %v3427, 0.0
        %3446 = vadd.xlane.f32.xlu0 %v3445
        %v3447 = vpop.xlane.xlu0 %3446
        %v3448 = vsel %vm1680, %v3429, 0.0
        %3449 = vadd.xlane.f32.xlu0 %v3448
        %v3450 = vpop.xlane.xlu0 %3449
        %v3451 = vsel %vm1680, %v3431, 0.0
        %3452 = vadd.xlane.f32.xlu0 %v3451
        %v3453 = vpop.xlane.xlu0 %3452
        %v3454 = vsel %vm1680, %v3433, 0.0
        %3455 = vadd.xlane.f32.xlu0 %v3454
        %v3456 = vpop.xlane.xlu0 %3455
        %v3457 = vsel %vm1680, %v3435, 0.0
        %3458 = vadd.xlane.f32.xlu0 %v3457
        %v3459 = vpop.xlane.xlu0 %3458
        %v3460 = vrcp.pop %v3438
        %v3461 = vrcp.pop %v3441
        %v3462 = vrcp.pop %v3444
        %v3463 = vrcp.pop %v3447
        %v3464 = vrcp.pop %v3450
        %v3465 = vrcp.pop %v3453
        %v3466 = vrcp.pop %v3456
        %v3467 = vrcp.pop %v3459
        %v3468 = vmul.f32 %v3421, %v3460
        %v3469 = vmul.f32 %v3423, %v3461
        %v3470 = vmul.f32 %v3425, %v3462
        %v3471 = vmul.f32 %v3427, %v3463
        %v3472 = vmul.f32 %v3429, %v3464
        %v3473 = vmul.f32 %v3431, %v3465
        %v3474 = vmul.f32 %v3433, %v3466
        %v3475 = vmul.f32 %v3435, %v3467
        %v3476 = vpack.c.bf16 %v3469, %v3468
        %v3477 = vpack.c.bf16 %v3471, %v3470
        %v3478 = vpack.c.bf16 %v3473, %v3472
        %v3479 = vpack.c.bf16 %v3475, %v3474
        %v3481 = vsel %vm1680, %v3476, 0
        %3483 = vmatprep.subr.bf16.mxu0 0
        %3484 = vmatpush1.bf16.msra.mxu0 0
        %3485 = vmatprep.subr.bf16.mxu0 0
        %3486 = vmatpush1.bf16.msra.mxu0 0
        %3487 = vmatprep.subr.bf16.mxu0 0
        %3488 = vmatpush1.bf16.msra.mxu0 0
        %3489 = vmatprep.subr.bf16.mxu0 0
        %3490 = vmatpush1.bf16.msra.mxu0 0
        %3491 = vmatprep.subr.bf16.mxu0 0
        %3492 = vmatpush1.bf16.msra.mxu0 0
        %3493 = vmatprep.subr.bf16.mxu0 0
        %3494 = vmatpush1.bf16.msra.mxu0 0
        %3495 = vmatprep.subr.bf16.mxu0 0
        %3496 = vmatpush1.bf16.msra.mxu0 0
        %3497 = vmatprep.subr.bf16.mxu0 0
        %3498 = vmatpush1.bf16.msra.mxu0 %v3220
        %3499 = vmatprep.subr.bf16.mxu0 0
        %3500 = vmatpush2.bf16.msra.mxu0 0
        %3501 = vmatprep.subr.bf16.mxu0 0
        %3502 = vmatpush2.bf16.msra.mxu0 0
        %3503 = vmatprep.subr.bf16.mxu0 0
        %3504 = vmatpush2.bf16.msra.mxu0 0
        %3505 = vmatprep.subr.bf16.mxu0 0
        %3506 = vmatpush2.bf16.msra.mxu0 0
        %3507 = vmatprep.subr.bf16.mxu0 0
        %3508 = vmatpush2.bf16.msra.mxu0 0
        %3509 = vmatprep.subr.bf16.mxu0 0
        %3510 = vmatpush2.bf16.msra.mxu0 0
        %3511 = vmatprep.subr.bf16.mxu0 0
        %3512 = vmatpush2.bf16.msra.mxu0 0
        %3513 = vmatprep.subr.bf16.mxu0 0
        %3514 = vmatpush2.bf16.msra.mxu0 0
        %3515 = vmatprep.mubr.bf16.mxu0 0
        %3516 = vmatmul.mubr.bf16.gmra.mxu0 %v3481
        %v3517 = vpop.f32.mrf.mxu0
        %v3518 = vadd.f32 0.0, %v3517
        %v3519 = vpop.f32.mrf.mxu0
        %v3520 = vpop.f32.mrf.mxu0
        %v3521 = vadd.f32 0.0, %v3520
        %v3522 = vpop.f32.mrf.mxu0
        %3523 = vdwg.mxu0
        %v3525 = vsel %vm1680, %v3477, 0
        %3527 = vmatprep.subr.bf16.mxu0 0
        %3528 = vmatpush1.bf16.msra.mxu0 0
        %3529 = vmatprep.subr.bf16.mxu0 0
        %3530 = vmatpush1.bf16.msra.mxu0 0
        %3531 = vmatprep.subr.bf16.mxu0 0
        %3532 = vmatpush1.bf16.msra.mxu0 0
        %3533 = vmatprep.subr.bf16.mxu0 0
        %3534 = vmatpush1.bf16.msra.mxu0 0
        %3535 = vmatprep.subr.bf16.mxu0 0
        %3536 = vmatpush1.bf16.msra.mxu0 0
        %3537 = vmatprep.subr.bf16.mxu0 0
        %3538 = vmatpush1.bf16.msra.mxu0 0
        %3539 = vmatprep.subr.bf16.mxu0 0
        %3540 = vmatpush1.bf16.msra.mxu0 0
        %3541 = vmatprep.subr.bf16.mxu0 0
        %3542 = vmatpush1.bf16.msra.mxu0 %v3221
        %3543 = vmatprep.subr.bf16.mxu0 0
        %3544 = vmatpush2.bf16.msra.mxu0 0
        %3545 = vmatprep.subr.bf16.mxu0 0
        %3546 = vmatpush2.bf16.msra.mxu0 0
        %3547 = vmatprep.subr.bf16.mxu0 0
        %3548 = vmatpush2.bf16.msra.mxu0 0
        %3549 = vmatprep.subr.bf16.mxu0 0
        %3550 = vmatpush2.bf16.msra.mxu0 0
        %3551 = vmatprep.subr.bf16.mxu0 0
        %3552 = vmatpush2.bf16.msra.mxu0 0
        %3553 = vmatprep.subr.bf16.mxu0 0
        %3554 = vmatpush2.bf16.msra.mxu0 0
        %3555 = vmatprep.subr.bf16.mxu0 0
        %3556 = vmatpush2.bf16.msra.mxu0 0
        %3557 = vmatprep.subr.bf16.mxu0 0
        %3558 = vmatpush2.bf16.msra.mxu0 0
        %3559 = vmatprep.mubr.bf16.mxu0 0
        %3560 = vmatmul.mubr.bf16.gmra.mxu0 %v3525
        %v3561 = vpop.f32.mrf.mxu0
        %v3562 = vadd.f32 0.0, %v3561
        %v3563 = vpop.f32.mrf.mxu0
        %v3564 = vpop.f32.mrf.mxu0
        %v3565 = vadd.f32 0.0, %v3564
        %v3566 = vpop.f32.mrf.mxu0
        %3567 = vdwg.mxu0
        %v3569 = vsel %vm1680, %v3478, 0
        %3571 = vmatprep.subr.bf16.mxu0 0
        %3572 = vmatpush1.bf16.msra.mxu0 0
        %3573 = vmatprep.subr.bf16.mxu0 0
        %3574 = vmatpush1.bf16.msra.mxu0 0
        %3575 = vmatprep.subr.bf16.mxu0 0
        %3576 = vmatpush1.bf16.msra.mxu0 0
        %3577 = vmatprep.subr.bf16.mxu0 0
        %3578 = vmatpush1.bf16.msra.mxu0 0
        %3579 = vmatprep.subr.bf16.mxu0 0
        %3580 = vmatpush1.bf16.msra.mxu0 0
        %3581 = vmatprep.subr.bf16.mxu0 0
        %3582 = vmatpush1.bf16.msra.mxu0 0
        %3583 = vmatprep.subr.bf16.mxu0 0
        %3584 = vmatpush1.bf16.msra.mxu0 0
        %3585 = vmatprep.subr.bf16.mxu0 0
        %3586 = vmatpush1.bf16.msra.mxu0 %v3222
        %3587 = vmatprep.subr.bf16.mxu0 0
        %3588 = vmatpush2.bf16.msra.mxu0 0
        %3589 = vmatprep.subr.bf16.mxu0 0
        %3590 = vmatpush2.bf16.msra.mxu0 0
        %3591 = vmatprep.subr.bf16.mxu0 0
        %3592 = vmatpush2.bf16.msra.mxu0 0
        %3593 = vmatprep.subr.bf16.mxu0 0
        %3594 = vmatpush2.bf16.msra.mxu0 0
        %3595 = vmatprep.subr.bf16.mxu0 0
        %3596 = vmatpush2.bf16.msra.mxu0 0
        %3597 = vmatprep.subr.bf16.mxu0 0
        %3598 = vmatpush2.bf16.msra.mxu0 0
        %3599 = vmatprep.subr.bf16.mxu0 0
        %3600 = vmatpush2.bf16.msra.mxu0 0
        %3601 = vmatprep.subr.bf16.mxu0 0
        %3602 = vmatpush2.bf16.msra.mxu0 0
        %3603 = vmatprep.mubr.bf16.mxu0 0
        %3604 = vmatmul.mubr.bf16.gmra.mxu0 %v3569
        %v3605 = vpop.f32.mrf.mxu0
        %v3606 = vadd.f32 0.0, %v3605
        %v3607 = vpop.f32.mrf.mxu0
        %v3608 = vpop.f32.mrf.mxu0
        %v3609 = vadd.f32 0.0, %v3608
        %v3610 = vpop.f32.mrf.mxu0
        %3611 = vdwg.mxu0
        %v3613 = vsel %vm1680, %v3479, 0
        %3615 = vmatprep.subr.bf16.mxu0 0
        %3616 = vmatpush1.bf16.msra.mxu0 0
        %3617 = vmatprep.subr.bf16.mxu0 0
        %3618 = vmatpush1.bf16.msra.mxu0 0
        %3619 = vmatprep.subr.bf16.mxu0 0
        %3620 = vmatpush1.bf16.msra.mxu0 0
        %3621 = vmatprep.subr.bf16.mxu0 0
        %3622 = vmatpush1.bf16.msra.mxu0 0
        %3623 = vmatprep.subr.bf16.mxu0 0
        %3624 = vmatpush1.bf16.msra.mxu0 0
        %3625 = vmatprep.subr.bf16.mxu0 0
        %3626 = vmatpush1.bf16.msra.mxu0 0
        %3627 = vmatprep.subr.bf16.mxu0 0
        %3628 = vmatpush1.bf16.msra.mxu0 0
        %3629 = vmatprep.subr.bf16.mxu0 0
        %3630 = vmatpush1.bf16.msra.mxu0 %v3223
        %3631 = vmatprep.subr.bf16.mxu0 0
        %3632 = vmatpush2.bf16.msra.mxu0 0
        %3633 = vmatprep.subr.bf16.mxu0 0
        %3634 = vmatpush2.bf16.msra.mxu0 0
        %3635 = vmatprep.subr.bf16.mxu0 0
        %3636 = vmatpush2.bf16.msra.mxu0 0
        %3637 = vmatprep.subr.bf16.mxu0 0
        %3638 = vmatpush2.bf16.msra.mxu0 0
        %3639 = vmatprep.subr.bf16.mxu0 0
        %3640 = vmatpush2.bf16.msra.mxu0 0
        %3641 = vmatprep.subr.bf16.mxu0 0
        %3642 = vmatpush2.bf16.msra.mxu0 0
        %3643 = vmatprep.subr.bf16.mxu0 0
        %3644 = vmatpush2.bf16.msra.mxu0 0
        %3645 = vmatprep.subr.bf16.mxu0 0
        %3646 = vmatpush2.bf16.msra.mxu0 0
        %3647 = vmatprep.mubr.bf16.mxu0 0
        %3648 = vmatmul.mubr.bf16.gmra.mxu0 %v3613
        %v3649 = vpop.f32.mrf.mxu0
        %v3650 = vadd.f32 0.0, %v3649
        %v3651 = vpop.f32.mrf.mxu0
        %v3652 = vpop.f32.mrf.mxu0
        %v3653 = vadd.f32 0.0, %v3652
        %v3654 = vpop.f32.mrf.mxu0
        %3655 = vdwg.mxu0
        %v3656 = vpack.c.bf16 %v3521, %v3518
        %v3657 = vpack.c.bf16 %v3565, %v3562
        %v3658 = vpack.c.bf16 %v3609, %v3606
        %v3659 = vpack.c.bf16 %v3653, %v3650
        %v3676 = vunpack.c.l.b16 %v1481
        %v3677 = vunpack.c.l.b16 %v1482
        %v3678 = vunpack.c.l.b16 %v1483
        %v3679 = vunpack.c.l.b16 %v1484
        %v3680 = vunpack.c.l.b16 %v1485
        %v3681 = vunpack.c.l.b16 %v1486
        %v3682 = vunpack.c.l.b16 %v1487
        %v3683 = vunpack.c.l.b16 %v1488
        %v3684 = vunpack.c.l.b16 %v1489
        %v3685 = vunpack.c.l.b16 %v1490
        %v3686 = vunpack.c.l.b16 %v1491
        %v3687 = vunpack.c.l.b16 %v1492
        %v3688 = vunpack.c.l.b16 %v1493
        %v3689 = vunpack.c.l.b16 %v1494
        %v3690 = vunpack.c.l.b16 %v1495
        %v3691 = vunpack.c.l.b16 %v1496
        %v3692 = vpack.c.b16 %v3677, %v3676
        %v3693 = vpack.c.b16 %v3679, %v3678
        %v3694 = vpack.c.b16 %v3681, %v3680
        %v3695 = vpack.c.b16 %v3683, %v3682
        %v3696 = vpack.c.b16 %v3685, %v3684
        %v3697 = vpack.c.b16 %v3687, %v3686
        %v3698 = vpack.c.b16 %v3689, %v3688
        %v3699 = vpack.c.b16 %v3691, %v3690
        %3708 = vmatprep.subr.bf16.mxu0 0
        %3709 = vmatpush1.bf16.msra.mxu0 %v3699
        %3710 = vmatprep.subr.bf16.mxu0 0
        %3711 = vmatpush1.bf16.msra.mxu0 %v3698
        %3712 = vmatprep.subr.bf16.mxu0 0
        %3713 = vmatpush1.bf16.msra.mxu0 %v3697
        %3714 = vmatprep.subr.bf16.mxu0 0
        %3715 = vmatpush1.bf16.msra.mxu0 %v3696
        %3716 = vmatprep.subr.bf16.mxu0 0
        %3717 = vmatpush1.bf16.msra.mxu0 %v3695
        %3718 = vmatprep.subr.bf16.mxu0 0
        %3719 = vmatpush1.bf16.msra.mxu0 %v3694
        %3720 = vmatprep.subr.bf16.mxu0 0
        %3721 = vmatpush1.bf16.msra.mxu0 %v3693
        %3722 = vmatprep.subr.bf16.mxu0 0
        %3723 = vmatpush1.bf16.msra.mxu0 %v3692
        %3724 = vmatprep.subr.bf16.mxu0 0
        %3725 = vmatpush2.bf16.msra.mxu0 0
        %3726 = vmatprep.subr.bf16.mxu0 0
        %3727 = vmatpush2.bf16.msra.mxu0 0
        %3728 = vmatprep.subr.bf16.mxu0 0
        %3729 = vmatpush2.bf16.msra.mxu0 0
        %3730 = vmatprep.subr.bf16.mxu0 0
        %3731 = vmatpush2.bf16.msra.mxu0 0
        %3732 = vmatprep.subr.bf16.mxu0 0
        %3733 = vmatpush2.bf16.msra.mxu0 0
        %3734 = vmatprep.subr.bf16.mxu0 0
        %3735 = vmatpush2.bf16.msra.mxu0 0
        %3736 = vmatprep.subr.bf16.mxu0 0
        %3737 = vmatpush2.bf16.msra.mxu0 0
        %3738 = vmatprep.subr.bf16.mxu0 0
        %3739 = vmatpush2.bf16.msra.mxu0 0
        %3740 = vmatprep.mubr.bf16.mxu0 0
        %3741 = vmatmul.mubr.bf16.gmra.mxu0 %v3656
        %v3742 = vpop.f32.mrf.mxu0
        %v3743 = vadd.f32 0.0, %v3742
        %v3744 = vpop.f32.mrf.mxu0
        %v3745 = vpop.f32.mrf.mxu0
        %v3746 = vadd.f32 0.0, %v3745
        %v3747 = vpop.f32.mrf.mxu0
        %3748 = vmatprep.mubr.bf16.mxu0 0
        %3749 = vmatmul.mubr.bf16.gmra.mxu0 %v3657
        %v3750 = vpop.f32.mrf.mxu0
        %v3751 = vadd.f32 0.0, %v3750
        %v3752 = vpop.f32.mrf.mxu0
        %v3753 = vpop.f32.mrf.mxu0
        %v3754 = vadd.f32 0.0, %v3753
        %v3755 = vpop.f32.mrf.mxu0
        %3756 = vmatprep.mubr.bf16.mxu0 0
        %3757 = vmatmul.mubr.bf16.gmra.mxu0 %v3658
        %v3758 = vpop.f32.mrf.mxu0
        %v3759 = vadd.f32 0.0, %v3758
        %v3760 = vpop.f32.mrf.mxu0
        %v3761 = vpop.f32.mrf.mxu0
        %v3762 = vadd.f32 0.0, %v3761
        %v3763 = vpop.f32.mrf.mxu0
        %3764 = vmatprep.mubr.bf16.mxu0 0
        %3765 = vmatmul.mubr.bf16.gmra.mxu0 %v3659
        %v3766 = vpop.f32.mrf.mxu0
        %v3767 = vadd.f32 0.0, %v3766
        %v3768 = vpop.f32.mrf.mxu0
        %v3769 = vpop.f32.mrf.mxu0
        %v3770 = vadd.f32 0.0, %v3769
        %v3771 = vpop.f32.mrf.mxu0
        %3772 = vdwg.mxu0
        %v3773 = vadd.f32 %v3204, %v3743
        %v3774 = vadd.f32 %v3205, %v3746
        %v3775 = vadd.f32 %v3206, %v3751
        %v3776 = vadd.f32 %v3207, %v3754
        %v3777 = vadd.f32 %v3208, %v3759
        %v3778 = vadd.f32 %v3209, %v3762
        %v3779 = vadd.f32 %v3210, %v3767
        %v3780 = vadd.f32 %v3211, %v3770
        %v3781 = vadd.f32 %v343, %v3773
        %v3782 = vadd.f32 %v344, %v3774
        %v3783 = vadd.f32 %v345, %v3775
        %v3784 = vadd.f32 %v346, %v3776
        %v3785 = vadd.f32 %v347, %v3777
        %v3786 = vadd.f32 %v348, %v3778
        %v3787 = vadd.f32 %v349, %v3779
        %v3788 = vadd.f32 %v350, %v3780
        %3789 = vadd.xlane.f32.xlu0 %v3781
        %v3790 = vpop.xlane.xlu0 %3789
        %3791 = vadd.xlane.f32.xlu0 %v3782
        %v3792 = vpop.xlane.xlu0 %3791
        %3793 = vadd.xlane.f32.xlu0 %v3783
        %v3794 = vpop.xlane.xlu0 %3793
        %3795 = vadd.xlane.f32.xlu0 %v3784
        %v3796 = vpop.xlane.xlu0 %3795
        %3797 = vadd.xlane.f32.xlu0 %v3785
        %v3798 = vpop.xlane.xlu0 %3797
        %3799 = vadd.xlane.f32.xlu0 %v3786
        %v3800 = vpop.xlane.xlu0 %3799
        %3801 = vadd.xlane.f32.xlu0 %v3787
        %v3802 = vpop.xlane.xlu0 %3801
        %3803 = vadd.xlane.f32.xlu0 %v3788
        %v3804 = vpop.xlane.xlu0 %3803
        %v3805 = vrcp.pop 128.0
        %v3806 = vmul.f32 %v3790, %v3805
        %v3807 = vmul.f32 %v3792, %v3805
        %v3808 = vmul.f32 %v3794, %v3805
        %v3809 = vmul.f32 %v3796, %v3805
        %v3810 = vmul.f32 %v3798, %v3805
        %v3811 = vmul.f32 %v3800, %v3805
        %v3812 = vmul.f32 %v3802, %v3805
        %v3813 = vmul.f32 %v3804, %v3805
        %v3814 = vsub.f32 %v3781, %v3806
        %v3815 = vsub.f32 %v3782, %v3807
        %v3816 = vsub.f32 %v3783, %v3808
        %v3817 = vsub.f32 %v3784, %v3809
        %v3818 = vsub.f32 %v3785, %v3810
        %v3819 = vsub.f32 %v3786, %v3811
        %v3820 = vsub.f32 %v3787, %v3812
        %v3821 = vsub.f32 %v3788, %v3813
        %v3822 = vmul.f32 %v3814, %v3814
        %v3823 = vmul.f32 %v3815, %v3815
        %v3824 = vmul.f32 %v3816, %v3816
        %v3825 = vmul.f32 %v3817, %v3817
        %v3826 = vmul.f32 %v3818, %v3818
        %v3827 = vmul.f32 %v3819, %v3819
        %v3828 = vmul.f32 %v3820, %v3820
        %v3829 = vmul.f32 %v3821, %v3821
        %3830 = vadd.xlane.f32.xlu0 %v3822
        %v3831 = vpop.xlane.xlu0 %3830
        %3832 = vadd.xlane.f32.xlu0 %v3823
        %v3833 = vpop.xlane.xlu0 %3832
        %3834 = vadd.xlane.f32.xlu0 %v3824
        %v3835 = vpop.xlane.xlu0 %3834
        %3836 = vadd.xlane.f32.xlu0 %v3825
        %v3837 = vpop.xlane.xlu0 %3836
        %3838 = vadd.xlane.f32.xlu0 %v3826
        %v3839 = vpop.xlane.xlu0 %3838
        %3840 = vadd.xlane.f32.xlu0 %v3827
        %v3841 = vpop.xlane.xlu0 %3840
        %3842 = vadd.xlane.f32.xlu0 %v3828
        %v3843 = vpop.xlane.xlu0 %3842
        %3844 = vadd.xlane.f32.xlu0 %v3829
        %v3845 = vpop.xlane.xlu0 %3844
        %v3846 = vmul.f32 %v3831, %v3805
        %v3847 = vmul.f32 %v3833, %v3805
        %v3848 = vmul.f32 %v3835, %v3805
        %v3849 = vmul.f32 %v3837, %v3805
        %v3850 = vmul.f32 %v3839, %v3805
        %v3851 = vmul.f32 %v3841, %v3805
        %v3852 = vmul.f32 %v3843, %v3805
        %v3853 = vmul.f32 %v3845, %v3805
        %v3854 = vadd.f32 %v3846, 1e-05
        %v3855 = vadd.f32 %v3847, 1e-05
        %v3856 = vadd.f32 %v3848, 1e-05
        %v3857 = vadd.f32 %v3849, 1e-05
        %v3858 = vadd.f32 %v3850, 1e-05
        %v3859 = vadd.f32 %v3851, 1e-05
        %v3860 = vadd.f32 %v3852, 1e-05
        %v3861 = vadd.f32 %v3853, 1e-05
        %v3862 = vrsqrt.pop %v3854
        %v3863 = vrsqrt.pop %v3855
        %v3864 = vrsqrt.pop %v3856
        %v3865 = vrsqrt.pop %v3857
        %v3866 = vrsqrt.pop %v3858
        %v3867 = vrsqrt.pop %v3859
        %v3868 = vrsqrt.pop %v3860
        %v3869 = vrsqrt.pop %v3861
        %v3870 = vmul.f32 %v3814, %v3862
        %v3871 = vmul.f32 %v3815, %v3863
        %v3872 = vmul.f32 %v3816, %v3864
        %v3873 = vmul.f32 %v3817, %v3865
        %v3874 = vmul.f32 %v3818, %v3866
        %v3875 = vmul.f32 %v3819, %v3867
        %v3876 = vmul.f32 %v3820, %v3868
        %v3877 = vmul.f32 %v3821, %v3869
        %v3878 = vld [vmem:[%s5] sm:$0x1]
        %v3880 = vlaneseq
        %v3881 = vshrl.u32 %v3880, 7
        %v3882 = vsub.s32 0, %v3881
        %v3883 = vrot.slane %v3878, %v3882
        %v3885 = vmul.f32 %v3870, %v3883
        %v3886 = vmul.f32 %v3871, %v3883
        %v3887 = vmul.f32 %v3872, %v3883
        %v3888 = vmul.f32 %v3873, %v3883
        %v3889 = vmul.f32 %v3874, %v3883
        %v3890 = vmul.f32 %v3875, %v3883
        %v3891 = vmul.f32 %v3876, %v3883
        %v3892 = vmul.f32 %v3877, %v3883
        %v3893 = vld [vmem:[%s6] sm:$0x1]
        %v3895 = vlaneseq
        %v3896 = vshrl.u32 %v3895, 7
        %v3897 = vsub.s32 0, %v3896
        %v3898 = vrot.slane %v3893, %v3897
        %v3900 = vadd.f32 %v3885, %v3898
        %v3901 = vadd.f32 %v3886, %v3898
        %v3902 = vadd.f32 %v3887, %v3898
        %v3903 = vadd.f32 %v3888, %v3898
        %v3904 = vadd.f32 %v3889, %v3898
        %v3905 = vadd.f32 %v3890, %v3898
        %v3906 = vadd.f32 %v3891, %v3898
        %v3907 = vadd.f32 %v3892, %v3898
        %3908 = vst [vmem:[%s339] sm:$0xff] %v3900
        %3909 = vst [vmem:[%s339 + $0x8] sm:$0xff] %v3901
        %3910 = vst [vmem:[%s339 + $0x10] sm:$0xff] %v3902
        %3911 = vst [vmem:[%s339 + $0x18] sm:$0xff] %v3903
        %3912 = vst [vmem:[%s339 + $0x20] sm:$0xff] %v3904
        %3913 = vst [vmem:[%s339 + $0x28] sm:$0xff] %v3905
        %3914 = vst [vmem:[%s339 + $0x30] sm:$0xff] %v3906
        %3915 = vst [vmem:[%s339 + $0x38] sm:$0xff] %v3907
        %s3916 = sand.u32 %s186, 1
        %s3917 = scalar_lea.sflag [#allocation4], %s3916
        %s3918 = sand.u32 %s186, 1
        %s3919 = smul.addr %s3918, 64
        %s3920 = scalar_lea.vmem [#allocation10], %s3919
        // Predicated region
        $region65: #{tpu_custom_call.1} parent=47 // pred_check
          %p3921 = pneg %p196
        $region66: #{tpu_custom_call.1} parent=47 // pred_check_branch
          %3923 = sbr.rel (%p3921) target = $region68
        $region67: #{tpu_custom_call.1} parent=47 // pred_region
          %s3924 = smul.u32 4, %s26
          %s3926 = ssub.s32 1024, 1024
          %3927 = vsyncadd %s3917, %s3926
          %s3928 = smul.addr %s3924, 2
          %s3929 = smul.addr %s3928, 128
          %s3930 = scalar_lea.hbm %s7, %s3929
          %s3931 = sshll.u32 %s3920, 4
          %s3932 = int_to_ptr.vmem [resolvable:$true] %s3931
          %3937 = dma.vmem_to_hbm [thread:$0]  %s3932, 1024, %s3930, %s3917, 128, 128, 8
        $region68: #{tpu_custom_call.1} parent=47 // pred_fallthru
          _
      $region48: #{tpu_custom_call.1} parent=5 // pred_fallthru
        _
      %p3938 = scmp.le.s32.totalorder 2, %s21
      // Predicated region
      $region69: #{tpu_custom_call.1} parent=5 // pred_check
        %p3939 = pneg %p3938
      $region70: #{tpu_custom_call.1} parent=5 // pred_check_branch
        %3941 = sbr.rel (%p3939) target = $region72
      $region71: #{tpu_custom_call.1} parent=5 // pred_region
        %s3942 = ssub.s32 %s21, 2
        // Predicated region
        $region73: #{tpu_custom_call.1} parent=71 // pred_check
          %p3943 = pneg %p202
        $region74: #{tpu_custom_call.1} parent=71 // pred_check_branch
          %3945 = sbr.rel (%p3943) target = $region76
        $region75: #{tpu_custom_call.1} parent=71 // pred_region
          %s3946 = sand.u32 %s187, 1
          %s3947 = scalar_lea.sflag [#allocation4], %s3946
          %s3948 = sand.u32 %s187, 1
          %s3949 = smul.addr %s3948, 64
          %s3950 = scalar_lea.vmem [#allocation10], %s3949
          %3951 = dma.done %s3947, 1024
        $region76: #{tpu_custom_call.1} parent=71 // pred_fallthru
          _
      $region72: #{tpu_custom_call.1} parent=5 // pred_fallthru
        _
    $region6: #{tpu_custom_call.1} parent=1 // loop_footer
      %s25 = sadd.s32 1, %s21
    $region7: #{tpu_custom_call.1} parent=1 // loop_footer_branch
      %20 = sbr.rel target = $region3
    $region8: #{tpu_custom_call.1} parent=1 // loop_exit
      _
    %3952 = vsyncpa [#allocation3], 1
    %s3953 = scalar_lea.sflag [#allocation3], 1
    %3954 = vsyncpa %s3953, 1
    %3955 = vsyncpa [#allocation6], 1
    %3956 = vsyncpa [#allocation9], 1
    %3957 = vsyncpa [#allocation4], 1
    %s3958 = scalar_lea.sflag [#allocation4], 1
    %3959 = vsyncpa %s3958, 1

</llo_original>
